<compile_context>
chip_gen: v6e
topology: v6e:2x2x1
jax: 0.10.0
libtpu: 0.0.40
codegen_flags: <defaults>
</compile_context>

<pallas_src>
import jax
import jax.numpy as jnp
from jax import lax
from jax.experimental import pallas as pl
from jax.experimental.pallas import tpu as pltpu

# ----------------------------- config (small) -----------------------------
B = 2            # batch
T = 8            # sequence length
H = 32           # hidden size
NH = 4           # attention heads
DH = H // NH     # head dim
FF = 64          # intermediate (FFN) size
L = 2            # encoder layers
VOCAB = 100
MAX_POS = 64
NUM_TAGS = 5
LN_EPS = 1e-12


# ----------------------------- fused BERT + hidden2tag + CRF kernel -----------------------------
def _bert_crf_kernel(ids_ref, tags_ref, mask_ref,                       # SMEM scalar prefetch
                     wemb_ref, pemb_ref, temb_ref, embg_ref, embb_ref,  # embedding tables
                     wqkv_ref, bqkv_ref, wo_ref, bo_ref, ln1g_ref, ln1b_ref,
                     w1_ref, b1_ref, w2_ref, b2_ref, ln2g_ref, ln2b_ref,
                     wtag_ref, btag_ref,
                     trans_ref, transT_ref, start_ref, end_ref,         # CRF tables
                     llh_ref,                                           # output (1, 1)
                     x_scr):                                            # VMEM scratch (T, H)
    """One grid step = one sequence: embeddings -> encoder -> emissions -> CRF llh."""
    b = pl.program_id(0)
    scale = 1.0 / (DH ** 0.5)

    def ln(v, g, bias):
        mu = jnp.mean(v, axis=-1, keepdims=True)
        var = jnp.mean(jnp.square(v - mu), axis=-1, keepdims=True)
        return (v - mu) * lax.rsqrt(var + LN_EPS) * g + bias

    def mm(a, bm):
        return jnp.dot(a, bm, preferred_element_type=jnp.float32)

    # ---- embeddings: word-emb gather (dynamic pl.ds row) + pos + type, embedding LayerNorm ----
    te = temb_ref[...]                                                   # (1, H)
    for t in range(T):                                                   # T=8, unrolled
        wid = ids_ref[b, t]                                              # SMEM scalar
        x_scr[t:t + 1, :] = (wemb_ref[pl.ds(wid, 1), :] + pemb_ref[t:t + 1, :] + te)
    x = ln(x_scr[...], embg_ref[...], embb_ref[...])                     # (T, H)

    # ---- encoder layers (static unrolled) ----
    for l in range(L):
        # fused QKV projection: one MXU push per layer instead of 3*NH
        qkv = mm(x, wqkv_ref[l]) + bqkv_ref[l]                           # (T, 3H)
        attn = bo_ref[l]                                                 # (1, H) out-proj bias
        for h in range(NH):                                              # static lane slices only
            q = qkv[:, h * DH:(h + 1) * DH]                              # (T, DH)
            k = qkv[:, H + h * DH: H + (h + 1) * DH]                     # (T, DH)
            v = qkv[:, 2 * H + h * DH: 2 * H + (h + 1) * DH]             # (T, DH)
            s = lax.dot_general(q, k, (((1,), (1,)), ((), ())),
                                preferred_element_type=jnp.float32) * scale   # (T, T)
            s = s - jnp.max(s, axis=-1, keepdims=True)
            p = jnp.exp(s)
            p = p * pl.reciprocal(jnp.sum(p, axis=-1, keepdims=True), approx=True)  # EUP slot
            attn = attn + mm(mm(p, v), wo_ref[l * NH + h])               # (T, H) accumulate
        x = ln(x + attn, ln1g_ref[l], ln1b_ref[l])

        # feed-forward (tanh-approx GELU, see TODO)
        ff = mm(x, w1_ref[l]) + b1_ref[l]                                # (T, FF)
        ff = 0.5 * ff * (1.0 + jnp.tanh(0.7978845608028654 *
                                        (ff + 0.044715 * ff * ff * ff)))
        ff = mm(ff, w2_ref[l]) + b2_ref[l]                               # (T, H)
        x = ln(x + ff, ln2g_ref[l], ln2b_ref[l])

    # ---- hidden2tag fused in: emissions stay in VMEM (never written to HBM) ----
    emis = mm(x, wtag_ref[...]) + btag_ref[...]                          # (T, NUM_TAGS)

    # ---- torchcrf forward algorithm (fully unrolled, T=8) ----
    NT = NUM_TAGS
    iota_lane = lax.broadcasted_iota(jnp.int32, (1, NT), 1)              # hoisted out of loop
    eye = (lax.broadcasted_iota(jnp.int32, (NT, NT), 0) ==
           lax.broadcasted_iota(jnp.int32, (NT, NT), 1)).astype(jnp.float32)
    transT = transT_ref[...]        # (NT, NT): transT[j, i] = trans[i, j] (packed at init)
    start = start_ref[...]          # (1, NT)
    end = end_ref[...]              # (1, NT)

    tag0 = tags_ref[b, 0]
    e0 = emis[0:1, :]
    oh0 = (iota_lane == tag0).astype(jnp.float32)
    num = jnp.sum((start + e0) * oh0)          # start[tag0] + e[0, tag0]
    alpha = start + e0                         # (1, NT)
    last_tag = tag0

    for t in range(1, T):
        m_t = mask_ref[b, t]
        m_f = m_t.astype(jnp.float32)
        tag_t = tags_ref[b, t]
        tag_p = tags_ref[b, t - 1]
        e_t = emis[t:t + 1, :]                                           # (1, NT) static slice

        # numerator: trans[tag_{t-1}, tag_t] + e_t[tag_t], gated by mask
        oh_t = (iota_lane == tag_t).astype(jnp.float32)
        trans_row = trans_ref[pl.ds(tag_p, 1), :]                        # dynamic row gather
        num = num + (jnp.sum(trans_row * oh_t) + jnp.sum(e_t * oh_t)) * m_f

        # denominator (forward recursion), logsumexp along the lane axis
        scores = transT + alpha                                          # [j, i] = trans[i,j]+alpha[i]
        smax = jnp.max(scores, axis=-1, keepdims=True)                   # (NT, 1)
        lse_col = smax + jnp.log(jnp.sum(jnp.exp(scores - smax),
                                         axis=-1, keepdims=True))        # (NT, 1)
        lse_row = jnp.sum(lse_col * eye, axis=0, keepdims=True)          # (1, NT)
        nxt = lse_row + e_t
        alpha = jnp.where(m_t > 0, nxt, alpha)
        last_tag = jnp.where(m_t > 0, tag_t, last_tag)

    oh_last = (iota_lane == last_tag).astype(jnp.float32)
    num = num + jnp.sum(end * oh_last)

    alpha_end = alpha + end
    amax = jnp.max(alpha_end)
    denom = amax + jnp.log(jnp.sum(jnp.exp(alpha_end - amax)))
    llh_ref[...] = jnp.full((1, 1), num - denom, dtype=jnp.float32)


# ----------------------------- wrapper -----------------------------
_WEIGHT_KEYS = ("word_emb", "pos_emb", "type_emb", "emb_ln_g", "emb_ln_b",
                "wqkv", "bqkv", "wo", "bo", "ln1_g", "ln1_b",
                "w1", "b1", "w2", "b2", "ln2_g", "ln2_b",
                "w_tag", "b_tag", "crf_trans", "crf_transT", "crf_start", "crf_end")


def _full_spec(a):
    """Whole-array block, constant index map (weights resident in VMEM across the grid)."""
    zeros = (0,) * a.ndim

    def idx(b, *_):          # index_map receives (grid idx, *scalar-prefetch refs)
        return zeros

    return pl.BlockSpec(a.shape, idx)


def bert_crf_forward(packed, input_ids, tags, mask_i32):
    """packed: init-time packed weight dict; inputs (B, T) int32. Returns scalar loss."""
    weights = [packed[k] for k in _WEIGHT_KEYS]
    llh = pl.pallas_call(
        _bert_crf_kernel,
        out_shape=jax.ShapeDtypeStruct((B, 1, 1), jnp.float32),
        grid_spec=pltpu.PrefetchScalarGridSpec(
            num_scalar_prefetch=3,                 # input_ids, tags, mask -> SMEM
            grid=(B,),
            in_specs=[_full_spec(a) for a in weights],
            out_specs=pl.BlockSpec((None, 1, 1), lambda b, *_: (b, 0, 0)),
            scratch_shapes=[pltpu.VMEM((T, H), jnp.float32)],
        ),
        compiler_params=pltpu.CompilerParams(dimension_semantics=("parallel",)),
    )(input_ids, tags, mask_i32, *weights)
    # torchcrf default reduction='sum'; loss = -llh
    return -jnp.sum(llh)


# ----------------------------- host-side (init-time) weight packing -----------------------------
def pack_params(p):
    """Rearrange weights once at init into stacked, kernel-friendly slabs (runs outside jit)."""
    ls = p["layers"]

    def stk(name):
        return jnp.stack([lp[name] for lp in ls])

    wq, wk, wv, wo = stk("wq"), stk("wk"), stk("wv"), stk("wo")          # (L, H, H)
    bq, bk, bv = stk("bq"), stk("bk"), stk("bv")                         # (L, H)

    wqkv = jnp.concatenate([wq, wk, wv], axis=2)                         # (L, H, 3H)
    bqkv = jnp.concatenate([bq, bk, bv], axis=1).reshape(L, 1, 3 * H)    # (L, 1, 3H)
    wo_h = wo.reshape(L * NH, DH, H)                                     # per-head out-proj rows

    vocab_pad = (-VOCAB) % 8                                             # sublane-align the table
    word_emb = jnp.pad(p["word_emb"], ((0, vocab_pad), (0, 0)))

    return {
        "word_emb": word_emb,                                            # (VOCAB+pad, H)
        "pos_emb": p["pos_emb"][:T],                                     # (T, H)
        "type_emb": p["type_emb"][0:1],                                  # (1, H) token_type_id = 0
        "emb_ln_g": p["emb_ln_g"].reshape(1, H), "emb_ln_b": p["emb_ln_b"].reshape(1, H),
        "wqkv": wqkv, "bqkv": bqkv,
        "wo": wo_h, "bo": stk("bo").reshape(L, 1, H),
        "ln1_g": stk("ln1_g").reshape(L, 1, H), "ln1_b": stk("ln1_b").reshape(L, 1, H),
        "w1": stk("w1"), "b1": stk("b1").reshape(L, 1, FF),
        "w2": stk("w2"), "b2": stk("b2").reshape(L, 1, H),
        "ln2_g": stk("ln2_g").reshape(L, 1, H), "ln2_b": stk("ln2_b").reshape(L, 1, H),
        "w_tag": p["w_tag"], "b_tag": p["b_tag"].reshape(1, NUM_TAGS),
        "crf_trans": p["crf_trans"],
        "crf_transT": jnp.transpose(p["crf_trans"]),                     # precomputed at init
        "crf_start": p["crf_start"].reshape(1, NUM_TAGS),
        "crf_end": p["crf_end"].reshape(1, NUM_TAGS),
    }


def init_params(key):
    keys = iter(jax.random.split(key, 64))

    def nrm(shape, scale=0.02):
        return (scale * jax.random.normal(next(keys), shape)).astype(jnp.float32)

    def uni(shape):  # torchcrf init: U(-0.1, 0.1)
        return jax.random.uniform(next(keys), shape, jnp.float32, -0.1, 0.1)

    params = {
        "word_emb": nrm((VOCAB, H)),
        "pos_emb": nrm((MAX_POS, H)),
        "type_emb": nrm((2, H)),
        "emb_ln_g": jnp.ones((H,), jnp.float32),
        "emb_ln_b": jnp.zeros((H,), jnp.float32),
        "w_tag": nrm((H, NUM_TAGS)),
        "b_tag": jnp.zeros((NUM_TAGS,), jnp.float32),
        "crf_trans": uni((NUM_TAGS, NUM_TAGS)),
        "crf_start": uni((NUM_TAGS,)),
        "crf_end": uni((NUM_TAGS,)),
        "layers": [],
    }
    for _ in range(L):
        params["layers"].append({
            "wq": nrm((H, H)), "bq": jnp.zeros((H,), jnp.float32),
            "wk": nrm((H, H)), "bk": jnp.zeros((H,), jnp.float32),
            "wv": nrm((H, H)), "bv": jnp.zeros((H,), jnp.float32),
            "wo": nrm((H, H)), "bo": jnp.zeros((H,), jnp.float32),
            "ln1_g": jnp.ones((H,), jnp.float32), "ln1_b": jnp.zeros((H,), jnp.float32),
            "w1": nrm((H, FF)), "b1": jnp.zeros((FF,), jnp.float32),
            "w2": nrm((FF, H)), "b2": jnp.zeros((H,), jnp.float32),
            "ln2_g": jnp.ones((H,), jnp.float32), "ln2_b": jnp.zeros((H,), jnp.float32),
        })
    return params


if __name__ == "__main__":
    key = jax.random.PRNGKey(0)
    kp, kx, ky = jax.random.split(key, 3)

    params = init_params(kp)
    packed = pack_params(params)          # one-time packing, kept outside the jitted forward

    input_ids = jax.random.randint(kx, (B, T), 0, VOCAB, dtype=jnp.int32)    # x
    tags = jax.random.randint(ky, (B, T), 0, NUM_TAGS, dtype=jnp.int32)      # y
    # mask: first column must be 1 (torchcrf requirement); second sequence padded.
    mask = jnp.array([[1] * T, [1] * 6 + [0] * 2], dtype=jnp.int32)

    loss = jax.jit(bert_crf_forward)(packed, input_ids, tags, mask)
    jax.block_until_ready(loss)
    assert loss.shape == () and bool(jnp.isfinite(loss))
    print("KERNEL_OK")
</pallas_src>

<mosaic_0001>
module attributes {stable_mosaic.version = 11 : i64} {
  func.func @_bert_crf_kernel(%arg0: i32, %arg1: memref<2x8xi32, #tpu.memory_space<smem>>, %arg2: memref<2x8xi32, #tpu.memory_space<smem>>, %arg3: memref<2x8xi32, #tpu.memory_space<smem>>, %arg4: memref<104x32xf32, #tpu.memory_space<vmem>>, %arg5: memref<8x32xf32, #tpu.memory_space<vmem>>, %arg6: memref<1x32xf32, #tpu.memory_space<vmem>>, %arg7: memref<1x32xf32, #tpu.memory_space<vmem>>, %arg8: memref<1x32xf32, #tpu.memory_space<vmem>>, %arg9: memref<2x32x96xf32, #tpu.memory_space<vmem>>, %arg10: memref<2x1x96xf32, #tpu.memory_space<vmem>>, %arg11: memref<8x8x32xf32, #tpu.memory_space<vmem>>, %arg12: memref<2x1x32xf32, #tpu.memory_space<vmem>>, %arg13: memref<2x1x32xf32, #tpu.memory_space<vmem>>, %arg14: memref<2x1x32xf32, #tpu.memory_space<vmem>>, %arg15: memref<2x32x64xf32, #tpu.memory_space<vmem>>, %arg16: memref<2x1x64xf32, #tpu.memory_space<vmem>>, %arg17: memref<2x64x32xf32, #tpu.memory_space<vmem>>, %arg18: memref<2x1x32xf32, #tpu.memory_space<vmem>>, %arg19: memref<2x1x32xf32, #tpu.memory_space<vmem>>, %arg20: memref<2x1x32xf32, #tpu.memory_space<vmem>>, %arg21: memref<32x5xf32, #tpu.memory_space<vmem>>, %arg22: memref<1x5xf32, #tpu.memory_space<vmem>>, %arg23: memref<5x5xf32, #tpu.memory_space<vmem>>, %arg24: memref<5x5xf32, #tpu.memory_space<vmem>>, %arg25: memref<1x5xf32, #tpu.memory_space<vmem>>, %arg26: memref<1x5xf32, #tpu.memory_space<vmem>>, %arg27: memref<1x1x1xf32, #tpu.memory_space<vmem>>, %arg28: memref<8x32xf32, #tpu.memory_space<vmem>>) attributes {dimension_semantics = [#tpu.dimension_semantics<parallel>], iteration_bounds = array<i64: 2>, scalar_prefetch = 3 : i64, scratch_operands = 1 : i64, tpu.core_type = #tpu.core_type<tc>, window_params = [{pipeline_mode = #tpu.pipeline_mode<synchronous>, transform_indices = @transform_0, window_bounds = array<i64: 104, 32>}, {pipeline_mode = #tpu.pipeline_mode<synchronous>, transform_indices = @transform_1, window_bounds = array<i64: 8, 32>}, {pipeline_mode = #tpu.pipeline_mode<synchronous>, transform_indices = @transform_2, window_bounds = array<i64: 1, 32>}, {pipeline_mode = #tpu.pipeline_mode<synchronous>, transform_indices = @transform_3, window_bounds = array<i64: 1, 32>}, {pipeline_mode = #tpu.pipeline_mode<synchronous>, transform_indices = @transform_4, window_bounds = array<i64: 1, 32>}, {pipeline_mode = #tpu.pipeline_mode<synchronous>, transform_indices = @transform_5, window_bounds = array<i64: 2, 32, 96>}, {pipeline_mode = #tpu.pipeline_mode<synchronous>, transform_indices = @transform_6, window_bounds = array<i64: 2, 1, 96>}, {pipeline_mode = #tpu.pipeline_mode<synchronous>, transform_indices = @transform_7, window_bounds = array<i64: 8, 8, 32>}, {pipeline_mode = #tpu.pipeline_mode<synchronous>, transform_indices = @transform_8, window_bounds = array<i64: 2, 1, 32>}, {pipeline_mode = #tpu.pipeline_mode<synchronous>, transform_indices = @transform_9, window_bounds = array<i64: 2, 1, 32>}, {pipeline_mode = #tpu.pipeline_mode<synchronous>, transform_indices = @transform_10, window_bounds = array<i64: 2, 1, 32>}, {pipeline_mode = #tpu.pipeline_mode<synchronous>, transform_indices = @transform_11, window_bounds = array<i64: 2, 32, 64>}, {pipeline_mode = #tpu.pipeline_mode<synchronous>, transform_indices = @transform_12, window_bounds = array<i64: 2, 1, 64>}, {pipeline_mode = #tpu.pipeline_mode<synchronous>, transform_indices = @transform_13, window_bounds = array<i64: 2, 64, 32>}, {pipeline_mode = #tpu.pipeline_mode<synchronous>, transform_indices = @transform_14, window_bounds = array<i64: 2, 1, 32>}, {pipeline_mode = #tpu.pipeline_mode<synchronous>, transform_indices = @transform_15, window_bounds = array<i64: 2, 1, 32>}, {pipeline_mode = #tpu.pipeline_mode<synchronous>, transform_indices = @transform_16, window_bounds = array<i64: 2, 1, 32>}, {pipeline_mode = #tpu.pipeline_mode<synchronous>, transform_indices = @transform_17, window_bounds = array<i64: 32, 5>}, {pipeline_mode = #tpu.pipeline_mode<synchronous>, transform_indices = @transform_18, window_bounds = array<i64: 1, 5>}, {pipeline_mode = #tpu.pipeline_mode<synchronous>, transform_indices = @transform_19, window_bounds = array<i64: 5, 5>}, {pipeline_mode = #tpu.pipeline_mode<synchronous>, transform_indices = @transform_20, window_bounds = array<i64: 5, 5>}, {pipeline_mode = #tpu.pipeline_mode<synchronous>, transform_indices = @transform_21, window_bounds = array<i64: 1, 5>}, {pipeline_mode = #tpu.pipeline_mode<synchronous>, transform_indices = @transform_22, window_bounds = array<i64: 1, 5>}, {transform_indices = @transform_23, window_bounds = array<i64: 1, 1, 1>}]} {
    %c0 = arith.constant 0 : index
    %c0_0 = arith.constant 0 : index
    %0 = vector.load %arg6[%c0, %c0_0] : memref<1x32xf32, #tpu.memory_space<vmem>>, vector<1x32xf32>
    %1 = arith.index_cast %arg0 : i32 to index
    %c0_1 = arith.constant 0 : index
    %2 = memref.load %arg1[%1, %c0_1] : memref<2x8xi32, #tpu.memory_space<smem>>
    %3 = arith.index_cast %2 : i32 to index
    %c0_2 = arith.constant 0 : index
    %4 = vector.load %arg4[%3, %c0_2] : memref<104x32xf32, #tpu.memory_space<vmem>>, vector<1x32xf32>
    %c0_3 = arith.constant 0 : index
    %c0_4 = arith.constant 0 : index
    %5 = vector.load %arg5[%c0_3, %c0_4] : memref<8x32xf32, #tpu.memory_space<vmem>>, vector<1x32xf32>
    %6 = arith.addf %4, %5 : vector<1x32xf32>
    %7 = arith.addf %6, %0 : vector<1x32xf32>
    %c0_5 = arith.constant 0 : index
    %c0_6 = arith.constant 0 : index
    %8 = vector.load %arg28[%c0_5, %c0_6] : memref<8x32xf32, #tpu.memory_space<vmem>>, vector<1x32xf32>
    tpu.vector_store %arg28[%c0_5, %c0_6], %7 {strides = array<i32>} : memref<8x32xf32, #tpu.memory_space<vmem>>, vector<1x32xf32>,
    %9 = arith.index_cast %arg0 : i32 to index
    %c1 = arith.constant 1 : index
    %10 = memref.load %arg1[%9, %c1] : memref<2x8xi32, #tpu.memory_space<smem>>
    %11 = arith.index_cast %10 : i32 to index
    %c0_7 = arith.constant 0 : index
    %12 = vector.load %arg4[%11, %c0_7] : memref<104x32xf32, #tpu.memory_space<vmem>>, vector<1x32xf32>
    %c1_8 = arith.constant 1 : index
    %c0_9 = arith.constant 0 : index
    %13 = vector.load %arg5[%c1_8, %c0_9] : memref<8x32xf32, #tpu.memory_space<vmem>>, vector<1x32xf32>
    %14 = arith.addf %12, %13 : vector<1x32xf32>
    %15 = arith.addf %14, %0 : vector<1x32xf32>
    %c1_10 = arith.constant 1 : index
    %c0_11 = arith.constant 0 : index
    %16 = vector.load %arg28[%c1_10, %c0_11] : memref<8x32xf32, #tpu.memory_space<vmem>>, vector<1x32xf32>
    tpu.vector_store %arg28[%c1_10, %c0_11], %15 {strides = array<i32>} : memref<8x32xf32, #tpu.memory_space<vmem>>, vector<1x32xf32>,
    %17 = arith.index_cast %arg0 : i32 to index
    %c2 = arith.constant 2 : index
    %18 = memref.load %arg1[%17, %c2] : memref<2x8xi32, #tpu.memory_space<smem>>
    %19 = arith.index_cast %18 : i32 to index
    %c0_12 = arith.constant 0 : index
    %20 = vector.load %arg4[%19, %c0_12] : memref<104x32xf32, #tpu.memory_space<vmem>>, vector<1x32xf32>
    %c2_13 = arith.constant 2 : index
    %c0_14 = arith.constant 0 : index
    %21 = vector.load %arg5[%c2_13, %c0_14] : memref<8x32xf32, #tpu.memory_space<vmem>>, vector<1x32xf32>
    %22 = arith.addf %20, %21 : vector<1x32xf32>
    %23 = arith.addf %22, %0 : vector<1x32xf32>
    %c2_15 = arith.constant 2 : index
    %c0_16 = arith.constant 0 : index
    %24 = vector.load %arg28[%c2_15, %c0_16] : memref<8x32xf32, #tpu.memory_space<vmem>>, vector<1x32xf32>
    tpu.vector_store %arg28[%c2_15, %c0_16], %23 {strides = array<i32>} : memref<8x32xf32, #tpu.memory_space<vmem>>, vector<1x32xf32>,
    %25 = arith.index_cast %arg0 : i32 to index
    %c3 = arith.constant 3 : index
    %26 = memref.load %arg1[%25, %c3] : memref<2x8xi32, #tpu.memory_space<smem>>
    %27 = arith.index_cast %26 : i32 to index
    %c0_17 = arith.constant 0 : index
    %28 = vector.load %arg4[%27, %c0_17] : memref<104x32xf32, #tpu.memory_space<vmem>>, vector<1x32xf32>
    %c3_18 = arith.constant 3 : index
    %c0_19 = arith.constant 0 : index
    %29 = vector.load %arg5[%c3_18, %c0_19] : memref<8x32xf32, #tpu.memory_space<vmem>>, vector<1x32xf32>
    %30 = arith.addf %28, %29 : vector<1x32xf32>
    %31 = arith.addf %30, %0 : vector<1x32xf32>
    %c3_20 = arith.constant 3 : index
    %c0_21 = arith.constant 0 : index
    %32 = vector.load %arg28[%c3_20, %c0_21] : memref<8x32xf32, #tpu.memory_space<vmem>>, vector<1x32xf32>
    tpu.vector_store %arg28[%c3_20, %c0_21], %31 {strides = array<i32>} : memref<8x32xf32, #tpu.memory_space<vmem>>, vector<1x32xf32>,
    %33 = arith.index_cast %arg0 : i32 to index
    %c4 = arith.constant 4 : index
    %34 = memref.load %arg1[%33, %c4] : memref<2x8xi32, #tpu.memory_space<smem>>
    %35 = arith.index_cast %34 : i32 to index
    %c0_22 = arith.constant 0 : index
    %36 = vector.load %arg4[%35, %c0_22] : memref<104x32xf32, #tpu.memory_space<vmem>>, vector<1x32xf32>
    %c4_23 = arith.constant 4 : index
    %c0_24 = arith.constant 0 : index
    %37 = vector.load %arg5[%c4_23, %c0_24] : memref<8x32xf32, #tpu.memory_space<vmem>>, vector<1x32xf32>
    %38 = arith.addf %36, %37 : vector<1x32xf32>
    %39 = arith.addf %38, %0 : vector<1x32xf32>
    %c4_25 = arith.constant 4 : index
    %c0_26 = arith.constant 0 : index
    %40 = vector.load %arg28[%c4_25, %c0_26] : memref<8x32xf32, #tpu.memory_space<vmem>>, vector<1x32xf32>
    tpu.vector_store %arg28[%c4_25, %c0_26], %39 {strides = array<i32>} : memref<8x32xf32, #tpu.memory_space<vmem>>, vector<1x32xf32>,
    %41 = arith.index_cast %arg0 : i32 to index
    %c5 = arith.constant 5 : index
    %42 = memref.load %arg1[%41, %c5] : memref<2x8xi32, #tpu.memory_space<smem>>
    %43 = arith.index_cast %42 : i32 to index
    %c0_27 = arith.constant 0 : index
    %44 = vector.load %arg4[%43, %c0_27] : memref<104x32xf32, #tpu.memory_space<vmem>>, vector<1x32xf32>
    %c5_28 = arith.constant 5 : index
    %c0_29 = arith.constant 0 : index
    %45 = vector.load %arg5[%c5_28, %c0_29] : memref<8x32xf32, #tpu.memory_space<vmem>>, vector<1x32xf32>
    %46 = arith.addf %44, %45 : vector<1x32xf32>
    %47 = arith.addf %46, %0 : vector<1x32xf32>
    %c5_30 = arith.constant 5 : index
    %c0_31 = arith.constant 0 : index
    %48 = vector.load %arg28[%c5_30, %c0_31] : memref<8x32xf32, #tpu.memory_space<vmem>>, vector<1x32xf32>
    tpu.vector_store %arg28[%c5_30, %c0_31], %47 {strides = array<i32>} : memref<8x32xf32, #tpu.memory_space<vmem>>, vector<1x32xf32>,
    %49 = arith.index_cast %arg0 : i32 to index
    %c6 = arith.constant 6 : index
    %50 = memref.load %arg1[%49, %c6] : memref<2x8xi32, #tpu.memory_space<smem>>
    %51 = arith.index_cast %50 : i32 to index
    %c0_32 = arith.constant 0 : index
    %52 = vector.load %arg4[%51, %c0_32] : memref<104x32xf32, #tpu.memory_space<vmem>>, vector<1x32xf32>
    %c6_33 = arith.constant 6 : index
    %c0_34 = arith.constant 0 : index
    %53 = vector.load %arg5[%c6_33, %c0_34] : memref<8x32xf32, #tpu.memory_space<vmem>>, vector<1x32xf32>
    %54 = arith.addf %52, %53 : vector<1x32xf32>
    %55 = arith.addf %54, %0 : vector<1x32xf32>
    %c6_35 = arith.constant 6 : index
    %c0_36 = arith.constant 0 : index
    %56 = vector.load %arg28[%c6_35, %c0_36] : memref<8x32xf32, #tpu.memory_space<vmem>>, vector<1x32xf32>
    tpu.vector_store %arg28[%c6_35, %c0_36], %55 {strides = array<i32>} : memref<8x32xf32, #tpu.memory_space<vmem>>, vector<1x32xf32>,
    %57 = arith.index_cast %arg0 : i32 to index
    %c7 = arith.constant 7 : index
    %58 = memref.load %arg1[%57, %c7] : memref<2x8xi32, #tpu.memory_space<smem>>
    %59 = arith.index_cast %58 : i32 to index
    %c0_37 = arith.constant 0 : index
    %60 = vector.load %arg4[%59, %c0_37] : memref<104x32xf32, #tpu.memory_space<vmem>>, vector<1x32xf32>
    %c7_38 = arith.constant 7 : index
    %c0_39 = arith.constant 0 : index
    %61 = vector.load %arg5[%c7_38, %c0_39] : memref<8x32xf32, #tpu.memory_space<vmem>>, vector<1x32xf32>
    %62 = arith.addf %60, %61 : vector<1x32xf32>
    %63 = arith.addf %62, %0 : vector<1x32xf32>
    %c7_40 = arith.constant 7 : index
    %c0_41 = arith.constant 0 : index
    %64 = vector.load %arg28[%c7_40, %c0_41] : memref<8x32xf32, #tpu.memory_space<vmem>>, vector<1x32xf32>
    tpu.vector_store %arg28[%c7_40, %c0_41], %63 {strides = array<i32>} : memref<8x32xf32, #tpu.memory_space<vmem>>, vector<1x32xf32>,
    %c0_42 = arith.constant 0 : index
    %c0_43 = arith.constant 0 : index
    %65 = vector.load %arg28[%c0_42, %c0_43] : memref<8x32xf32, #tpu.memory_space<vmem>>, vector<8x32xf32>
    %c0_44 = arith.constant 0 : index
    %c0_45 = arith.constant 0 : index
    %66 = vector.load %arg7[%c0_44, %c0_45] : memref<1x32xf32, #tpu.memory_space<vmem>>, vector<1x32xf32>
    %c0_46 = arith.constant 0 : index
    %c0_47 = arith.constant 0 : index
    %67 = vector.load %arg8[%c0_46, %c0_47] : memref<1x32xf32, #tpu.memory_space<vmem>>, vector<1x32xf32>
    %cst = arith.constant dense<0.000000e+00> : vector<8xf32>
    %68 = vector.multi_reduction <add>, %65, %cst [1] : vector<8x32xf32> to vector<8xf32>
    %69 = vector.shape_cast %68 : vector<8xf32> to vector<8x1xf32>
    %cst_48 = arith.constant 3.200000e+01 : f32
    %70 = vector.broadcast %cst_48 : f32 to vector<8x1xf32>
    %71 = arith.divf %69, %70 : vector<8x1xf32>
    %72 = vector.broadcast %71 : vector<8x1xf32> to vector<8x32xf32>
    %73 = arith.subf %65, %72 : vector<8x32xf32>
    %74 = arith.mulf %73, %73 : vector<8x32xf32>
    %cst_49 = arith.constant dense<0.000000e+00> : vector<8xf32>
    %75 = vector.multi_reduction <add>, %74, %cst_49 [1] : vector<8x32xf32> to vector<8xf32>
    %76 = vector.shape_cast %75 : vector<8xf32> to vector<8x1xf32>
    %cst_50 = arith.constant 3.200000e+01 : f32
    %77 = vector.broadcast %cst_50 : f32 to vector<8x1xf32>
    %78 = arith.divf %76, %77 : vector<8x1xf32>
    %79 = vector.broadcast %71 : vector<8x1xf32> to vector<8x32xf32>
    %80 = arith.subf %65, %79 : vector<8x32xf32>
    %cst_51 = arith.constant 9.99999996E-13 : f32
    %81 = vector.broadcast %cst_51 : f32 to vector<8x1xf32>
    %82 = arith.addf %78, %81 : vector<8x1xf32>
    %83 = math.rsqrt %82 : vector<8x1xf32>
    %84 = vector.broadcast %83 : vector<8x1xf32> to vector<8x32xf32>
    %85 = arith.mulf %80, %84 : vector<8x32xf32>
    %86 = vector.broadcast %66 : vector<1x32xf32> to vector<8x32xf32>
    %87 = arith.mulf %85, %86 : vector<8x32xf32>
    %88 = vector.broadcast %67 : vector<1x32xf32> to vector<8x32xf32>
    %89 = arith.addf %87, %88 : vector<8x32xf32>
    %c0_52 = arith.constant 0 : index
    %c0_53 = arith.constant 0 : index
    %c0_54 = arith.constant 0 : index
    %90 = vector.load %arg9[%c0_52, %c0_53, %c0_54] : memref<2x32x96xf32, #tpu.memory_space<vmem>>, vector<1x32x96xf32>
    %91 = vector.shape_cast %90 : vector<1x32x96xf32> to vector<32x96xf32>
    %cst_55 = arith.constant dense<0.000000e+00> : vector<8x96xf32>
    %92 = tpu.matmul %89, %91, %cst_55 {dimension_numbers = #tpu.dot_dimension_numbers<[1], [0], [0], [1], [0, 0, 1, 1], [], []>} : vector<8x32xf32>, vector<32x96xf32>, vector<8x96xf32> -> vector<8x96xf32>
    %c0_56 = arith.constant 0 : index
    %c0_57 = arith.constant 0 : index
    %c0_58 = arith.constant 0 : index
    %93 = vector.load %arg10[%c0_56, %c0_57, %c0_58] : memref<2x1x96xf32, #tpu.memory_space<vmem>>, vector<1x1x96xf32>
    %94 = vector.shape_cast %93 : vector<1x1x96xf32> to vector<1x96xf32>
    %95 = vector.broadcast %94 : vector<1x96xf32> to vector<8x96xf32>
    %96 = arith.addf %92, %95 : vector<8x96xf32>
    %c0_59 = arith.constant 0 : index
    %c0_60 = arith.constant 0 : index
    %c0_61 = arith.constant 0 : index
    %97 = vector.load %arg12[%c0_59, %c0_60, %c0_61] : memref<2x1x32xf32, #tpu.memory_space<vmem>>, vector<1x1x32xf32>
    %98 = vector.shape_cast %97 : vector<1x1x32xf32> to vector<1x32xf32>
    %99 = vector.extract_strided_slice %96 {offsets = [0, 0], sizes = [8, 8], strides = [1, 1]} : vector<8x96xf32> to vector<8x8xf32>
    %100 = vector.extract_strided_slice %96 {offsets = [0, 32], sizes = [8, 8], strides = [1, 1]} : vector<8x96xf32> to vector<8x8xf32>
    %101 = vector.extract_strided_slice %96 {offsets = [0, 64], sizes = [8, 8], strides = [1, 1]} : vector<8x96xf32> to vector<8x8xf32>
    %cst_62 = arith.constant dense<0.000000e+00> : vector<8x8xf32>
    %102 = tpu.matmul %99, %100, %cst_62 {dimension_numbers = #tpu.dot_dimension_numbers<[1], [1], [0], [0], [0, 0, 1, 0], [], []>} : vector<8x8xf32>, vector<8x8xf32>, vector<8x8xf32> -> vector<8x8xf32>
    %cst_63 = arith.constant 0.353553385 : f32
    %103 = vector.broadcast %cst_63 : f32 to vector<8x8xf32>
    %104 = arith.mulf %102, %103 : vector<8x8xf32>
    %cst_64 = arith.constant dense<0xFF800000> : vector<8xf32>
    %105 = vector.multi_reduction <maximumf>, %104, %cst_64 [1] : vector<8x8xf32> to vector<8xf32>
    %106 = vector.shape_cast %105 : vector<8xf32> to vector<8x1xf32>
    %107 = vector.broadcast %106 : vector<8x1xf32> to vector<8x8xf32>
    %108 = arith.subf %104, %107 : vector<8x8xf32>
    %109 = math.exp %108 : vector<8x8xf32>
    %cst_65 = arith.constant dense<0.000000e+00> : vector<8xf32>
    %110 = vector.multi_reduction <add>, %109, %cst_65 [1] : vector<8x8xf32> to vector<8xf32>
    %111 = vector.shape_cast %110 : vector<8xf32> to vector<8x1xf32>
    %112 = tpu.reciprocal %111 {approx = true} : vector<8x1xf32> -> vector<8x1xf32>
    %113 = vector.broadcast %112 : vector<8x1xf32> to vector<8x8xf32>
    %114 = arith.mulf %109, %113 : vector<8x8xf32>
    %cst_66 = arith.constant dense<0.000000e+00> : vector<8x8xf32>
    %115 = tpu.matmul %114, %101, %cst_66 {dimension_numbers = #tpu.dot_dimension_numbers<[1], [0], [0], [1], [0, 0, 1, 1], [], []>} : vector<8x8xf32>, vector<8x8xf32>, vector<8x8xf32> -> vector<8x8xf32>
    %c0_67 = arith.constant 0 : index
    %c0_68 = arith.constant 0 : index
    %c0_69 = arith.constant 0 : index
    %116 = vector.load %arg11[%c0_67, %c0_68, %c0_69] : memref<8x8x32xf32, #tpu.memory_space<vmem>>, vector<1x8x32xf32>
    %117 = vector.shape_cast %116 : vector<1x8x32xf32> to vector<8x32xf32>
    %cst_70 = arith.constant dense<0.000000e+00> : vector<8x32xf32>
    %118 = tpu.matmul %115, %117, %cst_70 {dimension_numbers = #tpu.dot_dimension_numbers<[1], [0], [0], [1], [0, 0, 1, 1], [], []>} : vector<8x8xf32>, vector<8x32xf32>, vector<8x32xf32> -> vector<8x32xf32>
    %119 = vector.broadcast %98 : vector<1x32xf32> to vector<8x32xf32>
    %120 = arith.addf %119, %118 : vector<8x32xf32>
    %121 = vector.extract_strided_slice %96 {offsets = [0, 8], sizes = [8, 8], strides = [1, 1]} : vector<8x96xf32> to vector<8x8xf32>
    %122 = vector.extract_strided_slice %96 {offsets = [0, 40], sizes = [8, 8], strides = [1, 1]} : vector<8x96xf32> to vector<8x8xf32>
    %123 = vector.extract_strided_slice %96 {offsets = [0, 72], sizes = [8, 8], strides = [1, 1]} : vector<8x96xf32> to vector<8x8xf32>
    %cst_71 = arith.constant dense<0.000000e+00> : vector<8x8xf32>
    %124 = tpu.matmul %121, %122, %cst_71 {dimension_numbers = #tpu.dot_dimension_numbers<[1], [1], [0], [0], [0, 0, 1, 0], [], []>} : vector<8x8xf32>, vector<8x8xf32>, vector<8x8xf32> -> vector<8x8xf32>
    %cst_72 = arith.constant 0.353553385 : f32
    %125 = vector.broadcast %cst_72 : f32 to vector<8x8xf32>
    %126 = arith.mulf %124, %125 : vector<8x8xf32>
    %cst_73 = arith.constant dense<0xFF800000> : vector<8xf32>
    %127 = vector.multi_reduction <maximumf>, %126, %cst_73 [1] : vector<8x8xf32> to vector<8xf32>
    %128 = vector.shape_cast %127 : vector<8xf32> to vector<8x1xf32>
    %129 = vector.broadcast %128 : vector<8x1xf32> to vector<8x8xf32>
    %130 = arith.subf %126, %129 : vector<8x8xf32>
    %131 = math.exp %130 : vector<8x8xf32>
    %cst_74 = arith.constant dense<0.000000e+00> : vector<8xf32>
    %132 = vector.multi_reduction <add>, %131, %cst_74 [1] : vector<8x8xf32> to vector<8xf32>
    %133 = vector.shape_cast %132 : vector<8xf32> to vector<8x1xf32>
    %134 = tpu.reciprocal %133 {approx = true} : vector<8x1xf32> -> vector<8x1xf32>
    %135 = vector.broadcast %134 : vector<8x1xf32> to vector<8x8xf32>
    %136 = arith.mulf %131, %135 : vector<8x8xf32>
    %cst_75 = arith.constant dense<0.000000e+00> : vector<8x8xf32>
    %137 = tpu.matmul %136, %123, %cst_75 {dimension_numbers = #tpu.dot_dimension_numbers<[1], [0], [0], [1], [0, 0, 1, 1], [], []>} : vector<8x8xf32>, vector<8x8xf32>, vector<8x8xf32> -> vector<8x8xf32>
    %c1_76 = arith.constant 1 : index
    %c0_77 = arith.constant 0 : index
    %c0_78 = arith.constant 0 : index
    %138 = vector.load %arg11[%c1_76, %c0_77, %c0_78] : memref<8x8x32xf32, #tpu.memory_space<vmem>>, vector<1x8x32xf32>
    %139 = vector.shape_cast %138 : vector<1x8x32xf32> to vector<8x32xf32>
    %cst_79 = arith.constant dense<0.000000e+00> : vector<8x32xf32>
    %140 = tpu.matmul %137, %139, %cst_79 {dimension_numbers = #tpu.dot_dimension_numbers<[1], [0], [0], [1], [0, 0, 1, 1], [], []>} : vector<8x8xf32>, vector<8x32xf32>, vector<8x32xf32> -> vector<8x32xf32>
    %141 = arith.addf %120, %140 : vector<8x32xf32>
    %142 = vector.extract_strided_slice %96 {offsets = [0, 16], sizes = [8, 8], strides = [1, 1]} : vector<8x96xf32> to vector<8x8xf32>
    %143 = vector.extract_strided_slice %96 {offsets = [0, 48], sizes = [8, 8], strides = [1, 1]} : vector<8x96xf32> to vector<8x8xf32>
    %144 = vector.extract_strided_slice %96 {offsets = [0, 80], sizes = [8, 8], strides = [1, 1]} : vector<8x96xf32> to vector<8x8xf32>
    %cst_80 = arith.constant dense<0.000000e+00> : vector<8x8xf32>
    %145 = tpu.matmul %142, %143, %cst_80 {dimension_numbers = #tpu.dot_dimension_numbers<[1], [1], [0], [0], [0, 0, 1, 0], [], []>} : vector<8x8xf32>, vector<8x8xf32>, vector<8x8xf32> -> vector<8x8xf32>
    %cst_81 = arith.constant 0.353553385 : f32
    %146 = vector.broadcast %cst_81 : f32 to vector<8x8xf32>
    %147 = arith.mulf %145, %146 : vector<8x8xf32>
    %cst_82 = arith.constant dense<0xFF800000> : vector<8xf32>
    %148 = vector.multi_reduction <maximumf>, %147, %cst_82 [1] : vector<8x8xf32> to vector<8xf32>
    %149 = vector.shape_cast %148 : vector<8xf32> to vector<8x1xf32>
    %150 = vector.broadcast %149 : vector<8x1xf32> to vector<8x8xf32>
    %151 = arith.subf %147, %150 : vector<8x8xf32>
    %152 = math.exp %151 : vector<8x8xf32>
    %cst_83 = arith.constant dense<0.000000e+00> : vector<8xf32>
    %153 = vector.multi_reduction <add>, %152, %cst_83 [1] : vector<8x8xf32> to vector<8xf32>
    %154 = vector.shape_cast %153 : vector<8xf32> to vector<8x1xf32>
    %155 = tpu.reciprocal %154 {approx = true} : vector<8x1xf32> -> vector<8x1xf32>
    %156 = vector.broadcast %155 : vector<8x1xf32> to vector<8x8xf32>
    %157 = arith.mulf %152, %156 : vector<8x8xf32>
    %cst_84 = arith.constant dense<0.000000e+00> : vector<8x8xf32>
    %158 = tpu.matmul %157, %144, %cst_84 {dimension_numbers = #tpu.dot_dimension_numbers<[1], [0], [0], [1], [0, 0, 1, 1], [], []>} : vector<8x8xf32>, vector<8x8xf32>, vector<8x8xf32> -> vector<8x8xf32>
    %c2_85 = arith.constant 2 : index
    %c0_86 = arith.constant 0 : index
    %c0_87 = arith.constant 0 : index
    %159 = vector.load %arg11[%c2_85, %c0_86, %c0_87] : memref<8x8x32xf32, #tpu.memory_space<vmem>>, vector<1x8x32xf32>
    %160 = vector.shape_cast %159 : vector<1x8x32xf32> to vector<8x32xf32>
    %cst_88 = arith.constant dense<0.000000e+00> : vector<8x32xf32>
    %161 = tpu.matmul %158, %160, %cst_88 {dimension_numbers = #tpu.dot_dimension_numbers<[1], [0], [0], [1], [0, 0, 1, 1], [], []>} : vector<8x8xf32>, vector<8x32xf32>, vector<8x32xf32> -> vector<8x32xf32>
    %162 = arith.addf %141, %161 : vector<8x32xf32>
    %163 = vector.extract_strided_slice %96 {offsets = [0, 24], sizes = [8, 8], strides = [1, 1]} : vector<8x96xf32> to vector<8x8xf32>
    %164 = vector.extract_strided_slice %96 {offsets = [0, 56], sizes = [8, 8], strides = [1, 1]} : vector<8x96xf32> to vector<8x8xf32>
    %165 = vector.extract_strided_slice %96 {offsets = [0, 88], sizes = [8, 8], strides = [1, 1]} : vector<8x96xf32> to vector<8x8xf32>
    %cst_89 = arith.constant dense<0.000000e+00> : vector<8x8xf32>
    %166 = tpu.matmul %163, %164, %cst_89 {dimension_numbers = #tpu.dot_dimension_numbers<[1], [1], [0], [0], [0, 0, 1, 0], [], []>} : vector<8x8xf32>, vector<8x8xf32>, vector<8x8xf32> -> vector<8x8xf32>
    %cst_90 = arith.constant 0.353553385 : f32
    %167 = vector.broadcast %cst_90 : f32 to vector<8x8xf32>
    %168 = arith.mulf %166, %167 : vector<8x8xf32>
    %cst_91 = arith.constant dense<0xFF800000> : vector<8xf32>
    %169 = vector.multi_reduction <maximumf>, %168, %cst_91 [1] : vector<8x8xf32> to vector<8xf32>
    %170 = vector.shape_cast %169 : vector<8xf32> to vector<8x1xf32>
    %171 = vector.broadcast %170 : vector<8x1xf32> to vector<8x8xf32>
    %172 = arith.subf %168, %171 : vector<8x8xf32>
    %173 = math.exp %172 : vector<8x8xf32>
    %cst_92 = arith.constant dense<0.000000e+00> : vector<8xf32>
    %174 = vector.multi_reduction <add>, %173, %cst_92 [1] : vector<8x8xf32> to vector<8xf32>
    %175 = vector.shape_cast %174 : vector<8xf32> to vector<8x1xf32>
    %176 = tpu.reciprocal %175 {approx = true} : vector<8x1xf32> -> vector<8x1xf32>
    %177 = vector.broadcast %176 : vector<8x1xf32> to vector<8x8xf32>
    %178 = arith.mulf %173, %177 : vector<8x8xf32>
    %cst_93 = arith.constant dense<0.000000e+00> : vector<8x8xf32>
    %179 = tpu.matmul %178, %165, %cst_93 {dimension_numbers = #tpu.dot_dimension_numbers<[1], [0], [0], [1], [0, 0, 1, 1], [], []>} : vector<8x8xf32>, vector<8x8xf32>, vector<8x8xf32> -> vector<8x8xf32>
    %c3_94 = arith.constant 3 : index
    %c0_95 = arith.constant 0 : index
    %c0_96 = arith.constant 0 : index
    %180 = vector.load %arg11[%c3_94, %c0_95, %c0_96] : memref<8x8x32xf32, #tpu.memory_space<vmem>>, vector<1x8x32xf32>
    %181 = vector.shape_cast %180 : vector<1x8x32xf32> to vector<8x32xf32>
    %cst_97 = arith.constant dense<0.000000e+00> : vector<8x32xf32>
    %182 = tpu.matmul %179, %181, %cst_97 {dimension_numbers = #tpu.dot_dimension_numbers<[1], [0], [0], [1], [0, 0, 1, 1], [], []>} : vector<8x8xf32>, vector<8x32xf32>, vector<8x32xf32> -> vector<8x32xf32>
    %183 = arith.addf %162, %182 : vector<8x32xf32>
    %184 = arith.addf %89, %183 : vector<8x32xf32>
    %c0_98 = arith.constant 0 : index
    %c0_99 = arith.constant 0 : index
    %c0_100 = arith.constant 0 : index
    %185 = vector.load %arg13[%c0_98, %c0_99, %c0_100] : memref<2x1x32xf32, #tpu.memory_space<vmem>>, vector<1x1x32xf32>
    %186 = vector.shape_cast %185 : vector<1x1x32xf32> to vector<1x32xf32>
    %c0_101 = arith.constant 0 : index
    %c0_102 = arith.constant 0 : index
    %c0_103 = arith.constant 0 : index
    %187 = vector.load %arg14[%c0_101, %c0_102, %c0_103] : memref<2x1x32xf32, #tpu.memory_space<vmem>>, vector<1x1x32xf32>
    %188 = vector.shape_cast %187 : vector<1x1x32xf32> to vector<1x32xf32>
    %cst_104 = arith.constant dense<0.000000e+00> : vector<8xf32>
    %189 = vector.multi_reduction <add>, %184, %cst_104 [1] : vector<8x32xf32> to vector<8xf32>
    %190 = vector.shape_cast %189 : vector<8xf32> to vector<8x1xf32>
    %cst_105 = arith.constant 3.200000e+01 : f32
    %191 = vector.broadcast %cst_105 : f32 to vector<8x1xf32>
    %192 = arith.divf %190, %191 : vector<8x1xf32>
    %193 = vector.broadcast %192 : vector<8x1xf32> to vector<8x32xf32>
    %194 = arith.subf %184, %193 : vector<8x32xf32>
    %195 = arith.mulf %194, %194 : vector<8x32xf32>
    %cst_106 = arith.constant dense<0.000000e+00> : vector<8xf32>
    %196 = vector.multi_reduction <add>, %195, %cst_106 [1] : vector<8x32xf32> to vector<8xf32>
    %197 = vector.shape_cast %196 : vector<8xf32> to vector<8x1xf32>
    %cst_107 = arith.constant 3.200000e+01 : f32
    %198 = vector.broadcast %cst_107 : f32 to vector<8x1xf32>
    %199 = arith.divf %197, %198 : vector<8x1xf32>
    %200 = vector.broadcast %192 : vector<8x1xf32> to vector<8x32xf32>
    %201 = arith.subf %184, %200 : vector<8x32xf32>
    %cst_108 = arith.constant 9.99999996E-13 : f32
    %202 = vector.broadcast %cst_108 : f32 to vector<8x1xf32>
    %203 = arith.addf %199, %202 : vector<8x1xf32>
    %204 = math.rsqrt %203 : vector<8x1xf32>
    %205 = vector.broadcast %204 : vector<8x1xf32> to vector<8x32xf32>
    %206 = arith.mulf %201, %205 : vector<8x32xf32>
    %207 = vector.broadcast %186 : vector<1x32xf32> to vector<8x32xf32>
    %208 = arith.mulf %206, %207 : vector<8x32xf32>
    %209 = vector.broadcast %188 : vector<1x32xf32> to vector<8x32xf32>
    %210 = arith.addf %208, %209 : vector<8x32xf32>
    %c0_109 = arith.constant 0 : index
    %c0_110 = arith.constant 0 : index
    %c0_111 = arith.constant 0 : index
    %211 = vector.load %arg15[%c0_109, %c0_110, %c0_111] : memref<2x32x64xf32, #tpu.memory_space<vmem>>, vector<1x32x64xf32>
    %212 = vector.shape_cast %211 : vector<1x32x64xf32> to vector<32x64xf32>
    %cst_112 = arith.constant dense<0.000000e+00> : vector<8x64xf32>
    %213 = tpu.matmul %210, %212, %cst_112 {dimension_numbers = #tpu.dot_dimension_numbers<[1], [0], [0], [1], [0, 0, 1, 1], [], []>} : vector<8x32xf32>, vector<32x64xf32>, vector<8x64xf32> -> vector<8x64xf32>
    %c0_113 = arith.constant 0 : index
    %c0_114 = arith.constant 0 : index
    %c0_115 = arith.constant 0 : index
    %214 = vector.load %arg16[%c0_113, %c0_114, %c0_115] : memref<2x1x64xf32, #tpu.memory_space<vmem>>, vector<1x1x64xf32>
    %215 = vector.shape_cast %214 : vector<1x1x64xf32> to vector<1x64xf32>
    %216 = vector.broadcast %215 : vector<1x64xf32> to vector<8x64xf32>
    %217 = arith.addf %213, %216 : vector<8x64xf32>
    %cst_116 = arith.constant 5.000000e-01 : f32
    %218 = vector.broadcast %cst_116 : f32 to vector<8x64xf32>
    %219 = arith.mulf %218, %217 : vector<8x64xf32>
    %cst_117 = arith.constant 4.471500e-02 : f32
    %220 = vector.broadcast %cst_117 : f32 to vector<8x64xf32>
    %221 = arith.mulf %220, %217 : vector<8x64xf32>
    %222 = arith.mulf %221, %217 : vector<8x64xf32>
    %223 = arith.mulf %222, %217 : vector<8x64xf32>
    %224 = arith.addf %217, %223 : vector<8x64xf32>
    %cst_118 = arith.constant 0.797884583 : f32
    %225 = vector.broadcast %cst_118 : f32 to vector<8x64xf32>
    %226 = arith.mulf %225, %224 : vector<8x64xf32>
    %227 = math.tanh %226 : vector<8x64xf32>
    %cst_119 = arith.constant 1.000000e+00 : f32
    %228 = vector.broadcast %cst_119 : f32 to vector<8x64xf32>
    %229 = arith.addf %228, %227 : vector<8x64xf32>
    %230 = arith.mulf %219, %229 : vector<8x64xf32>
    %c0_120 = arith.constant 0 : index
    %c0_121 = arith.constant 0 : index
    %c0_122 = arith.constant 0 : index
    %231 = vector.load %arg17[%c0_120, %c0_121, %c0_122] : memref<2x64x32xf32, #tpu.memory_space<vmem>>, vector<1x64x32xf32>
    %232 = vector.shape_cast %231 : vector<1x64x32xf32> to vector<64x32xf32>
    %cst_123 = arith.constant dense<0.000000e+00> : vector<8x32xf32>
    %233 = tpu.matmul %230, %232, %cst_123 {dimension_numbers = #tpu.dot_dimension_numbers<[1], [0], [0], [1], [0, 0, 1, 1], [], []>} : vector<8x64xf32>, vector<64x32xf32>, vector<8x32xf32> -> vector<8x32xf32>
    %c0_124 = arith.constant 0 : index
    %c0_125 = arith.constant 0 : index
    %c0_126 = arith.constant 0 : index
    %234 = vector.load %arg18[%c0_124, %c0_125, %c0_126] : memref<2x1x32xf32, #tpu.memory_space<vmem>>, vector<1x1x32xf32>
    %235 = vector.shape_cast %234 : vector<1x1x32xf32> to vector<1x32xf32>
    %236 = vector.broadcast %235 : vector<1x32xf32> to vector<8x32xf32>
    %237 = arith.addf %233, %236 : vector<8x32xf32>
    %238 = arith.addf %210, %237 : vector<8x32xf32>
    %c0_127 = arith.constant 0 : index
    %c0_128 = arith.constant 0 : index
    %c0_129 = arith.constant 0 : index
    %239 = vector.load %arg19[%c0_127, %c0_128, %c0_129] : memref<2x1x32xf32, #tpu.memory_space<vmem>>, vector<1x1x32xf32>
    %240 = vector.shape_cast %239 : vector<1x1x32xf32> to vector<1x32xf32>
    %c0_130 = arith.constant 0 : index
    %c0_131 = arith.constant 0 : index
    %c0_132 = arith.constant 0 : index
    %241 = vector.load %arg20[%c0_130, %c0_131, %c0_132] : memref<2x1x32xf32, #tpu.memory_space<vmem>>, vector<1x1x32xf32>
    %242 = vector.shape_cast %241 : vector<1x1x32xf32> to vector<1x32xf32>
    %cst_133 = arith.constant dense<0.000000e+00> : vector<8xf32>
    %243 = vector.multi_reduction <add>, %238, %cst_133 [1] : vector<8x32xf32> to vector<8xf32>
    %244 = vector.shape_cast %243 : vector<8xf32> to vector<8x1xf32>
    %cst_134 = arith.constant 3.200000e+01 : f32
    %245 = vector.broadcast %cst_134 : f32 to vector<8x1xf32>
    %246 = arith.divf %244, %245 : vector<8x1xf32>
    %247 = vector.broadcast %246 : vector<8x1xf32> to vector<8x32xf32>
    %248 = arith.subf %238, %247 : vector<8x32xf32>
    %249 = arith.mulf %248, %248 : vector<8x32xf32>
    %cst_135 = arith.constant dense<0.000000e+00> : vector<8xf32>
    %250 = vector.multi_reduction <add>, %249, %cst_135 [1] : vector<8x32xf32> to vector<8xf32>
    %251 = vector.shape_cast %250 : vector<8xf32> to vector<8x1xf32>
    %cst_136 = arith.constant 3.200000e+01 : f32
    %252 = vector.broadcast %cst_136 : f32 to vector<8x1xf32>
    %253 = arith.divf %251, %252 : vector<8x1xf32>
    %254 = vector.broadcast %246 : vector<8x1xf32> to vector<8x32xf32>
    %255 = arith.subf %238, %254 : vector<8x32xf32>
    %cst_137 = arith.constant 9.99999996E-13 : f32
    %256 = vector.broadcast %cst_137 : f32 to vector<8x1xf32>
    %257 = arith.addf %253, %256 : vector<8x1xf32>
    %258 = math.rsqrt %257 : vector<8x1xf32>
    %259 = vector.broadcast %258 : vector<8x1xf32> to vector<8x32xf32>
    %260 = arith.mulf %255, %259 : vector<8x32xf32>
    %261 = vector.broadcast %240 : vector<1x32xf32> to vector<8x32xf32>
    %262 = arith.mulf %260, %261 : vector<8x32xf32>
    %263 = vector.broadcast %242 : vector<1x32xf32> to vector<8x32xf32>
    %264 = arith.addf %262, %263 : vector<8x32xf32>
    %c1_138 = arith.constant 1 : index
    %c0_139 = arith.constant 0 : index
    %c0_140 = arith.constant 0 : index
    %265 = vector.load %arg9[%c1_138, %c0_139, %c0_140] : memref<2x32x96xf32, #tpu.memory_space<vmem>>, vector<1x32x96xf32>
    %266 = vector.shape_cast %265 : vector<1x32x96xf32> to vector<32x96xf32>
    %cst_141 = arith.constant dense<0.000000e+00> : vector<8x96xf32>
    %267 = tpu.matmul %264, %266, %cst_141 {dimension_numbers = #tpu.dot_dimension_numbers<[1], [0], [0], [1], [0, 0, 1, 1], [], []>} : vector<8x32xf32>, vector<32x96xf32>, vector<8x96xf32> -> vector<8x96xf32>
    %c1_142 = arith.constant 1 : index
    %c0_143 = arith.constant 0 : index
    %c0_144 = arith.constant 0 : index
    %268 = vector.load %arg10[%c1_142, %c0_143, %c0_144] : memref<2x1x96xf32, #tpu.memory_space<vmem>>, vector<1x1x96xf32>
    %269 = vector.shape_cast %268 : vector<1x1x96xf32> to vector<1x96xf32>
    %270 = vector.broadcast %269 : vector<1x96xf32> to vector<8x96xf32>
    %271 = arith.addf %267, %270 : vector<8x96xf32>
    %c1_145 = arith.constant 1 : index
    %c0_146 = arith.constant 0 : index
    %c0_147 = arith.constant 0 : index
    %272 = vector.load %arg12[%c1_145, %c0_146, %c0_147] : memref<2x1x32xf32, #tpu.memory_space<vmem>>, vector<1x1x32xf32>
    %273 = vector.shape_cast %272 : vector<1x1x32xf32> to vector<1x32xf32>
    %274 = vector.extract_strided_slice %271 {offsets = [0, 0], sizes = [8, 8], strides = [1, 1]} : vector<8x96xf32> to vector<8x8xf32>
    %275 = vector.extract_strided_slice %271 {offsets = [0, 32], sizes = [8, 8], strides = [1, 1]} : vector<8x96xf32> to vector<8x8xf32>
    %276 = vector.extract_strided_slice %271 {offsets = [0, 64], sizes = [8, 8], strides = [1, 1]} : vector<8x96xf32> to vector<8x8xf32>
    %cst_148 = arith.constant dense<0.000000e+00> : vector<8x8xf32>
    %277 = tpu.matmul %274, %275, %cst_148 {dimension_numbers = #tpu.dot_dimension_numbers<[1], [1], [0], [0], [0, 0, 1, 0], [], []>} : vector<8x8xf32>, vector<8x8xf32>, vector<8x8xf32> -> vector<8x8xf32>
    %cst_149 = arith.constant 0.353553385 : f32
    %278 = vector.broadcast %cst_149 : f32 to vector<8x8xf32>
    %279 = arith.mulf %277, %278 : vector<8x8xf32>
    %cst_150 = arith.constant dense<0xFF800000> : vector<8xf32>
    %280 = vector.multi_reduction <maximumf>, %279, %cst_150 [1] : vector<8x8xf32> to vector<8xf32>
    %281 = vector.shape_cast %280 : vector<8xf32> to vector<8x1xf32>
    %282 = vector.broadcast %281 : vector<8x1xf32> to vector<8x8xf32>
    %283 = arith.subf %279, %282 : vector<8x8xf32>
    %284 = math.exp %283 : vector<8x8xf32>
    %cst_151 = arith.constant dense<0.000000e+00> : vector<8xf32>
    %285 = vector.multi_reduction <add>, %284, %cst_151 [1] : vector<8x8xf32> to vector<8xf32>
    %286 = vector.shape_cast %285 : vector<8xf32> to vector<8x1xf32>
    %287 = tpu.reciprocal %286 {approx = true} : vector<8x1xf32> -> vector<8x1xf32>
    %288 = vector.broadcast %287 : vector<8x1xf32> to vector<8x8xf32>
    %289 = arith.mulf %284, %288 : vector<8x8xf32>
    %cst_152 = arith.constant dense<0.000000e+00> : vector<8x8xf32>
    %290 = tpu.matmul %289, %276, %cst_152 {dimension_numbers = #tpu.dot_dimension_numbers<[1], [0], [0], [1], [0, 0, 1, 1], [], []>} : vector<8x8xf32>, vector<8x8xf32>, vector<8x8xf32> -> vector<8x8xf32>
    %c4_153 = arith.constant 4 : index
    %c0_154 = arith.constant 0 : index
    %c0_155 = arith.constant 0 : index
    %291 = vector.load %arg11[%c4_153, %c0_154, %c0_155] : memref<8x8x32xf32, #tpu.memory_space<vmem>>, vector<1x8x32xf32>
    %292 = vector.shape_cast %291 : vector<1x8x32xf32> to vector<8x32xf32>
    %cst_156 = arith.constant dense<0.000000e+00> : vector<8x32xf32>
    %293 = tpu.matmul %290, %292, %cst_156 {dimension_numbers = #tpu.dot_dimension_numbers<[1], [0], [0], [1], [0, 0, 1, 1], [], []>} : vector<8x8xf32>, vector<8x32xf32>, vector<8x32xf32> -> vector<8x32xf32>
    %294 = vector.broadcast %273 : vector<1x32xf32> to vector<8x32xf32>
    %295 = arith.addf %294, %293 : vector<8x32xf32>
    %296 = vector.extract_strided_slice %271 {offsets = [0, 8], sizes = [8, 8], strides = [1, 1]} : vector<8x96xf32> to vector<8x8xf32>
    %297 = vector.extract_strided_slice %271 {offsets = [0, 40], sizes = [8, 8], strides = [1, 1]} : vector<8x96xf32> to vector<8x8xf32>
    %298 = vector.extract_strided_slice %271 {offsets = [0, 72], sizes = [8, 8], strides = [1, 1]} : vector<8x96xf32> to vector<8x8xf32>
    %cst_157 = arith.constant dense<0.000000e+00> : vector<8x8xf32>
    %299 = tpu.matmul %296, %297, %cst_157 {dimension_numbers = #tpu.dot_dimension_numbers<[1], [1], [0], [0], [0, 0, 1, 0], [], []>} : vector<8x8xf32>, vector<8x8xf32>, vector<8x8xf32> -> vector<8x8xf32>
    %cst_158 = arith.constant 0.353553385 : f32
    %300 = vector.broadcast %cst_158 : f32 to vector<8x8xf32>
    %301 = arith.mulf %299, %300 : vector<8x8xf32>
    %cst_159 = arith.constant dense<0xFF800000> : vector<8xf32>
    %302 = vector.multi_reduction <maximumf>, %301, %cst_159 [1] : vector<8x8xf32> to vector<8xf32>
    %303 = vector.shape_cast %302 : vector<8xf32> to vector<8x1xf32>
    %304 = vector.broadcast %303 : vector<8x1xf32> to vector<8x8xf32>
    %305 = arith.subf %301, %304 : vector<8x8xf32>
    %306 = math.exp %305 : vector<8x8xf32>
    %cst_160 = arith.constant dense<0.000000e+00> : vector<8xf32>
    %307 = vector.multi_reduction <add>, %306, %cst_160 [1] : vector<8x8xf32> to vector<8xf32>
    %308 = vector.shape_cast %307 : vector<8xf32> to vector<8x1xf32>
    %309 = tpu.reciprocal %308 {approx = true} : vector<8x1xf32> -> vector<8x1xf32>
    %310 = vector.broadcast %309 : vector<8x1xf32> to vector<8x8xf32>
    %311 = arith.mulf %306, %310 : vector<8x8xf32>
    %cst_161 = arith.constant dense<0.000000e+00> : vector<8x8xf32>
    %312 = tpu.matmul %311, %298, %cst_161 {dimension_numbers = #tpu.dot_dimension_numbers<[1], [0], [0], [1], [0, 0, 1, 1], [], []>} : vector<8x8xf32>, vector<8x8xf32>, vector<8x8xf32> -> vector<8x8xf32>
    %c5_162 = arith.constant 5 : index
    %c0_163 = arith.constant 0 : index
    %c0_164 = arith.constant 0 : index
    %313 = vector.load %arg11[%c5_162, %c0_163, %c0_164] : memref<8x8x32xf32, #tpu.memory_space<vmem>>, vector<1x8x32xf32>
    %314 = vector.shape_cast %313 : vector<1x8x32xf32> to vector<8x32xf32>
    %cst_165 = arith.constant dense<0.000000e+00> : vector<8x32xf32>
    %315 = tpu.matmul %312, %314, %cst_165 {dimension_numbers = #tpu.dot_dimension_numbers<[1], [0], [0], [1], [0, 0, 1, 1], [], []>} : vector<8x8xf32>, vector<8x32xf32>, vector<8x32xf32> -> vector<8x32xf32>
    %316 = arith.addf %295, %315 : vector<8x32xf32>
    %317 = vector.extract_strided_slice %271 {offsets = [0, 16], sizes = [8, 8], strides = [1, 1]} : vector<8x96xf32> to vector<8x8xf32>
    %318 = vector.extract_strided_slice %271 {offsets = [0, 48], sizes = [8, 8], strides = [1, 1]} : vector<8x96xf32> to vector<8x8xf32>
    %319 = vector.extract_strided_slice %271 {offsets = [0, 80], sizes = [8, 8], strides = [1, 1]} : vector<8x96xf32> to vector<8x8xf32>
    %cst_166 = arith.constant dense<0.000000e+00> : vector<8x8xf32>
    %320 = tpu.matmul %317, %318, %cst_166 {dimension_numbers = #tpu.dot_dimension_numbers<[1], [1], [0], [0], [0, 0, 1, 0], [], []>} : vector<8x8xf32>, vector<8x8xf32>, vector<8x8xf32> -> vector<8x8xf32>
    %cst_167 = arith.constant 0.353553385 : f32
    %321 = vector.broadcast %cst_167 : f32 to vector<8x8xf32>
    %322 = arith.mulf %320, %321 : vector<8x8xf32>
    %cst_168 = arith.constant dense<0xFF800000> : vector<8xf32>
    %323 = vector.multi_reduction <maximumf>, %322, %cst_168 [1] : vector<8x8xf32> to vector<8xf32>
    %324 = vector.shape_cast %323 : vector<8xf32> to vector<8x1xf32>
    %325 = vector.broadcast %324 : vector<8x1xf32> to vector<8x8xf32>
    %326 = arith.subf %322, %325 : vector<8x8xf32>
    %327 = math.exp %326 : vector<8x8xf32>
    %cst_169 = arith.constant dense<0.000000e+00> : vector<8xf32>
    %328 = vector.multi_reduction <add>, %327, %cst_169 [1] : vector<8x8xf32> to vector<8xf32>
    %329 = vector.shape_cast %328 : vector<8xf32> to vector<8x1xf32>
    %330 = tpu.reciprocal %329 {approx = true} : vector<8x1xf32> -> vector<8x1xf32>
    %331 = vector.broadcast %330 : vector<8x1xf32> to vector<8x8xf32>
    %332 = arith.mulf %327, %331 : vector<8x8xf32>
    %cst_170 = arith.constant dense<0.000000e+00> : vector<8x8xf32>
    %333 = tpu.matmul %332, %319, %cst_170 {dimension_numbers = #tpu.dot_dimension_numbers<[1], [0], [0], [1], [0, 0, 1, 1], [], []>} : vector<8x8xf32>, vector<8x8xf32>, vector<8x8xf32> -> vector<8x8xf32>
    %c6_171 = arith.constant 6 : index
    %c0_172 = arith.constant 0 : index
    %c0_173 = arith.constant 0 : index
    %334 = vector.load %arg11[%c6_171, %c0_172, %c0_173] : memref<8x8x32xf32, #tpu.memory_space<vmem>>, vector<1x8x32xf32>
    %335 = vector.shape_cast %334 : vector<1x8x32xf32> to vector<8x32xf32>
    %cst_174 = arith.constant dense<0.000000e+00> : vector<8x32xf32>
    %336 = tpu.matmul %333, %335, %cst_174 {dimension_numbers = #tpu.dot_dimension_numbers<[1], [0], [0], [1], [0, 0, 1, 1], [], []>} : vector<8x8xf32>, vector<8x32xf32>, vector<8x32xf32> -> vector<8x32xf32>
    %337 = arith.addf %316, %336 : vector<8x32xf32>
    %338 = vector.extract_strided_slice %271 {offsets = [0, 24], sizes = [8, 8], strides = [1, 1]} : vector<8x96xf32> to vector<8x8xf32>
    %339 = vector.extract_strided_slice %271 {offsets = [0, 56], sizes = [8, 8], strides = [1, 1]} : vector<8x96xf32> to vector<8x8xf32>
    %340 = vector.extract_strided_slice %271 {offsets = [0, 88], sizes = [8, 8], strides = [1, 1]} : vector<8x96xf32> to vector<8x8xf32>
    %cst_175 = arith.constant dense<0.000000e+00> : vector<8x8xf32>
    %341 = tpu.matmul %338, %339, %cst_175 {dimension_numbers = #tpu.dot_dimension_numbers<[1], [1], [0], [0], [0, 0, 1, 0], [], []>} : vector<8x8xf32>, vector<8x8xf32>, vector<8x8xf32> -> vector<8x8xf32>
    %cst_176 = arith.constant 0.353553385 : f32
    %342 = vector.broadcast %cst_176 : f32 to vector<8x8xf32>
    %343 = arith.mulf %341, %342 : vector<8x8xf32>
    %cst_177 = arith.constant dense<0xFF800000> : vector<8xf32>
    %344 = vector.multi_reduction <maximumf>, %343, %cst_177 [1] : vector<8x8xf32> to vector<8xf32>
    %345 = vector.shape_cast %344 : vector<8xf32> to vector<8x1xf32>
    %346 = vector.broadcast %345 : vector<8x1xf32> to vector<8x8xf32>
    %347 = arith.subf %343, %346 : vector<8x8xf32>
    %348 = math.exp %347 : vector<8x8xf32>
    %cst_178 = arith.constant dense<0.000000e+00> : vector<8xf32>
    %349 = vector.multi_reduction <add>, %348, %cst_178 [1] : vector<8x8xf32> to vector<8xf32>
    %350 = vector.shape_cast %349 : vector<8xf32> to vector<8x1xf32>
    %351 = tpu.reciprocal %350 {approx = true} : vector<8x1xf32> -> vector<8x1xf32>
    %352 = vector.broadcast %351 : vector<8x1xf32> to vector<8x8xf32>
    %353 = arith.mulf %348, %352 : vector<8x8xf32>
    %cst_179 = arith.constant dense<0.000000e+00> : vector<8x8xf32>
    %354 = tpu.matmul %353, %340, %cst_179 {dimension_numbers = #tpu.dot_dimension_numbers<[1], [0], [0], [1], [0, 0, 1, 1], [], []>} : vector<8x8xf32>, vector<8x8xf32>, vector<8x8xf32> -> vector<8x8xf32>
    %c7_180 = arith.constant 7 : index
    %c0_181 = arith.constant 0 : index
    %c0_182 = arith.constant 0 : index
    %355 = vector.load %arg11[%c7_180, %c0_181, %c0_182] : memref<8x8x32xf32, #tpu.memory_space<vmem>>, vector<1x8x32xf32>
    %356 = vector.shape_cast %355 : vector<1x8x32xf32> to vector<8x32xf32>
    %cst_183 = arith.constant dense<0.000000e+00> : vector<8x32xf32>
    %357 = tpu.matmul %354, %356, %cst_183 {dimension_numbers = #tpu.dot_dimension_numbers<[1], [0], [0], [1], [0, 0, 1, 1], [], []>} : vector<8x8xf32>, vector<8x32xf32>, vector<8x32xf32> -> vector<8x32xf32>
    %358 = arith.addf %337, %357 : vector<8x32xf32>
    %359 = arith.addf %264, %358 : vector<8x32xf32>
    %c1_184 = arith.constant 1 : index
    %c0_185 = arith.constant 0 : index
    %c0_186 = arith.constant 0 : index
    %360 = vector.load %arg13[%c1_184, %c0_185, %c0_186] : memref<2x1x32xf32, #tpu.memory_space<vmem>>, vector<1x1x32xf32>
    %361 = vector.shape_cast %360 : vector<1x1x32xf32> to vector<1x32xf32>
    %c1_187 = arith.constant 1 : index
    %c0_188 = arith.constant 0 : index
    %c0_189 = arith.constant 0 : index
    %362 = vector.load %arg14[%c1_187, %c0_188, %c0_189] : memref<2x1x32xf32, #tpu.memory_space<vmem>>, vector<1x1x32xf32>
    %363 = vector.shape_cast %362 : vector<1x1x32xf32> to vector<1x32xf32>
    %cst_190 = arith.constant dense<0.000000e+00> : vector<8xf32>
    %364 = vector.multi_reduction <add>, %359, %cst_190 [1] : vector<8x32xf32> to vector<8xf32>
    %365 = vector.shape_cast %364 : vector<8xf32> to vector<8x1xf32>
    %cst_191 = arith.constant 3.200000e+01 : f32
    %366 = vector.broadcast %cst_191 : f32 to vector<8x1xf32>
    %367 = arith.divf %365, %366 : vector<8x1xf32>
    %368 = vector.broadcast %367 : vector<8x1xf32> to vector<8x32xf32>
    %369 = arith.subf %359, %368 : vector<8x32xf32>
    %370 = arith.mulf %369, %369 : vector<8x32xf32>
    %cst_192 = arith.constant dense<0.000000e+00> : vector<8xf32>
    %371 = vector.multi_reduction <add>, %370, %cst_192 [1] : vector<8x32xf32> to vector<8xf32>
    %372 = vector.shape_cast %371 : vector<8xf32> to vector<8x1xf32>
    %cst_193 = arith.constant 3.200000e+01 : f32
    %373 = vector.broadcast %cst_193 : f32 to vector<8x1xf32>
    %374 = arith.divf %372, %373 : vector<8x1xf32>
    %375 = vector.broadcast %367 : vector<8x1xf32> to vector<8x32xf32>
    %376 = arith.subf %359, %375 : vector<8x32xf32>
    %cst_194 = arith.constant 9.99999996E-13 : f32
    %377 = vector.broadcast %cst_194 : f32 to vector<8x1xf32>
    %378 = arith.addf %374, %377 : vector<8x1xf32>
    %379 = math.rsqrt %378 : vector<8x1xf32>
    %380 = vector.broadcast %379 : vector<8x1xf32> to vector<8x32xf32>
    %381 = arith.mulf %376, %380 : vector<8x32xf32>
    %382 = vector.broadcast %361 : vector<1x32xf32> to vector<8x32xf32>
    %383 = arith.mulf %381, %382 : vector<8x32xf32>
    %384 = vector.broadcast %363 : vector<1x32xf32> to vector<8x32xf32>
    %385 = arith.addf %383, %384 : vector<8x32xf32>
    %c1_195 = arith.constant 1 : index
    %c0_196 = arith.constant 0 : index
    %c0_197 = arith.constant 0 : index
    %386 = vector.load %arg15[%c1_195, %c0_196, %c0_197] : memref<2x32x64xf32, #tpu.memory_space<vmem>>, vector<1x32x64xf32>
    %387 = vector.shape_cast %386 : vector<1x32x64xf32> to vector<32x64xf32>
    %cst_198 = arith.constant dense<0.000000e+00> : vector<8x64xf32>
    %388 = tpu.matmul %385, %387, %cst_198 {dimension_numbers = #tpu.dot_dimension_numbers<[1], [0], [0], [1], [0, 0, 1, 1], [], []>} : vector<8x32xf32>, vector<32x64xf32>, vector<8x64xf32> -> vector<8x64xf32>
    %c1_199 = arith.constant 1 : index
    %c0_200 = arith.constant 0 : index
    %c0_201 = arith.constant 0 : index
    %389 = vector.load %arg16[%c1_199, %c0_200, %c0_201] : memref<2x1x64xf32, #tpu.memory_space<vmem>>, vector<1x1x64xf32>
    %390 = vector.shape_cast %389 : vector<1x1x64xf32> to vector<1x64xf32>
    %391 = vector.broadcast %390 : vector<1x64xf32> to vector<8x64xf32>
    %392 = arith.addf %388, %391 : vector<8x64xf32>
    %cst_202 = arith.constant 5.000000e-01 : f32
    %393 = vector.broadcast %cst_202 : f32 to vector<8x64xf32>
    %394 = arith.mulf %393, %392 : vector<8x64xf32>
    %cst_203 = arith.constant 4.471500e-02 : f32
    %395 = vector.broadcast %cst_203 : f32 to vector<8x64xf32>
    %396 = arith.mulf %395, %392 : vector<8x64xf32>
    %397 = arith.mulf %396, %392 : vector<8x64xf32>
    %398 = arith.mulf %397, %392 : vector<8x64xf32>
    %399 = arith.addf %392, %398 : vector<8x64xf32>
    %cst_204 = arith.constant 0.797884583 : f32
    %400 = vector.broadcast %cst_204 : f32 to vector<8x64xf32>
    %401 = arith.mulf %400, %399 : vector<8x64xf32>
    %402 = math.tanh %401 : vector<8x64xf32>
    %cst_205 = arith.constant 1.000000e+00 : f32
    %403 = vector.broadcast %cst_205 : f32 to vector<8x64xf32>
    %404 = arith.addf %403, %402 : vector<8x64xf32>
    %405 = arith.mulf %394, %404 : vector<8x64xf32>
    %c1_206 = arith.constant 1 : index
    %c0_207 = arith.constant 0 : index
    %c0_208 = arith.constant 0 : index
    %406 = vector.load %arg17[%c1_206, %c0_207, %c0_208] : memref<2x64x32xf32, #tpu.memory_space<vmem>>, vector<1x64x32xf32>
    %407 = vector.shape_cast %406 : vector<1x64x32xf32> to vector<64x32xf32>
    %cst_209 = arith.constant dense<0.000000e+00> : vector<8x32xf32>
    %408 = tpu.matmul %405, %407, %cst_209 {dimension_numbers = #tpu.dot_dimension_numbers<[1], [0], [0], [1], [0, 0, 1, 1], [], []>} : vector<8x64xf32>, vector<64x32xf32>, vector<8x32xf32> -> vector<8x32xf32>
    %c1_210 = arith.constant 1 : index
    %c0_211 = arith.constant 0 : index
    %c0_212 = arith.constant 0 : index
    %409 = vector.load %arg18[%c1_210, %c0_211, %c0_212] : memref<2x1x32xf32, #tpu.memory_space<vmem>>, vector<1x1x32xf32>
    %410 = vector.shape_cast %409 : vector<1x1x32xf32> to vector<1x32xf32>
    %411 = vector.broadcast %410 : vector<1x32xf32> to vector<8x32xf32>
    %412 = arith.addf %408, %411 : vector<8x32xf32>
    %413 = arith.addf %385, %412 : vector<8x32xf32>
    %c1_213 = arith.constant 1 : index
    %c0_214 = arith.constant 0 : index
    %c0_215 = arith.constant 0 : index
    %414 = vector.load %arg19[%c1_213, %c0_214, %c0_215] : memref<2x1x32xf32, #tpu.memory_space<vmem>>, vector<1x1x32xf32>
    %415 = vector.shape_cast %414 : vector<1x1x32xf32> to vector<1x32xf32>
    %c1_216 = arith.constant 1 : index
    %c0_217 = arith.constant 0 : index
    %c0_218 = arith.constant 0 : index
    %416 = vector.load %arg20[%c1_216, %c0_217, %c0_218] : memref<2x1x32xf32, #tpu.memory_space<vmem>>, vector<1x1x32xf32>
    %417 = vector.shape_cast %416 : vector<1x1x32xf32> to vector<1x32xf32>
    %cst_219 = arith.constant dense<0.000000e+00> : vector<8xf32>
    %418 = vector.multi_reduction <add>, %413, %cst_219 [1] : vector<8x32xf32> to vector<8xf32>
    %419 = vector.shape_cast %418 : vector<8xf32> to vector<8x1xf32>
    %cst_220 = arith.constant 3.200000e+01 : f32
    %420 = vector.broadcast %cst_220 : f32 to vector<8x1xf32>
    %421 = arith.divf %419, %420 : vector<8x1xf32>
    %422 = vector.broadcast %421 : vector<8x1xf32> to vector<8x32xf32>
    %423 = arith.subf %413, %422 : vector<8x32xf32>
    %424 = arith.mulf %423, %423 : vector<8x32xf32>
    %cst_221 = arith.constant dense<0.000000e+00> : vector<8xf32>
    %425 = vector.multi_reduction <add>, %424, %cst_221 [1] : vector<8x32xf32> to vector<8xf32>
    %426 = vector.shape_cast %425 : vector<8xf32> to vector<8x1xf32>
    %cst_222 = arith.constant 3.200000e+01 : f32
    %427 = vector.broadcast %cst_222 : f32 to vector<8x1xf32>
    %428 = arith.divf %426, %427 : vector<8x1xf32>
    %429 = vector.broadcast %421 : vector<8x1xf32> to vector<8x32xf32>
    %430 = arith.subf %413, %429 : vector<8x32xf32>
    %cst_223 = arith.constant 9.99999996E-13 : f32
    %431 = vector.broadcast %cst_223 : f32 to vector<8x1xf32>
    %432 = arith.addf %428, %431 : vector<8x1xf32>
    %433 = math.rsqrt %432 : vector<8x1xf32>
    %434 = vector.broadcast %433 : vector<8x1xf32> to vector<8x32xf32>
    %435 = arith.mulf %430, %434 : vector<8x32xf32>
    %436 = vector.broadcast %415 : vector<1x32xf32> to vector<8x32xf32>
    %437 = arith.mulf %435, %436 : vector<8x32xf32>
    %438 = vector.broadcast %417 : vector<1x32xf32> to vector<8x32xf32>
    %439 = arith.addf %437, %438 : vector<8x32xf32>
    %c0_224 = arith.constant 0 : index
    %c0_225 = arith.constant 0 : index
    %440 = vector.load %arg21[%c0_224, %c0_225] : memref<32x5xf32, #tpu.memory_space<vmem>>, vector<32x5xf32>
    %cst_226 = arith.constant dense<0.000000e+00> : vector<8x5xf32>
    %441 = tpu.matmul %439, %440, %cst_226 {dimension_numbers = #tpu.dot_dimension_numbers<[1], [0], [0], [1], [0, 0, 1, 1], [], []>} : vector<8x32xf32>, vector<32x5xf32>, vector<8x5xf32> -> vector<8x5xf32>
    %c0_227 = arith.constant 0 : index
    %c0_228 = arith.constant 0 : index
    %442 = vector.load %arg22[%c0_227, %c0_228] : memref<1x5xf32, #tpu.memory_space<vmem>>, vector<1x5xf32>
    %443 = vector.broadcast %442 : vector<1x5xf32> to vector<8x5xf32>
    %444 = arith.addf %441, %443 : vector<8x5xf32>
    %445 = tpu.iota {dimensions = array<i32: 1>} : vector<1x5xi32>
    %446 = tpu.iota {dimensions = array<i32: 0>} : vector<5x5xi32>
    %447 = tpu.iota {dimensions = array<i32: 1>} : vector<5x5xi32>
    %448 = arith.cmpi eq, %446, %447 : vector<5x5xi32>
    %449 = arith.extui %448 : vector<5x5xi1> to vector<5x5xi32>
    %450 = arith.sitofp %449 : vector<5x5xi32> to vector<5x5xf32>
    %c0_229 = arith.constant 0 : index
    %c0_230 = arith.constant 0 : index
    %451 = vector.load %arg24[%c0_229, %c0_230] : memref<5x5xf32, #tpu.memory_space<vmem>>, vector<5x5xf32>
    %c0_231 = arith.constant 0 : index
    %c0_232 = arith.constant 0 : index
    %452 = vector.load %arg25[%c0_231, %c0_232] : memref<1x5xf32, #tpu.memory_space<vmem>>, vector<1x5xf32>
    %c0_233 = arith.constant 0 : index
    %c0_234 = arith.constant 0 : index
    %453 = vector.load %arg26[%c0_233, %c0_234] : memref<1x5xf32, #tpu.memory_space<vmem>>, vector<1x5xf32>
    %454 = arith.index_cast %arg0 : i32 to index
    %c0_235 = arith.constant 0 : index
    %455 = memref.load %arg2[%454, %c0_235] : memref<2x8xi32, #tpu.memory_space<smem>>
    %456 = vector.extract_strided_slice %444 {offsets = [0, 0], sizes = [1, 5], strides = [1, 1]} : vector<8x5xf32> to vector<1x5xf32>
    %457 = vector.broadcast %455 : i32 to vector<1x5xi32>
    %458 = arith.cmpi eq, %445, %457 : vector<1x5xi32>
    %459 = arith.extui %458 : vector<1x5xi1> to vector<1x5xi32>
    %460 = arith.sitofp %459 : vector<1x5xi32> to vector<1x5xf32>
    %461 = arith.addf %452, %456 : vector<1x5xf32>
    %462 = arith.mulf %461, %460 : vector<1x5xf32>
    %463 = vector.shape_cast %462 : vector<1x5xf32> to vector<1x1x5xf32>
    %cst_236 = arith.constant dense<0.000000e+00> : vector<1xf32>
    %464 = vector.multi_reduction <add>, %463, %cst_236 [1, 2] : vector<1x1x5xf32> to vector<1xf32>
    %465 = vector.shape_cast %464 : vector<1xf32> to vector<1x1x1xf32>
    %466 = vector.extract %465[0, 0, 0] : f32 from vector<1x1x1xf32>
    %467 = arith.addf %452, %456 : vector<1x5xf32>
    %468 = arith.index_cast %arg0 : i32 to index
    %c1_237 = arith.constant 1 : index
    %469 = memref.load %arg3[%468, %c1_237] : memref<2x8xi32, #tpu.memory_space<smem>>
    %470 = arith.sitofp %469 : i32 to f32
    %471 = arith.index_cast %arg0 : i32 to index
    %c1_238 = arith.constant 1 : index
    %472 = memref.load %arg2[%471, %c1_238] : memref<2x8xi32, #tpu.memory_space<smem>>
    %473 = arith.index_cast %arg0 : i32 to index
    %c0_239 = arith.constant 0 : index
    %474 = memref.load %arg2[%473, %c0_239] : memref<2x8xi32, #tpu.memory_space<smem>>
    %475 = vector.extract_strided_slice %444 {offsets = [1, 0], sizes = [1, 5], strides = [1, 1]} : vector<8x5xf32> to vector<1x5xf32>
    %476 = vector.broadcast %472 : i32 to vector<1x5xi32>
    %477 = arith.cmpi eq, %445, %476 : vector<1x5xi32>
    %478 = arith.extui %477 : vector<1x5xi1> to vector<1x5xi32>
    %479 = arith.sitofp %478 : vector<1x5xi32> to vector<1x5xf32>
    %480 = arith.index_cast %474 : i32 to index
    %c0_240 = arith.constant 0 : index
    %481 = vector.load %arg23[%480, %c0_240] : memref<5x5xf32, #tpu.memory_space<vmem>>, vector<1x5xf32>
    %482 = arith.mulf %481, %479 : vector<1x5xf32>
    %483 = vector.shape_cast %482 : vector<1x5xf32> to vector<1x1x5xf32>
    %cst_241 = arith.constant dense<0.000000e+00> : vector<1xf32>
    %484 = vector.multi_reduction <add>, %483, %cst_241 [1, 2] : vector<1x1x5xf32> to vector<1xf32>
    %485 = vector.shape_cast %484 : vector<1xf32> to vector<1x1x1xf32>
    %486 = vector.extract %485[0, 0, 0] : f32 from vector<1x1x1xf32>
    %487 = arith.mulf %475, %479 : vector<1x5xf32>
    %488 = vector.shape_cast %487 : vector<1x5xf32> to vector<1x1x5xf32>
    %cst_242 = arith.constant dense<0.000000e+00> : vector<1xf32>
    %489 = vector.multi_reduction <add>, %488, %cst_242 [1, 2] : vector<1x1x5xf32> to vector<1xf32>
    %490 = vector.shape_cast %489 : vector<1xf32> to vector<1x1x1xf32>
    %491 = vector.extract %490[0, 0, 0] : f32 from vector<1x1x1xf32>
    %492 = arith.addf %486, %491 : f32
    %493 = arith.mulf %492, %470 : f32
    %494 = arith.addf %466, %493 : f32
    %495 = vector.broadcast %467 : vector<1x5xf32> to vector<5x5xf32>
    %496 = arith.addf %451, %495 : vector<5x5xf32>
    %cst_243 = arith.constant dense<0xFF800000> : vector<5xf32>
    %497 = vector.multi_reduction <maximumf>, %496, %cst_243 [1] : vector<5x5xf32> to vector<5xf32>
    %498 = vector.shape_cast %497 : vector<5xf32> to vector<5x1xf32>
    %499 = vector.broadcast %498 : vector<5x1xf32> to vector<5x5xf32>
    %500 = arith.subf %496, %499 : vector<5x5xf32>
    %501 = math.exp %500 : vector<5x5xf32>
    %cst_244 = arith.constant dense<0.000000e+00> : vector<5xf32>
    %502 = vector.multi_reduction <add>, %501, %cst_244 [1] : vector<5x5xf32> to vector<5xf32>
    %503 = vector.shape_cast %502 : vector<5xf32> to vector<5x1xf32>
    %504 = math.log %503 : vector<5x1xf32>
    %505 = arith.addf %498, %504 : vector<5x1xf32>
    %506 = vector.broadcast %505 : vector<5x1xf32> to vector<5x5xf32>
    %507 = arith.mulf %506, %450 : vector<5x5xf32>
    %cst_245 = arith.constant dense<0.000000e+00> : vector<5xf32>
    %508 = vector.multi_reduction <add>, %507, %cst_245 [0] : vector<5x5xf32> to vector<5xf32>
    %509 = vector.shape_cast %508 : vector<5xf32> to vector<1x5xf32>
    %510 = arith.addf %509, %475 : vector<1x5xf32>
    %c0_i32 = arith.constant 0 : i32
    %511 = arith.cmpi sgt, %469, %c0_i32 : i32
    %512 = arith.select %511, %510, %467 : vector<1x5xf32>
    %c0_i32_246 = arith.constant 0 : i32
    %513 = arith.cmpi sgt, %469, %c0_i32_246 : i32
    %514 = arith.select %513, %472, %455 : i32
    %515 = arith.index_cast %arg0 : i32 to index
    %c2_247 = arith.constant 2 : index
    %516 = memref.load %arg3[%515, %c2_247] : memref<2x8xi32, #tpu.memory_space<smem>>
    %517 = arith.sitofp %516 : i32 to f32
    %518 = arith.index_cast %arg0 : i32 to index
    %c2_248 = arith.constant 2 : index
    %519 = memref.load %arg2[%518, %c2_248] : memref<2x8xi32, #tpu.memory_space<smem>>
    %520 = arith.index_cast %arg0 : i32 to index
    %c1_249 = arith.constant 1 : index
    %521 = memref.load %arg2[%520, %c1_249] : memref<2x8xi32, #tpu.memory_space<smem>>
    %522 = vector.extract_strided_slice %444 {offsets = [2, 0], sizes = [1, 5], strides = [1, 1]} : vector<8x5xf32> to vector<1x5xf32>
    %523 = vector.broadcast %519 : i32 to vector<1x5xi32>
    %524 = arith.cmpi eq, %445, %523 : vector<1x5xi32>
    %525 = arith.extui %524 : vector<1x5xi1> to vector<1x5xi32>
    %526 = arith.sitofp %525 : vector<1x5xi32> to vector<1x5xf32>
    %527 = arith.index_cast %521 : i32 to index
    %c0_250 = arith.constant 0 : index
    %528 = vector.load %arg23[%527, %c0_250] : memref<5x5xf32, #tpu.memory_space<vmem>>, vector<1x5xf32>
    %529 = arith.mulf %528, %526 : vector<1x5xf32>
    %530 = vector.shape_cast %529 : vector<1x5xf32> to vector<1x1x5xf32>
    %cst_251 = arith.constant dense<0.000000e+00> : vector<1xf32>
    %531 = vector.multi_reduction <add>, %530, %cst_251 [1, 2] : vector<1x1x5xf32> to vector<1xf32>
    %532 = vector.shape_cast %531 : vector<1xf32> to vector<1x1x1xf32>
    %533 = vector.extract %532[0, 0, 0] : f32 from vector<1x1x1xf32>
    %534 = arith.mulf %522, %526 : vector<1x5xf32>
    %535 = vector.shape_cast %534 : vector<1x5xf32> to vector<1x1x5xf32>
    %cst_252 = arith.constant dense<0.000000e+00> : vector<1xf32>
    %536 = vector.multi_reduction <add>, %535, %cst_252 [1, 2] : vector<1x1x5xf32> to vector<1xf32>
    %537 = vector.shape_cast %536 : vector<1xf32> to vector<1x1x1xf32>
    %538 = vector.extract %537[0, 0, 0] : f32 from vector<1x1x1xf32>
    %539 = arith.addf %533, %538 : f32
    %540 = arith.mulf %539, %517 : f32
    %541 = arith.addf %494, %540 : f32
    %542 = vector.broadcast %512 : vector<1x5xf32> to vector<5x5xf32>
    %543 = arith.addf %451, %542 : vector<5x5xf32>
    %cst_253 = arith.constant dense<0xFF800000> : vector<5xf32>
    %544 = vector.multi_reduction <maximumf>, %543, %cst_253 [1] : vector<5x5xf32> to vector<5xf32>
    %545 = vector.shape_cast %544 : vector<5xf32> to vector<5x1xf32>
    %546 = vector.broadcast %545 : vector<5x1xf32> to vector<5x5xf32>
    %547 = arith.subf %543, %546 : vector<5x5xf32>
    %548 = math.exp %547 : vector<5x5xf32>
    %cst_254 = arith.constant dense<0.000000e+00> : vector<5xf32>
    %549 = vector.multi_reduction <add>, %548, %cst_254 [1] : vector<5x5xf32> to vector<5xf32>
    %550 = vector.shape_cast %549 : vector<5xf32> to vector<5x1xf32>
    %551 = math.log %550 : vector<5x1xf32>
    %552 = arith.addf %545, %551 : vector<5x1xf32>
    %553 = vector.broadcast %552 : vector<5x1xf32> to vector<5x5xf32>
    %554 = arith.mulf %553, %450 : vector<5x5xf32>
    %cst_255 = arith.constant dense<0.000000e+00> : vector<5xf32>
    %555 = vector.multi_reduction <add>, %554, %cst_255 [0] : vector<5x5xf32> to vector<5xf32>
    %556 = vector.shape_cast %555 : vector<5xf32> to vector<1x5xf32>
    %557 = arith.addf %556, %522 : vector<1x5xf32>
    %c0_i32_256 = arith.constant 0 : i32
    %558 = arith.cmpi sgt, %516, %c0_i32_256 : i32
    %559 = arith.select %558, %557, %512 : vector<1x5xf32>
    %c0_i32_257 = arith.constant 0 : i32
    %560 = arith.cmpi sgt, %516, %c0_i32_257 : i32
    %561 = arith.select %560, %519, %514 : i32
    %562 = arith.index_cast %arg0 : i32 to index
    %c3_258 = arith.constant 3 : index
    %563 = memref.load %arg3[%562, %c3_258] : memref<2x8xi32, #tpu.memory_space<smem>>
    %564 = arith.sitofp %563 : i32 to f32
    %565 = arith.index_cast %arg0 : i32 to index
    %c3_259 = arith.constant 3 : index
    %566 = memref.load %arg2[%565, %c3_259] : memref<2x8xi32, #tpu.memory_space<smem>>
    %567 = arith.index_cast %arg0 : i32 to index
    %c2_260 = arith.constant 2 : index
    %568 = memref.load %arg2[%567, %c2_260] : memref<2x8xi32, #tpu.memory_space<smem>>
    %569 = vector.extract_strided_slice %444 {offsets = [3, 0], sizes = [1, 5], strides = [1, 1]} : vector<8x5xf32> to vector<1x5xf32>
    %570 = vector.broadcast %566 : i32 to vector<1x5xi32>
    %571 = arith.cmpi eq, %445, %570 : vector<1x5xi32>
    %572 = arith.extui %571 : vector<1x5xi1> to vector<1x5xi32>
    %573 = arith.sitofp %572 : vector<1x5xi32> to vector<1x5xf32>
    %574 = arith.index_cast %568 : i32 to index
    %c0_261 = arith.constant 0 : index
    %575 = vector.load %arg23[%574, %c0_261] : memref<5x5xf32, #tpu.memory_space<vmem>>, vector<1x5xf32>
    %576 = arith.mulf %575, %573 : vector<1x5xf32>
    %577 = vector.shape_cast %576 : vector<1x5xf32> to vector<1x1x5xf32>
    %cst_262 = arith.constant dense<0.000000e+00> : vector<1xf32>
    %578 = vector.multi_reduction <add>, %577, %cst_262 [1, 2] : vector<1x1x5xf32> to vector<1xf32>
    %579 = vector.shape_cast %578 : vector<1xf32> to vector<1x1x1xf32>
    %580 = vector.extract %579[0, 0, 0] : f32 from vector<1x1x1xf32>
    %581 = arith.mulf %569, %573 : vector<1x5xf32>
    %582 = vector.shape_cast %581 : vector<1x5xf32> to vector<1x1x5xf32>
    %cst_263 = arith.constant dense<0.000000e+00> : vector<1xf32>
    %583 = vector.multi_reduction <add>, %582, %cst_263 [1, 2] : vector<1x1x5xf32> to vector<1xf32>
    %584 = vector.shape_cast %583 : vector<1xf32> to vector<1x1x1xf32>
    %585 = vector.extract %584[0, 0, 0] : f32 from vector<1x1x1xf32>
    %586 = arith.addf %580, %585 : f32
    %587 = arith.mulf %586, %564 : f32
    %588 = arith.addf %541, %587 : f32
    %589 = vector.broadcast %559 : vector<1x5xf32> to vector<5x5xf32>
    %590 = arith.addf %451, %589 : vector<5x5xf32>
    %cst_264 = arith.constant dense<0xFF800000> : vector<5xf32>
    %591 = vector.multi_reduction <maximumf>, %590, %cst_264 [1] : vector<5x5xf32> to vector<5xf32>
    %592 = vector.shape_cast %591 : vector<5xf32> to vector<5x1xf32>
    %593 = vector.broadcast %592 : vector<5x1xf32> to vector<5x5xf32>
    %594 = arith.subf %590, %593 : vector<5x5xf32>
    %595 = math.exp %594 : vector<5x5xf32>
    %cst_265 = arith.constant dense<0.000000e+00> : vector<5xf32>
    %596 = vector.multi_reduction <add>, %595, %cst_265 [1] : vector<5x5xf32> to vector<5xf32>
    %597 = vector.shape_cast %596 : vector<5xf32> to vector<5x1xf32>
    %598 = math.log %597 : vector<5x1xf32>
    %599 = arith.addf %592, %598 : vector<5x1xf32>
    %600 = vector.broadcast %599 : vector<5x1xf32> to vector<5x5xf32>
    %601 = arith.mulf %600, %450 : vector<5x5xf32>
    %cst_266 = arith.constant dense<0.000000e+00> : vector<5xf32>
    %602 = vector.multi_reduction <add>, %601, %cst_266 [0] : vector<5x5xf32> to vector<5xf32>
    %603 = vector.shape_cast %602 : vector<5xf32> to vector<1x5xf32>
    %604 = arith.addf %603, %569 : vector<1x5xf32>
    %c0_i32_267 = arith.constant 0 : i32
    %605 = arith.cmpi sgt, %563, %c0_i32_267 : i32
    %606 = arith.select %605, %604, %559 : vector<1x5xf32>
    %c0_i32_268 = arith.constant 0 : i32
    %607 = arith.cmpi sgt, %563, %c0_i32_268 : i32
    %608 = arith.select %607, %566, %561 : i32
    %609 = arith.index_cast %arg0 : i32 to index
    %c4_269 = arith.constant 4 : index
    %610 = memref.load %arg3[%609, %c4_269] : memref<2x8xi32, #tpu.memory_space<smem>>
    %611 = arith.sitofp %610 : i32 to f32
    %612 = arith.index_cast %arg0 : i32 to index
    %c4_270 = arith.constant 4 : index
    %613 = memref.load %arg2[%612, %c4_270] : memref<2x8xi32, #tpu.memory_space<smem>>
    %614 = arith.index_cast %arg0 : i32 to index
    %c3_271 = arith.constant 3 : index
    %615 = memref.load %arg2[%614, %c3_271] : memref<2x8xi32, #tpu.memory_space<smem>>
    %616 = vector.extract_strided_slice %444 {offsets = [4, 0], sizes = [1, 5], strides = [1, 1]} : vector<8x5xf32> to vector<1x5xf32>
    %617 = vector.broadcast %613 : i32 to vector<1x5xi32>
    %618 = arith.cmpi eq, %445, %617 : vector<1x5xi32>
    %619 = arith.extui %618 : vector<1x5xi1> to vector<1x5xi32>
    %620 = arith.sitofp %619 : vector<1x5xi32> to vector<1x5xf32>
    %621 = arith.index_cast %615 : i32 to index
    %c0_272 = arith.constant 0 : index
    %622 = vector.load %arg23[%621, %c0_272] : memref<5x5xf32, #tpu.memory_space<vmem>>, vector<1x5xf32>
    %623 = arith.mulf %622, %620 : vector<1x5xf32>
    %624 = vector.shape_cast %623 : vector<1x5xf32> to vector<1x1x5xf32>
    %cst_273 = arith.constant dense<0.000000e+00> : vector<1xf32>
    %625 = vector.multi_reduction <add>, %624, %cst_273 [1, 2] : vector<1x1x5xf32> to vector<1xf32>
    %626 = vector.shape_cast %625 : vector<1xf32> to vector<1x1x1xf32>
    %627 = vector.extract %626[0, 0, 0] : f32 from vector<1x1x1xf32>
    %628 = arith.mulf %616, %620 : vector<1x5xf32>
    %629 = vector.shape_cast %628 : vector<1x5xf32> to vector<1x1x5xf32>
    %cst_274 = arith.constant dense<0.000000e+00> : vector<1xf32>
    %630 = vector.multi_reduction <add>, %629, %cst_274 [1, 2] : vector<1x1x5xf32> to vector<1xf32>
    %631 = vector.shape_cast %630 : vector<1xf32> to vector<1x1x1xf32>
    %632 = vector.extract %631[0, 0, 0] : f32 from vector<1x1x1xf32>
    %633 = arith.addf %627, %632 : f32
    %634 = arith.mulf %633, %611 : f32
    %635 = arith.addf %588, %634 : f32
    %636 = vector.broadcast %606 : vector<1x5xf32> to vector<5x5xf32>
    %637 = arith.addf %451, %636 : vector<5x5xf32>
    %cst_275 = arith.constant dense<0xFF800000> : vector<5xf32>
    %638 = vector.multi_reduction <maximumf>, %637, %cst_275 [1] : vector<5x5xf32> to vector<5xf32>
    %639 = vector.shape_cast %638 : vector<5xf32> to vector<5x1xf32>
    %640 = vector.broadcast %639 : vector<5x1xf32> to vector<5x5xf32>
    %641 = arith.subf %637, %640 : vector<5x5xf32>
    %642 = math.exp %641 : vector<5x5xf32>
    %cst_276 = arith.constant dense<0.000000e+00> : vector<5xf32>
    %643 = vector.multi_reduction <add>, %642, %cst_276 [1] : vector<5x5xf32> to vector<5xf32>
    %644 = vector.shape_cast %643 : vector<5xf32> to vector<5x1xf32>
    %645 = math.log %644 : vector<5x1xf32>
    %646 = arith.addf %639, %645 : vector<5x1xf32>
    %647 = vector.broadcast %646 : vector<5x1xf32> to vector<5x5xf32>
    %648 = arith.mulf %647, %450 : vector<5x5xf32>
    %cst_277 = arith.constant dense<0.000000e+00> : vector<5xf32>
    %649 = vector.multi_reduction <add>, %648, %cst_277 [0] : vector<5x5xf32> to vector<5xf32>
    %650 = vector.shape_cast %649 : vector<5xf32> to vector<1x5xf32>
    %651 = arith.addf %650, %616 : vector<1x5xf32>
    %c0_i32_278 = arith.constant 0 : i32
    %652 = arith.cmpi sgt, %610, %c0_i32_278 : i32
    %653 = arith.select %652, %651, %606 : vector<1x5xf32>
    %c0_i32_279 = arith.constant 0 : i32
    %654 = arith.cmpi sgt, %610, %c0_i32_279 : i32
    %655 = arith.select %654, %613, %608 : i32
    %656 = arith.index_cast %arg0 : i32 to index
    %c5_280 = arith.constant 5 : index
    %657 = memref.load %arg3[%656, %c5_280] : memref<2x8xi32, #tpu.memory_space<smem>>
    %658 = arith.sitofp %657 : i32 to f32
    %659 = arith.index_cast %arg0 : i32 to index
    %c5_281 = arith.constant 5 : index
    %660 = memref.load %arg2[%659, %c5_281] : memref<2x8xi32, #tpu.memory_space<smem>>
    %661 = arith.index_cast %arg0 : i32 to index
    %c4_282 = arith.constant 4 : index
    %662 = memref.load %arg2[%661, %c4_282] : memref<2x8xi32, #tpu.memory_space<smem>>
    %663 = vector.extract_strided_slice %444 {offsets = [5, 0], sizes = [1, 5], strides = [1, 1]} : vector<8x5xf32> to vector<1x5xf32>
    %664 = vector.broadcast %660 : i32 to vector<1x5xi32>
    %665 = arith.cmpi eq, %445, %664 : vector<1x5xi32>
    %666 = arith.extui %665 : vector<1x5xi1> to vector<1x5xi32>
    %667 = arith.sitofp %666 : vector<1x5xi32> to vector<1x5xf32>
    %668 = arith.index_cast %662 : i32 to index
    %c0_283 = arith.constant 0 : index
    %669 = vector.load %arg23[%668, %c0_283] : memref<5x5xf32, #tpu.memory_space<vmem>>, vector<1x5xf32>
    %670 = arith.mulf %669, %667 : vector<1x5xf32>
    %671 = vector.shape_cast %670 : vector<1x5xf32> to vector<1x1x5xf32>
    %cst_284 = arith.constant dense<0.000000e+00> : vector<1xf32>
    %672 = vector.multi_reduction <add>, %671, %cst_284 [1, 2] : vector<1x1x5xf32> to vector<1xf32>
    %673 = vector.shape_cast %672 : vector<1xf32> to vector<1x1x1xf32>
    %674 = vector.extract %673[0, 0, 0] : f32 from vector<1x1x1xf32>
    %675 = arith.mulf %663, %667 : vector<1x5xf32>
    %676 = vector.shape_cast %675 : vector<1x5xf32> to vector<1x1x5xf32>
    %cst_285 = arith.constant dense<0.000000e+00> : vector<1xf32>
    %677 = vector.multi_reduction <add>, %676, %cst_285 [1, 2] : vector<1x1x5xf32> to vector<1xf32>
    %678 = vector.shape_cast %677 : vector<1xf32> to vector<1x1x1xf32>
    %679 = vector.extract %678[0, 0, 0] : f32 from vector<1x1x1xf32>
    %680 = arith.addf %674, %679 : f32
    %681 = arith.mulf %680, %658 : f32
    %682 = arith.addf %635, %681 : f32
    %683 = vector.broadcast %653 : vector<1x5xf32> to vector<5x5xf32>
    %684 = arith.addf %451, %683 : vector<5x5xf32>
    %cst_286 = arith.constant dense<0xFF800000> : vector<5xf32>
    %685 = vector.multi_reduction <maximumf>, %684, %cst_286 [1] : vector<5x5xf32> to vector<5xf32>
    %686 = vector.shape_cast %685 : vector<5xf32> to vector<5x1xf32>
    %687 = vector.broadcast %686 : vector<5x1xf32> to vector<5x5xf32>
    %688 = arith.subf %684, %687 : vector<5x5xf32>
    %689 = math.exp %688 : vector<5x5xf32>
    %cst_287 = arith.constant dense<0.000000e+00> : vector<5xf32>
    %690 = vector.multi_reduction <add>, %689, %cst_287 [1] : vector<5x5xf32> to vector<5xf32>
    %691 = vector.shape_cast %690 : vector<5xf32> to vector<5x1xf32>
    %692 = math.log %691 : vector<5x1xf32>
    %693 = arith.addf %686, %692 : vector<5x1xf32>
    %694 = vector.broadcast %693 : vector<5x1xf32> to vector<5x5xf32>
    %695 = arith.mulf %694, %450 : vector<5x5xf32>
    %cst_288 = arith.constant dense<0.000000e+00> : vector<5xf32>
    %696 = vector.multi_reduction <add>, %695, %cst_288 [0] : vector<5x5xf32> to vector<5xf32>
    %697 = vector.shape_cast %696 : vector<5xf32> to vector<1x5xf32>
    %698 = arith.addf %697, %663 : vector<1x5xf32>
    %c0_i32_289 = arith.constant 0 : i32
    %699 = arith.cmpi sgt, %657, %c0_i32_289 : i32
    %700 = arith.select %699, %698, %653 : vector<1x5xf32>
    %c0_i32_290 = arith.constant 0 : i32
    %701 = arith.cmpi sgt, %657, %c0_i32_290 : i32
    %702 = arith.select %701, %660, %655 : i32
    %703 = arith.index_cast %arg0 : i32 to index
    %c6_291 = arith.constant 6 : index
    %704 = memref.load %arg3[%703, %c6_291] : memref<2x8xi32, #tpu.memory_space<smem>>
    %705 = arith.sitofp %704 : i32 to f32
    %706 = arith.index_cast %arg0 : i32 to index
    %c6_292 = arith.constant 6 : index
    %707 = memref.load %arg2[%706, %c6_292] : memref<2x8xi32, #tpu.memory_space<smem>>
    %708 = arith.index_cast %arg0 : i32 to index
    %c5_293 = arith.constant 5 : index
    %709 = memref.load %arg2[%708, %c5_293] : memref<2x8xi32, #tpu.memory_space<smem>>
    %710 = vector.extract_strided_slice %444 {offsets = [6, 0], sizes = [1, 5], strides = [1, 1]} : vector<8x5xf32> to vector<1x5xf32>
    %711 = vector.broadcast %707 : i32 to vector<1x5xi32>
    %712 = arith.cmpi eq, %445, %711 : vector<1x5xi32>
    %713 = arith.extui %712 : vector<1x5xi1> to vector<1x5xi32>
    %714 = arith.sitofp %713 : vector<1x5xi32> to vector<1x5xf32>
    %715 = arith.index_cast %709 : i32 to index
    %c0_294 = arith.constant 0 : index
    %716 = vector.load %arg23[%715, %c0_294] : memref<5x5xf32, #tpu.memory_space<vmem>>, vector<1x5xf32>
    %717 = arith.mulf %716, %714 : vector<1x5xf32>
    %718 = vector.shape_cast %717 : vector<1x5xf32> to vector<1x1x5xf32>
    %cst_295 = arith.constant dense<0.000000e+00> : vector<1xf32>
    %719 = vector.multi_reduction <add>, %718, %cst_295 [1, 2] : vector<1x1x5xf32> to vector<1xf32>
    %720 = vector.shape_cast %719 : vector<1xf32> to vector<1x1x1xf32>
    %721 = vector.extract %720[0, 0, 0] : f32 from vector<1x1x1xf32>
    %722 = arith.mulf %710, %714 : vector<1x5xf32>
    %723 = vector.shape_cast %722 : vector<1x5xf32> to vector<1x1x5xf32>
    %cst_296 = arith.constant dense<0.000000e+00> : vector<1xf32>
    %724 = vector.multi_reduction <add>, %723, %cst_296 [1, 2] : vector<1x1x5xf32> to vector<1xf32>
    %725 = vector.shape_cast %724 : vector<1xf32> to vector<1x1x1xf32>
    %726 = vector.extract %725[0, 0, 0] : f32 from vector<1x1x1xf32>
    %727 = arith.addf %721, %726 : f32
    %728 = arith.mulf %727, %705 : f32
    %729 = arith.addf %682, %728 : f32
    %730 = vector.broadcast %700 : vector<1x5xf32> to vector<5x5xf32>
    %731 = arith.addf %451, %730 : vector<5x5xf32>
    %cst_297 = arith.constant dense<0xFF800000> : vector<5xf32>
    %732 = vector.multi_reduction <maximumf>, %731, %cst_297 [1] : vector<5x5xf32> to vector<5xf32>
    %733 = vector.shape_cast %732 : vector<5xf32> to vector<5x1xf32>
    %734 = vector.broadcast %733 : vector<5x1xf32> to vector<5x5xf32>
    %735 = arith.subf %731, %734 : vector<5x5xf32>
    %736 = math.exp %735 : vector<5x5xf32>
    %cst_298 = arith.constant dense<0.000000e+00> : vector<5xf32>
    %737 = vector.multi_reduction <add>, %736, %cst_298 [1] : vector<5x5xf32> to vector<5xf32>
    %738 = vector.shape_cast %737 : vector<5xf32> to vector<5x1xf32>
    %739 = math.log %738 : vector<5x1xf32>
    %740 = arith.addf %733, %739 : vector<5x1xf32>
    %741 = vector.broadcast %740 : vector<5x1xf32> to vector<5x5xf32>
    %742 = arith.mulf %741, %450 : vector<5x5xf32>
    %cst_299 = arith.constant dense<0.000000e+00> : vector<5xf32>
    %743 = vector.multi_reduction <add>, %742, %cst_299 [0] : vector<5x5xf32> to vector<5xf32>
    %744 = vector.shape_cast %743 : vector<5xf32> to vector<1x5xf32>
    %745 = arith.addf %744, %710 : vector<1x5xf32>
    %c0_i32_300 = arith.constant 0 : i32
    %746 = arith.cmpi sgt, %704, %c0_i32_300 : i32
    %747 = arith.select %746, %745, %700 : vector<1x5xf32>
    %c0_i32_301 = arith.constant 0 : i32
    %748 = arith.cmpi sgt, %704, %c0_i32_301 : i32
    %749 = arith.select %748, %707, %702 : i32
    %750 = arith.index_cast %arg0 : i32 to index
    %c7_302 = arith.constant 7 : index
    %751 = memref.load %arg3[%750, %c7_302] : memref<2x8xi32, #tpu.memory_space<smem>>
    %752 = arith.sitofp %751 : i32 to f32
    %753 = arith.index_cast %arg0 : i32 to index
    %c7_303 = arith.constant 7 : index
    %754 = memref.load %arg2[%753, %c7_303] : memref<2x8xi32, #tpu.memory_space<smem>>
    %755 = arith.index_cast %arg0 : i32 to index
    %c6_304 = arith.constant 6 : index
    %756 = memref.load %arg2[%755, %c6_304] : memref<2x8xi32, #tpu.memory_space<smem>>
    %757 = vector.extract_strided_slice %444 {offsets = [7, 0], sizes = [1, 5], strides = [1, 1]} : vector<8x5xf32> to vector<1x5xf32>
    %758 = vector.broadcast %754 : i32 to vector<1x5xi32>
    %759 = arith.cmpi eq, %445, %758 : vector<1x5xi32>
    %760 = arith.extui %759 : vector<1x5xi1> to vector<1x5xi32>
    %761 = arith.sitofp %760 : vector<1x5xi32> to vector<1x5xf32>
    %762 = arith.index_cast %756 : i32 to index
    %c0_305 = arith.constant 0 : index
    %763 = vector.load %arg23[%762, %c0_305] : memref<5x5xf32, #tpu.memory_space<vmem>>, vector<1x5xf32>
    %764 = arith.mulf %763, %761 : vector<1x5xf32>
    %765 = vector.shape_cast %764 : vector<1x5xf32> to vector<1x1x5xf32>
    %cst_306 = arith.constant dense<0.000000e+00> : vector<1xf32>
    %766 = vector.multi_reduction <add>, %765, %cst_306 [1, 2] : vector<1x1x5xf32> to vector<1xf32>
    %767 = vector.shape_cast %766 : vector<1xf32> to vector<1x1x1xf32>
    %768 = vector.extract %767[0, 0, 0] : f32 from vector<1x1x1xf32>
    %769 = arith.mulf %757, %761 : vector<1x5xf32>
    %770 = vector.shape_cast %769 : vector<1x5xf32> to vector<1x1x5xf32>
    %cst_307 = arith.constant dense<0.000000e+00> : vector<1xf32>
    %771 = vector.multi_reduction <add>, %770, %cst_307 [1, 2] : vector<1x1x5xf32> to vector<1xf32>
    %772 = vector.shape_cast %771 : vector<1xf32> to vector<1x1x1xf32>
    %773 = vector.extract %772[0, 0, 0] : f32 from vector<1x1x1xf32>
    %774 = arith.addf %768, %773 : f32
    %775 = arith.mulf %774, %752 : f32
    %776 = arith.addf %729, %775 : f32
    %777 = vector.broadcast %747 : vector<1x5xf32> to vector<5x5xf32>
    %778 = arith.addf %451, %777 : vector<5x5xf32>
    %cst_308 = arith.constant dense<0xFF800000> : vector<5xf32>
    %779 = vector.multi_reduction <maximumf>, %778, %cst_308 [1] : vector<5x5xf32> to vector<5xf32>
    %780 = vector.shape_cast %779 : vector<5xf32> to vector<5x1xf32>
    %781 = vector.broadcast %780 : vector<5x1xf32> to vector<5x5xf32>
    %782 = arith.subf %778, %781 : vector<5x5xf32>
    %783 = math.exp %782 : vector<5x5xf32>
    %cst_309 = arith.constant dense<0.000000e+00> : vector<5xf32>
    %784 = vector.multi_reduction <add>, %783, %cst_309 [1] : vector<5x5xf32> to vector<5xf32>
    %785 = vector.shape_cast %784 : vector<5xf32> to vector<5x1xf32>
    %786 = math.log %785 : vector<5x1xf32>
    %787 = arith.addf %780, %786 : vector<5x1xf32>
    %788 = vector.broadcast %787 : vector<5x1xf32> to vector<5x5xf32>
    %789 = arith.mulf %788, %450 : vector<5x5xf32>
    %cst_310 = arith.constant dense<0.000000e+00> : vector<5xf32>
    %790 = vector.multi_reduction <add>, %789, %cst_310 [0] : vector<5x5xf32> to vector<5xf32>
    %791 = vector.shape_cast %790 : vector<5xf32> to vector<1x5xf32>
    %792 = arith.addf %791, %757 : vector<1x5xf32>
    %c0_i32_311 = arith.constant 0 : i32
    %793 = arith.cmpi sgt, %751, %c0_i32_311 : i32
    %794 = arith.select %793, %792, %747 : vector<1x5xf32>
    %c0_i32_312 = arith.constant 0 : i32
    %795 = arith.cmpi sgt, %751, %c0_i32_312 : i32
    %796 = arith.select %795, %754, %749 : i32
    %797 = vector.broadcast %796 : i32 to vector<1x5xi32>
    %798 = arith.cmpi eq, %445, %797 : vector<1x5xi32>
    %799 = arith.extui %798 : vector<1x5xi1> to vector<1x5xi32>
    %800 = arith.sitofp %799 : vector<1x5xi32> to vector<1x5xf32>
    %801 = arith.mulf %453, %800 : vector<1x5xf32>
    %802 = vector.shape_cast %801 : vector<1x5xf32> to vector<1x1x5xf32>
    %cst_313 = arith.constant dense<0.000000e+00> : vector<1xf32>
    %803 = vector.multi_reduction <add>, %802, %cst_313 [1, 2] : vector<1x1x5xf32> to vector<1xf32>
    %804 = vector.shape_cast %803 : vector<1xf32> to vector<1x1x1xf32>
    %805 = vector.extract %804[0, 0, 0] : f32 from vector<1x1x1xf32>
    %806 = arith.addf %776, %805 : f32
    %807 = arith.addf %794, %453 : vector<1x5xf32>
    %808 = vector.shape_cast %807 : vector<1x5xf32> to vector<1x1x5xf32>
    %cst_314 = arith.constant dense<0xFF800000> : vector<1xf32>
    %809 = vector.multi_reduction <maximumf>, %808, %cst_314 [1, 2] : vector<1x1x5xf32> to vector<1xf32>
    %810 = vector.shape_cast %809 : vector<1xf32> to vector<1x1x1xf32>
    %811 = vector.extract %810[0, 0, 0] : f32 from vector<1x1x1xf32>
    %812 = vector.broadcast %811 : f32 to vector<1x5xf32>
    %813 = arith.subf %807, %812 : vector<1x5xf32>
    %814 = math.exp %813 : vector<1x5xf32>
    %815 = vector.shape_cast %814 : vector<1x5xf32> to vector<1x1x5xf32>
    %cst_315 = arith.constant dense<0.000000e+00> : vector<1xf32>
    %816 = vector.multi_reduction <add>, %815, %cst_315 [1, 2] : vector<1x1x5xf32> to vector<1xf32>
    %817 = vector.shape_cast %816 : vector<1xf32> to vector<1x1x1xf32>
    %818 = vector.extract %817[0, 0, 0] : f32 from vector<1x1x1xf32>
    %819 = math.log %818 : f32
    %820 = arith.addf %811, %819 : f32
    %821 = arith.subf %806, %820 : f32
    %822 = vector.broadcast %821 : f32 to vector<1x1xf32>
    %c0_316 = arith.constant 0 : index
    %c0_317 = arith.constant 0 : index
    %c0_318 = arith.constant 0 : index
    %823 = vector.load %arg27[%c0_316, %c0_317, %c0_318] : memref<1x1x1xf32, #tpu.memory_space<vmem>>, vector<1x1x1xf32>
    %824 = vector.shape_cast %823 : vector<1x1x1xf32> to vector<1x1xf32>
    %825 = vector.shape_cast %822 : vector<1x1xf32> to vector<1x1x1xf32>
    tpu.vector_store %arg27[%c0_316, %c0_317, %c0_318], %825 {strides = array<i32>} : memref<1x1x1xf32, #tpu.memory_space<vmem>>, vector<1x1x1xf32>,
    return
  }
  func.func @transform_0(%arg0: i32, %arg1: memref<2x8xi32, #tpu.memory_space<smem>>, %arg2: memref<2x8xi32, #tpu.memory_space<smem>>, %arg3: memref<2x8xi32, #tpu.memory_space<smem>>) -> (i32, i32) {
    %c0_i32 = arith.constant 0 : i32
    %c0_i32_0 = arith.constant 0 : i32
    %c0_i32_1 = arith.constant 0 : i32
    return %c0_i32, %c0_i32_0 : i32, i32
  }
  func.func @transform_1(%arg0: i32, %arg1: memref<2x8xi32, #tpu.memory_space<smem>>, %arg2: memref<2x8xi32, #tpu.memory_space<smem>>, %arg3: memref<2x8xi32, #tpu.memory_space<smem>>) -> (i32, i32) {
    %c0_i32 = arith.constant 0 : i32
    %c0_i32_0 = arith.constant 0 : i32
    %c0_i32_1 = arith.constant 0 : i32
    return %c0_i32, %c0_i32_0 : i32, i32
  }
  func.func @transform_2(%arg0: i32, %arg1: memref<2x8xi32, #tpu.memory_space<smem>>, %arg2: memref<2x8xi32, #tpu.memory_space<smem>>, %arg3: memref<2x8xi32, #tpu.memory_space<smem>>) -> (i32, i32) {
    %c0_i32 = arith.constant 0 : i32
    %c0_i32_0 = arith.constant 0 : i32
    %c0_i32_1 = arith.constant 0 : i32
    return %c0_i32, %c0_i32_0 : i32, i32
  }
  func.func @transform_3(%arg0: i32, %arg1: memref<2x8xi32, #tpu.memory_space<smem>>, %arg2: memref<2x8xi32, #tpu.memory_space<smem>>, %arg3: memref<2x8xi32, #tpu.memory_space<smem>>) -> (i32, i32) {
    %c0_i32 = arith.constant 0 : i32
    %c0_i32_0 = arith.constant 0 : i32
    %c0_i32_1 = arith.constant 0 : i32
    return %c0_i32, %c0_i32_0 : i32, i32
  }
  func.func @transform_4(%arg0: i32, %arg1: memref<2x8xi32, #tpu.memory_space<smem>>, %arg2: memref<2x8xi32, #tpu.memory_space<smem>>, %arg3: memref<2x8xi32, #tpu.memory_space<smem>>) -> (i32, i32) {
    %c0_i32 = arith.constant 0 : i32
    %c0_i32_0 = arith.constant 0 : i32
    %c0_i32_1 = arith.constant 0 : i32
    return %c0_i32, %c0_i32_0 : i32, i32
  }
  func.func @transform_5(%arg0: i32, %arg1: memref<2x8xi32, #tpu.memory_space<smem>>, %arg2: memref<2x8xi32, #tpu.memory_space<smem>>, %arg3: memref<2x8xi32, #tpu.memory_space<smem>>) -> (i32, i32, i32) {
    %c0_i32 = arith.constant 0 : i32
    %c0_i32_0 = arith.constant 0 : i32
    %c0_i32_1 = arith.constant 0 : i32
    %c0_i32_2 = arith.constant 0 : i32
    return %c0_i32, %c0_i32_0, %c0_i32_1 : i32, i32, i32
  }
  func.func @transform_6(%arg0: i32, %arg1: memref<2x8xi32, #tpu.memory_space<smem>>, %arg2: memref<2x8xi32, #tpu.memory_space<smem>>, %arg3: memref<2x8xi32, #tpu.memory_space<smem>>) -> (i32, i32, i32) {
    %c0_i32 = arith.constant 0 : i32
    %c0_i32_0 = arith.constant 0 : i32
    %c0_i32_1 = arith.constant 0 : i32
    %c0_i32_2 = arith.constant 0 : i32
    return %c0_i32, %c0_i32_0, %c0_i32_1 : i32, i32, i32
  }
  func.func @transform_7(%arg0: i32, %arg1: memref<2x8xi32, #tpu.memory_space<smem>>, %arg2: memref<2x8xi32, #tpu.memory_space<smem>>, %arg3: memref<2x8xi32, #tpu.memory_space<smem>>) -> (i32, i32, i32) {
    %c0_i32 = arith.constant 0 : i32
    %c0_i32_0 = arith.constant 0 : i32
    %c0_i32_1 = arith.constant 0 : i32
    %c0_i32_2 = arith.constant 0 : i32
    return %c0_i32, %c0_i32_0, %c0_i32_1 : i32, i32, i32
  }
  func.func @transform_8(%arg0: i32, %arg1: memref<2x8xi32, #tpu.memory_space<smem>>, %arg2: memref<2x8xi32, #tpu.memory_space<smem>>, %arg3: memref<2x8xi32, #tpu.memory_space<smem>>) -> (i32, i32, i32) {
    %c0_i32 = arith.constant 0 : i32
    %c0_i32_0 = arith.constant 0 : i32
    %c0_i32_1 = arith.constant 0 : i32
    %c0_i32_2 = arith.constant 0 : i32
    return %c0_i32, %c0_i32_0, %c0_i32_1 : i32, i32, i32
  }
  func.func @transform_9(%arg0: i32, %arg1: memref<2x8xi32, #tpu.memory_space<smem>>, %arg2: memref<2x8xi32, #tpu.memory_space<smem>>, %arg3: memref<2x8xi32, #tpu.memory_space<smem>>) -> (i32, i32, i32) {
    %c0_i32 = arith.constant 0 : i32
    %c0_i32_0 = arith.constant 0 : i32
    %c0_i32_1 = arith.constant 0 : i32
    %c0_i32_2 = arith.constant 0 : i32
    return %c0_i32, %c0_i32_0, %c0_i32_1 : i32, i32, i32
  }
  func.func @transform_10(%arg0: i32, %arg1: memref<2x8xi32, #tpu.memory_space<smem>>, %arg2: memref<2x8xi32, #tpu.memory_space<smem>>, %arg3: memref<2x8xi32, #tpu.memory_space<smem>>) -> (i32, i32, i32) {
    %c0_i32 = arith.constant 0 : i32
    %c0_i32_0 = arith.constant 0 : i32
    %c0_i32_1 = arith.constant 0 : i32
    %c0_i32_2 = arith.constant 0 : i32
    return %c0_i32, %c0_i32_0, %c0_i32_1 : i32, i32, i32
  }
  func.func @transform_11(%arg0: i32, %arg1: memref<2x8xi32, #tpu.memory_space<smem>>, %arg2: memref<2x8xi32, #tpu.memory_space<smem>>, %arg3: memref<2x8xi32, #tpu.memory_space<smem>>) -> (i32, i32, i32) {
    %c0_i32 = arith.constant 0 : i32
    %c0_i32_0 = arith.constant 0 : i32
    %c0_i32_1 = arith.constant 0 : i32
    %c0_i32_2 = arith.constant 0 : i32
    return %c0_i32, %c0_i32_0, %c0_i32_1 : i32, i32, i32
  }
  func.func @transform_12(%arg0: i32, %arg1: memref<2x8xi32, #tpu.memory_space<smem>>, %arg2: memref<2x8xi32, #tpu.memory_space<smem>>, %arg3: memref<2x8xi32, #tpu.memory_space<smem>>) -> (i32, i32, i32) {
    %c0_i32 = arith.constant 0 : i32
    %c0_i32_0 = arith.constant 0 : i32
    %c0_i32_1 = arith.constant 0 : i32
    %c0_i32_2 = arith.constant 0 : i32
    return %c0_i32, %c0_i32_0, %c0_i32_1 : i32, i32, i32
  }
  func.func @transform_13(%arg0: i32, %arg1: memref<2x8xi32, #tpu.memory_space<smem>>, %arg2: memref<2x8xi32, #tpu.memory_space<smem>>, %arg3: memref<2x8xi32, #tpu.memory_space<smem>>) -> (i32, i32, i32) {
    %c0_i32 = arith.constant 0 : i32
    %c0_i32_0 = arith.constant 0 : i32
    %c0_i32_1 = arith.constant 0 : i32
    %c0_i32_2 = arith.constant 0 : i32
    return %c0_i32, %c0_i32_0, %c0_i32_1 : i32, i32, i32
  }
  func.func @transform_14(%arg0: i32, %arg1: memref<2x8xi32, #tpu.memory_space<smem>>, %arg2: memref<2x8xi32, #tpu.memory_space<smem>>, %arg3: memref<2x8xi32, #tpu.memory_space<smem>>) -> (i32, i32, i32) {
    %c0_i32 = arith.constant 0 : i32
    %c0_i32_0 = arith.constant 0 : i32
    %c0_i32_1 = arith.constant 0 : i32
    %c0_i32_2 = arith.constant 0 : i32
    return %c0_i32, %c0_i32_0, %c0_i32_1 : i32, i32, i32
  }
  func.func @transform_15(%arg0: i32, %arg1: memref<2x8xi32, #tpu.memory_space<smem>>, %arg2: memref<2x8xi32, #tpu.memory_space<smem>>, %arg3: memref<2x8xi32, #tpu.memory_space<smem>>) -> (i32, i32, i32) {
    %c0_i32 = arith.constant 0 : i32
    %c0_i32_0 = arith.constant 0 : i32
    %c0_i32_1 = arith.constant 0 : i32
    %c0_i32_2 = arith.constant 0 : i32
    return %c0_i32, %c0_i32_0, %c0_i32_1 : i32, i32, i32
  }
  func.func @transform_16(%arg0: i32, %arg1: memref<2x8xi32, #tpu.memory_space<smem>>, %arg2: memref<2x8xi32, #tpu.memory_space<smem>>, %arg3: memref<2x8xi32, #tpu.memory_space<smem>>) -> (i32, i32, i32) {
    %c0_i32 = arith.constant 0 : i32
    %c0_i32_0 = arith.constant 0 : i32
    %c0_i32_1 = arith.constant 0 : i32
    %c0_i32_2 = arith.constant 0 : i32
    return %c0_i32, %c0_i32_0, %c0_i32_1 : i32, i32, i32
  }
  func.func @transform_17(%arg0: i32, %arg1: memref<2x8xi32, #tpu.memory_space<smem>>, %arg2: memref<2x8xi32, #tpu.memory_space<smem>>, %arg3: memref<2x8xi32, #tpu.memory_space<smem>>) -> (i32, i32) {
    %c0_i32 = arith.constant 0 : i32
    %c0_i32_0 = arith.constant 0 : i32
    %c0_i32_1 = arith.constant 0 : i32
    return %c0_i32, %c0_i32_0 : i32, i32
  }
  func.func @transform_18(%arg0: i32, %arg1: memref<2x8xi32, #tpu.memory_space<smem>>, %arg2: memref<2x8xi32, #tpu.memory_space<smem>>, %arg3: memref<2x8xi32, #tpu.memory_space<smem>>) -> (i32, i32) {
    %c0_i32 = arith.constant 0 : i32
    %c0_i32_0 = arith.constant 0 : i32
    %c0_i32_1 = arith.constant 0 : i32
    return %c0_i32, %c0_i32_0 : i32, i32
  }
  func.func @transform_19(%arg0: i32, %arg1: memref<2x8xi32, #tpu.memory_space<smem>>, %arg2: memref<2x8xi32, #tpu.memory_space<smem>>, %arg3: memref<2x8xi32, #tpu.memory_space<smem>>) -> (i32, i32) {
    %c0_i32 = arith.constant 0 : i32
    %c0_i32_0 = arith.constant 0 : i32
    %c0_i32_1 = arith.constant 0 : i32
    return %c0_i32, %c0_i32_0 : i32, i32
  }
  func.func @transform_20(%arg0: i32, %arg1: memref<2x8xi32, #tpu.memory_space<smem>>, %arg2: memref<2x8xi32, #tpu.memory_space<smem>>, %arg3: memref<2x8xi32, #tpu.memory_space<smem>>) -> (i32, i32) {
    %c0_i32 = arith.constant 0 : i32
    %c0_i32_0 = arith.constant 0 : i32
    %c0_i32_1 = arith.constant 0 : i32
    return %c0_i32, %c0_i32_0 : i32, i32
  }
  func.func @transform_21(%arg0: i32, %arg1: memref<2x8xi32, #tpu.memory_space<smem>>, %arg2: memref<2x8xi32, #tpu.memory_space<smem>>, %arg3: memref<2x8xi32, #tpu.memory_space<smem>>) -> (i32, i32) {
    %c0_i32 = arith.constant 0 : i32
    %c0_i32_0 = arith.constant 0 : i32
    %c0_i32_1 = arith.constant 0 : i32
    return %c0_i32, %c0_i32_0 : i32, i32
  }
  func.func @transform_22(%arg0: i32, %arg1: memref<2x8xi32, #tpu.memory_space<smem>>, %arg2: memref<2x8xi32, #tpu.memory_space<smem>>, %arg3: memref<2x8xi32, #tpu.memory_space<smem>>) -> (i32, i32) {
    %c0_i32 = arith.constant 0 : i32
    %c0_i32_0 = arith.constant 0 : i32
    %c0_i32_1 = arith.constant 0 : i32
    return %c0_i32, %c0_i32_0 : i32, i32
  }
  func.func @transform_23(%arg0: i32, %arg1: memref<2x8xi32, #tpu.memory_space<smem>>, %arg2: memref<2x8xi32, #tpu.memory_space<smem>>, %arg3: memref<2x8xi32, #tpu.memory_space<smem>>) -> (i32, i32, i32) {
    %c0_i32 = arith.constant 0 : i32
    %c0_i32_0 = arith.constant 0 : i32
    %c0_i32_1 = arith.constant 0 : i32
    return %arg0, %c0_i32, %c0_i32_0 : i32, i32, i32
  }
}

</mosaic_0001>

<llo_original>
// kernel: bert_crf_forward.1
$region0: #{bert_crf_forward.1}
  #allocation0 [shape = 'u32[]', space=smem, size = 0x4, offset = 0x4, fixed_abs, tag = 'smem constant byte address 0x4 - core index']
  #allocation1 [shape = 'u32[144,128]{1,0:T(1,128)}', space=vmem, size = 0x12000, scoped, tag = 'internal scratch']
  #allocation2 [shape = 'f32[8,32]{1,0:T(8,128)}', space=vmem, size = 0x1000, scoped, tag = 'scratch operand']
  #allocation3 [shape = 's32[1]{0}', space=sflag, size = 0x4, scoped, tag = 'scoped memory for bert_crf_forward.1']
  #allocation4 [shape = 'u8[1024]{0}', space=smem, size = 0x400, scoped, tag = 'prefetched SMEM operand 0']
  #allocation5 [shape = 'u8[1024]{0}', space=smem, size = 0x400, scoped, tag = 'prefetched SMEM operand 1']
  #allocation6 [shape = 'u8[1024]{0}', space=smem, size = 0x400, scoped, tag = 'prefetched SMEM operand 2']
  %s0 = inlined_call_operand.vmem [shape: s32[2,8], index: 0, kind: input, shape index: {}]
  %s1 = inlined_call_operand.vmem [shape: s32[2,8], index: 1, kind: input, shape index: {}]
  %s2 = inlined_call_operand.vmem [shape: s32[2,8], index: 2, kind: input, shape index: {}]
  %s3 = inlined_call_operand.vmem [shape: f32[104,32], index: 3, kind: input, shape index: {}]
  %s4 = inlined_call_operand.vmem [shape: f32[8,32], index: 4, kind: input, shape index: {}]
  %s5 = inlined_call_operand.vmem [shape: f32[1,32], index: 5, kind: input, shape index: {}]
  %s6 = inlined_call_operand.vmem [shape: f32[1,32], index: 6, kind: input, shape index: {}]
  %s7 = inlined_call_operand.vmem [shape: f32[1,32], index: 7, kind: input, shape index: {}]
  %s8 = inlined_call_operand.vmem [shape: f32[2,32,96], index: 8, kind: input, shape index: {}]
  %s9 = inlined_call_operand.vmem [shape: f32[2,1,96], index: 9, kind: input, shape index: {}]
  %s10 = inlined_call_operand.vmem [shape: f32[8,8,32], index: 10, kind: input, shape index: {}]
  %s11 = inlined_call_operand.vmem [shape: f32[2,1,32], index: 11, kind: input, shape index: {}]
  %s12 = inlined_call_operand.vmem [shape: f32[2,1,32], index: 12, kind: input, shape index: {}]
  %s13 = inlined_call_operand.vmem [shape: f32[2,1,32], index: 13, kind: input, shape index: {}]
  %s14 = inlined_call_operand.vmem [shape: f32[2,32,64], index: 14, kind: input, shape index: {}]
  %s15 = inlined_call_operand.vmem [shape: f32[2,1,64], index: 15, kind: input, shape index: {}]
  %s16 = inlined_call_operand.vmem [shape: f32[2,64,32], index: 16, kind: input, shape index: {}]
  %s17 = inlined_call_operand.vmem [shape: f32[2,1,32], index: 17, kind: input, shape index: {}]
  %s18 = inlined_call_operand.vmem [shape: f32[2,1,32], index: 18, kind: input, shape index: {}]
  %s19 = inlined_call_operand.vmem [shape: f32[2,1,32], index: 19, kind: input, shape index: {}]
  %s20 = inlined_call_operand.vmem [shape: f32[32,5], index: 20, kind: input, shape index: {}]
  %s21 = inlined_call_operand.vmem [shape: f32[1,5], index: 21, kind: input, shape index: {}]
  %s22 = inlined_call_operand.vmem [shape: f32[5,5], index: 22, kind: input, shape index: {}]
  %s23 = inlined_call_operand.vmem [shape: f32[5,5], index: 23, kind: input, shape index: {}]
  %s24 = inlined_call_operand.vmem [shape: f32[1,5], index: 24, kind: input, shape index: {}]
  %s25 = inlined_call_operand.vmem [shape: f32[1,5], index: 25, kind: input, shape index: {}]
  %s26 = inlined_call_operand.vmem [shape: f32[2,1,1], index: 26, kind: output, shape index: {}]
  %s27 = sld [smem:[#allocation0]]
  $region125: #{bert_crf_forward.1} parent=0
    _
  %s29 = ssub.s32 1, %s27
  %s30 = scalar_select 0, %s29, %s27
  %s31 = sshll.u32 %s0, 4
  %s32 = int_to_ptr.vmem [resolvable:$true] %s31
  %34 = dma.vmem_to_smem %s32, 32, [#allocation4], [#allocation3]
  %s35 = sshll.u32 %s1, 4
  %s36 = int_to_ptr.vmem [resolvable:$true] %s35
  %38 = dma.vmem_to_smem %s36, 32, [#allocation5], [#allocation3]
  %s39 = sshll.u32 %s2, 4
  %s40 = int_to_ptr.vmem [resolvable:$true] %s39
  %42 = dma.vmem_to_smem %s40, 32, [#allocation6], [#allocation3]
  %43 = dma.done [#allocation3], 96
  %44 = sfence
  loop: start=0, step=1, limit=4
  $region2: #{bert_crf_forward.1} parent=0 // loop_pre_header
    _
  $region3: #{bert_crf_forward.1} parent=0 // loop_header
    %s46 = sphi 0, %s50
    %p47 = scmp.ge.s32.totalorder %s46, 4
    %s54 = sphi 0, %s54
    %s56 = sphi 0, %s54
    %s57 = sphi 0, %s56
    %s71 = sphi 0, %s57
    %s75 = sphi 0, %s75
    %s77 = sphi 0, %s75
    %s78 = sphi 0, %s77
    %s92 = sphi 0, %s78
    %s96 = sphi 0, %s96
    %s98 = sphi 0, %s96
    %s99 = sphi 0, %s98
    %s113 = sphi 0, %s99
    %s117 = sphi 0, %s117
    %s119 = sphi 0, %s117
    %s120 = sphi 0, %s119
    %s134 = sphi 0, %s120
    %s138 = sphi 0, %s138
    %s140 = sphi 0, %s138
    %s141 = sphi 0, %s140
    %s155 = sphi 0, %s141
    %s159 = sphi 0, %s159
    %s161 = sphi 0, %s159
    %s162 = sphi 0, %s161
    %s176 = sphi 0, %s162
    %s180 = sphi 0, %s180
    %s182 = sphi 0, %s180
    %s183 = sphi 0, %s182
    %s197 = sphi 0, %s183
    %s201 = sphi 0, %s201
    %s203 = sphi 0, %s201
    %s204 = sphi 0, %s203
    %s218 = sphi 0, %s204
    %s222 = sphi 0, %s222
    %s224 = sphi 0, %s222
    %s225 = sphi 0, %s224
    %s239 = sphi 0, %s225
    %s243 = sphi 0, %s243
    %s245 = sphi 0, %s243
    %s246 = sphi 0, %s245
    %s260 = sphi 0, %s246
    %s264 = sphi 0, %s264
    %s266 = sphi 0, %s264
    %s267 = sphi 0, %s266
    %s281 = sphi 0, %s267
    %s285 = sphi 0, %s285
    %s287 = sphi 0, %s285
    %s288 = sphi 0, %s287
    %s302 = sphi 0, %s288
    %s306 = sphi 0, %s306
    %s308 = sphi 0, %s306
    %s309 = sphi 0, %s308
    %s323 = sphi 0, %s309
    %s327 = sphi 0, %s327
    %s329 = sphi 0, %s327
    %s330 = sphi 0, %s329
    %s344 = sphi 0, %s330
    %s348 = sphi 0, %s348
    %s350 = sphi 0, %s348
    %s351 = sphi 0, %s350
    %s365 = sphi 0, %s351
    %s369 = sphi 0, %s369
    %s371 = sphi 0, %s369
    %s372 = sphi 0, %s371
    %s386 = sphi 0, %s372
    %s390 = sphi 0, %s390
    %s392 = sphi 0, %s390
    %s393 = sphi 0, %s392
    %s407 = sphi 0, %s393
    %s411 = sphi 0, %s411
    %s413 = sphi 0, %s411
    %s414 = sphi 0, %s413
    %s428 = sphi 0, %s414
    %s432 = sphi 0, %s432
    %s434 = sphi 0, %s432
    %s435 = sphi 0, %s434
    %s449 = sphi 0, %s435
    %s453 = sphi 0, %s453
    %s455 = sphi 0, %s453
    %s456 = sphi 0, %s455
    %s470 = sphi 0, %s456
    %s474 = sphi 0, %s474
    %s476 = sphi 0, %s474
    %s477 = sphi 0, %s476
    %s491 = sphi 0, %s477
    %s495 = sphi 0, %s495
    %s497 = sphi 0, %s495
    %s498 = sphi 0, %s497
    %s512 = sphi 0, %s498
    %s516 = sphi 0, %s516
    %s518 = sphi 0, %s516
    %s519 = sphi 0, %s518
    %s533 = sphi 0, %s519
    %s539 = sphi 0, %s541
    %s542 = sphi 0, %s539
    %s543 = sphi 0, %s542
    %s559 = sphi 0, %s543
  $region4: #{bert_crf_forward.1} parent=0 // loop_header_branch
    %49 = sbr.rel (%p47) target = $region8
  $region5: #{bert_crf_forward.1} parent=0 // loop_body
    %s51 = ssub.s32 %s46, 1
    %s52 = ssub.s32 %s46, 2
    %s53 = sadd.s32 %s46, 1
    %s55 = sadd.s32 %s54, 1
    %p58 = scmp.eq.s32.totalorder %s46, 1
    %p59 = scmp.ne.s32.totalorder %s54, %s56
    %p60 = scmp.eq.s32.totalorder %s46, 0
    %p61 = por %p59, %p60
    %p62 = scmp.ne.s32.totalorder %s54, %s56
    %p63 = scmp.eq.s32.totalorder %s51, 1
    %p64 = por %p62, %p63
    %p65 = scmp.ne.s32.totalorder %s56, %s57
    %p66 = scmp.eq.s32.totalorder %s51, 0
    %p67 = por %p65, %p66
    %p68 = scmp.ne.s32.totalorder %s56, %s57
    %p69 = scmp.eq.s32.totalorder %s52, 1
    %p70 = por %p68, %p69
    %p72 = scmp.ne.s32.totalorder %s57, %s71
    %p73 = scmp.eq.s32.totalorder %s52, 0
    %p74 = por %p72, %p73
    %s76 = sadd.s32 %s75, 1
    %p79 = scmp.eq.s32.totalorder %s46, 1
    %p80 = scmp.ne.s32.totalorder %s75, %s77
    %p81 = scmp.eq.s32.totalorder %s46, 0
    %p82 = por %p80, %p81
    %p83 = scmp.ne.s32.totalorder %s75, %s77
    %p84 = scmp.eq.s32.totalorder %s51, 1
    %p85 = por %p83, %p84
    %p86 = scmp.ne.s32.totalorder %s77, %s78
    %p87 = scmp.eq.s32.totalorder %s51, 0
    %p88 = por %p86, %p87
    %p89 = scmp.ne.s32.totalorder %s77, %s78
    %p90 = scmp.eq.s32.totalorder %s52, 1
    %p91 = por %p89, %p90
    %p93 = scmp.ne.s32.totalorder %s78, %s92
    %p94 = scmp.eq.s32.totalorder %s52, 0
    %p95 = por %p93, %p94
    %s97 = sadd.s32 %s96, 1
    %p100 = scmp.eq.s32.totalorder %s46, 1
    %p101 = scmp.ne.s32.totalorder %s96, %s98
    %p102 = scmp.eq.s32.totalorder %s46, 0
    %p103 = por %p101, %p102
    %p104 = scmp.ne.s32.totalorder %s96, %s98
    %p105 = scmp.eq.s32.totalorder %s51, 1
    %p106 = por %p104, %p105
    %p107 = scmp.ne.s32.totalorder %s98, %s99
    %p108 = scmp.eq.s32.totalorder %s51, 0
    %p109 = por %p107, %p108
    %p110 = scmp.ne.s32.totalorder %s98, %s99
    %p111 = scmp.eq.s32.totalorder %s52, 1
    %p112 = por %p110, %p111
    %p114 = scmp.ne.s32.totalorder %s99, %s113
    %p115 = scmp.eq.s32.totalorder %s52, 0
    %p116 = por %p114, %p115
    %s118 = sadd.s32 %s117, 1
    %p121 = scmp.eq.s32.totalorder %s46, 1
    %p122 = scmp.ne.s32.totalorder %s117, %s119
    %p123 = scmp.eq.s32.totalorder %s46, 0
    %p124 = por %p122, %p123
    %p125 = scmp.ne.s32.totalorder %s117, %s119
    %p126 = scmp.eq.s32.totalorder %s51, 1
    %p127 = por %p125, %p126
    %p128 = scmp.ne.s32.totalorder %s119, %s120
    %p129 = scmp.eq.s32.totalorder %s51, 0
    %p130 = por %p128, %p129
    %p131 = scmp.ne.s32.totalorder %s119, %s120
    %p132 = scmp.eq.s32.totalorder %s52, 1
    %p133 = por %p131, %p132
    %p135 = scmp.ne.s32.totalorder %s120, %s134
    %p136 = scmp.eq.s32.totalorder %s52, 0
    %p137 = por %p135, %p136
    %s139 = sadd.s32 %s138, 1
    %p142 = scmp.eq.s32.totalorder %s46, 1
    %p143 = scmp.ne.s32.totalorder %s138, %s140
    %p144 = scmp.eq.s32.totalorder %s46, 0
    %p145 = por %p143, %p144
    %p146 = scmp.ne.s32.totalorder %s138, %s140
    %p147 = scmp.eq.s32.totalorder %s51, 1
    %p148 = por %p146, %p147
    %p149 = scmp.ne.s32.totalorder %s140, %s141
    %p150 = scmp.eq.s32.totalorder %s51, 0
    %p151 = por %p149, %p150
    %p152 = scmp.ne.s32.totalorder %s140, %s141
    %p153 = scmp.eq.s32.totalorder %s52, 1
    %p154 = por %p152, %p153
    %p156 = scmp.ne.s32.totalorder %s141, %s155
    %p157 = scmp.eq.s32.totalorder %s52, 0
    %p158 = por %p156, %p157
    %s160 = sadd.s32 %s159, 1
    %p163 = scmp.eq.s32.totalorder %s46, 1
    %p164 = scmp.ne.s32.totalorder %s159, %s161
    %p165 = scmp.eq.s32.totalorder %s46, 0
    %p166 = por %p164, %p165
    %p167 = scmp.ne.s32.totalorder %s159, %s161
    %p168 = scmp.eq.s32.totalorder %s51, 1
    %p169 = por %p167, %p168
    %p170 = scmp.ne.s32.totalorder %s161, %s162
    %p171 = scmp.eq.s32.totalorder %s51, 0
    %p172 = por %p170, %p171
    %p173 = scmp.ne.s32.totalorder %s161, %s162
    %p174 = scmp.eq.s32.totalorder %s52, 1
    %p175 = por %p173, %p174
    %p177 = scmp.ne.s32.totalorder %s162, %s176
    %p178 = scmp.eq.s32.totalorder %s52, 0
    %p179 = por %p177, %p178
    %s181 = sadd.s32 %s180, 1
    %p184 = scmp.eq.s32.totalorder %s46, 1
    %p185 = scmp.ne.s32.totalorder %s180, %s182
    %p186 = scmp.eq.s32.totalorder %s46, 0
    %p187 = por %p185, %p186
    %p188 = scmp.ne.s32.totalorder %s180, %s182
    %p189 = scmp.eq.s32.totalorder %s51, 1
    %p190 = por %p188, %p189
    %p191 = scmp.ne.s32.totalorder %s182, %s183
    %p192 = scmp.eq.s32.totalorder %s51, 0
    %p193 = por %p191, %p192
    %p194 = scmp.ne.s32.totalorder %s182, %s183
    %p195 = scmp.eq.s32.totalorder %s52, 1
    %p196 = por %p194, %p195
    %p198 = scmp.ne.s32.totalorder %s183, %s197
    %p199 = scmp.eq.s32.totalorder %s52, 0
    %p200 = por %p198, %p199
    %s202 = sadd.s32 %s201, 1
    %p205 = scmp.eq.s32.totalorder %s46, 1
    %p206 = scmp.ne.s32.totalorder %s201, %s203
    %p207 = scmp.eq.s32.totalorder %s46, 0
    %p208 = por %p206, %p207
    %p209 = scmp.ne.s32.totalorder %s201, %s203
    %p210 = scmp.eq.s32.totalorder %s51, 1
    %p211 = por %p209, %p210
    %p212 = scmp.ne.s32.totalorder %s203, %s204
    %p213 = scmp.eq.s32.totalorder %s51, 0
    %p214 = por %p212, %p213
    %p215 = scmp.ne.s32.totalorder %s203, %s204
    %p216 = scmp.eq.s32.totalorder %s52, 1
    %p217 = por %p215, %p216
    %p219 = scmp.ne.s32.totalorder %s204, %s218
    %p220 = scmp.eq.s32.totalorder %s52, 0
    %p221 = por %p219, %p220
    %s223 = sadd.s32 %s222, 1
    %p226 = scmp.eq.s32.totalorder %s46, 1
    %p227 = scmp.ne.s32.totalorder %s222, %s224
    %p228 = scmp.eq.s32.totalorder %s46, 0
    %p229 = por %p227, %p228
    %p230 = scmp.ne.s32.totalorder %s222, %s224
    %p231 = scmp.eq.s32.totalorder %s51, 1
    %p232 = por %p230, %p231
    %p233 = scmp.ne.s32.totalorder %s224, %s225
    %p234 = scmp.eq.s32.totalorder %s51, 0
    %p235 = por %p233, %p234
    %p236 = scmp.ne.s32.totalorder %s224, %s225
    %p237 = scmp.eq.s32.totalorder %s52, 1
    %p238 = por %p236, %p237
    %p240 = scmp.ne.s32.totalorder %s225, %s239
    %p241 = scmp.eq.s32.totalorder %s52, 0
    %p242 = por %p240, %p241
    %s244 = sadd.s32 %s243, 1
    %p247 = scmp.eq.s32.totalorder %s46, 1
    %p248 = scmp.ne.s32.totalorder %s243, %s245
    %p249 = scmp.eq.s32.totalorder %s46, 0
    %p250 = por %p248, %p249
    %p251 = scmp.ne.s32.totalorder %s243, %s245
    %p252 = scmp.eq.s32.totalorder %s51, 1
    %p253 = por %p251, %p252
    %p254 = scmp.ne.s32.totalorder %s245, %s246
    %p255 = scmp.eq.s32.totalorder %s51, 0
    %p256 = por %p254, %p255
    %p257 = scmp.ne.s32.totalorder %s245, %s246
    %p258 = scmp.eq.s32.totalorder %s52, 1
    %p259 = por %p257, %p258
    %p261 = scmp.ne.s32.totalorder %s246, %s260
    %p262 = scmp.eq.s32.totalorder %s52, 0
    %p263 = por %p261, %p262
    %s265 = sadd.s32 %s264, 1
    %p268 = scmp.eq.s32.totalorder %s46, 1
    %p269 = scmp.ne.s32.totalorder %s264, %s266
    %p270 = scmp.eq.s32.totalorder %s46, 0
    %p271 = por %p269, %p270
    %p272 = scmp.ne.s32.totalorder %s264, %s266
    %p273 = scmp.eq.s32.totalorder %s51, 1
    %p274 = por %p272, %p273
    %p275 = scmp.ne.s32.totalorder %s266, %s267
    %p276 = scmp.eq.s32.totalorder %s51, 0
    %p277 = por %p275, %p276
    %p278 = scmp.ne.s32.totalorder %s266, %s267
    %p279 = scmp.eq.s32.totalorder %s52, 1
    %p280 = por %p278, %p279
    %p282 = scmp.ne.s32.totalorder %s267, %s281
    %p283 = scmp.eq.s32.totalorder %s52, 0
    %p284 = por %p282, %p283
    %s286 = sadd.s32 %s285, 1
    %p289 = scmp.eq.s32.totalorder %s46, 1
    %p290 = scmp.ne.s32.totalorder %s285, %s287
    %p291 = scmp.eq.s32.totalorder %s46, 0
    %p292 = por %p290, %p291
    %p293 = scmp.ne.s32.totalorder %s285, %s287
    %p294 = scmp.eq.s32.totalorder %s51, 1
    %p295 = por %p293, %p294
    %p296 = scmp.ne.s32.totalorder %s287, %s288
    %p297 = scmp.eq.s32.totalorder %s51, 0
    %p298 = por %p296, %p297
    %p299 = scmp.ne.s32.totalorder %s287, %s288
    %p300 = scmp.eq.s32.totalorder %s52, 1
    %p301 = por %p299, %p300
    %p303 = scmp.ne.s32.totalorder %s288, %s302
    %p304 = scmp.eq.s32.totalorder %s52, 0
    %p305 = por %p303, %p304
    %s307 = sadd.s32 %s306, 1
    %p310 = scmp.eq.s32.totalorder %s46, 1
    %p311 = scmp.ne.s32.totalorder %s306, %s308
    %p312 = scmp.eq.s32.totalorder %s46, 0
    %p313 = por %p311, %p312
    %p314 = scmp.ne.s32.totalorder %s306, %s308
    %p315 = scmp.eq.s32.totalorder %s51, 1
    %p316 = por %p314, %p315
    %p317 = scmp.ne.s32.totalorder %s308, %s309
    %p318 = scmp.eq.s32.totalorder %s51, 0
    %p319 = por %p317, %p318
    %p320 = scmp.ne.s32.totalorder %s308, %s309
    %p321 = scmp.eq.s32.totalorder %s52, 1
    %p322 = por %p320, %p321
    %p324 = scmp.ne.s32.totalorder %s309, %s323
    %p325 = scmp.eq.s32.totalorder %s52, 0
    %p326 = por %p324, %p325
    %s328 = sadd.s32 %s327, 1
    %p331 = scmp.eq.s32.totalorder %s46, 1
    %p332 = scmp.ne.s32.totalorder %s327, %s329
    %p333 = scmp.eq.s32.totalorder %s46, 0
    %p334 = por %p332, %p333
    %p335 = scmp.ne.s32.totalorder %s327, %s329
    %p336 = scmp.eq.s32.totalorder %s51, 1
    %p337 = por %p335, %p336
    %p338 = scmp.ne.s32.totalorder %s329, %s330
    %p339 = scmp.eq.s32.totalorder %s51, 0
    %p340 = por %p338, %p339
    %p341 = scmp.ne.s32.totalorder %s329, %s330
    %p342 = scmp.eq.s32.totalorder %s52, 1
    %p343 = por %p341, %p342
    %p345 = scmp.ne.s32.totalorder %s330, %s344
    %p346 = scmp.eq.s32.totalorder %s52, 0
    %p347 = por %p345, %p346
    %s349 = sadd.s32 %s348, 1
    %p352 = scmp.eq.s32.totalorder %s46, 1
    %p353 = scmp.ne.s32.totalorder %s348, %s350
    %p354 = scmp.eq.s32.totalorder %s46, 0
    %p355 = por %p353, %p354
    %p356 = scmp.ne.s32.totalorder %s348, %s350
    %p357 = scmp.eq.s32.totalorder %s51, 1
    %p358 = por %p356, %p357
    %p359 = scmp.ne.s32.totalorder %s350, %s351
    %p360 = scmp.eq.s32.totalorder %s51, 0
    %p361 = por %p359, %p360
    %p362 = scmp.ne.s32.totalorder %s350, %s351
    %p363 = scmp.eq.s32.totalorder %s52, 1
    %p364 = por %p362, %p363
    %p366 = scmp.ne.s32.totalorder %s351, %s365
    %p367 = scmp.eq.s32.totalorder %s52, 0
    %p368 = por %p366, %p367
    %s370 = sadd.s32 %s369, 1
    %p373 = scmp.eq.s32.totalorder %s46, 1
    %p374 = scmp.ne.s32.totalorder %s369, %s371
    %p375 = scmp.eq.s32.totalorder %s46, 0
    %p376 = por %p374, %p375
    %p377 = scmp.ne.s32.totalorder %s369, %s371
    %p378 = scmp.eq.s32.totalorder %s51, 1
    %p379 = por %p377, %p378
    %p380 = scmp.ne.s32.totalorder %s371, %s372
    %p381 = scmp.eq.s32.totalorder %s51, 0
    %p382 = por %p380, %p381
    %p383 = scmp.ne.s32.totalorder %s371, %s372
    %p384 = scmp.eq.s32.totalorder %s52, 1
    %p385 = por %p383, %p384
    %p387 = scmp.ne.s32.totalorder %s372, %s386
    %p388 = scmp.eq.s32.totalorder %s52, 0
    %p389 = por %p387, %p388
    %s391 = sadd.s32 %s390, 1
    %p394 = scmp.eq.s32.totalorder %s46, 1
    %p395 = scmp.ne.s32.totalorder %s390, %s392
    %p396 = scmp.eq.s32.totalorder %s46, 0
    %p397 = por %p395, %p396
    %p398 = scmp.ne.s32.totalorder %s390, %s392
    %p399 = scmp.eq.s32.totalorder %s51, 1
    %p400 = por %p398, %p399
    %p401 = scmp.ne.s32.totalorder %s392, %s393
    %p402 = scmp.eq.s32.totalorder %s51, 0
    %p403 = por %p401, %p402
    %p404 = scmp.ne.s32.totalorder %s392, %s393
    %p405 = scmp.eq.s32.totalorder %s52, 1
    %p406 = por %p404, %p405
    %p408 = scmp.ne.s32.totalorder %s393, %s407
    %p409 = scmp.eq.s32.totalorder %s52, 0
    %p410 = por %p408, %p409
    %s412 = sadd.s32 %s411, 1
    %p415 = scmp.eq.s32.totalorder %s46, 1
    %p416 = scmp.ne.s32.totalorder %s411, %s413
    %p417 = scmp.eq.s32.totalorder %s46, 0
    %p418 = por %p416, %p417
    %p419 = scmp.ne.s32.totalorder %s411, %s413
    %p420 = scmp.eq.s32.totalorder %s51, 1
    %p421 = por %p419, %p420
    %p422 = scmp.ne.s32.totalorder %s413, %s414
    %p423 = scmp.eq.s32.totalorder %s51, 0
    %p424 = por %p422, %p423
    %p425 = scmp.ne.s32.totalorder %s413, %s414
    %p426 = scmp.eq.s32.totalorder %s52, 1
    %p427 = por %p425, %p426
    %p429 = scmp.ne.s32.totalorder %s414, %s428
    %p430 = scmp.eq.s32.totalorder %s52, 0
    %p431 = por %p429, %p430
    %s433 = sadd.s32 %s432, 1
    %p436 = scmp.eq.s32.totalorder %s46, 1
    %p437 = scmp.ne.s32.totalorder %s432, %s434
    %p438 = scmp.eq.s32.totalorder %s46, 0
    %p439 = por %p437, %p438
    %p440 = scmp.ne.s32.totalorder %s432, %s434
    %p441 = scmp.eq.s32.totalorder %s51, 1
    %p442 = por %p440, %p441
    %p443 = scmp.ne.s32.totalorder %s434, %s435
    %p444 = scmp.eq.s32.totalorder %s51, 0
    %p445 = por %p443, %p444
    %p446 = scmp.ne.s32.totalorder %s434, %s435
    %p447 = scmp.eq.s32.totalorder %s52, 1
    %p448 = por %p446, %p447
    %p450 = scmp.ne.s32.totalorder %s435, %s449
    %p451 = scmp.eq.s32.totalorder %s52, 0
    %p452 = por %p450, %p451
    %s454 = sadd.s32 %s453, 1
    %p457 = scmp.eq.s32.totalorder %s46, 1
    %p458 = scmp.ne.s32.totalorder %s453, %s455
    %p459 = scmp.eq.s32.totalorder %s46, 0
    %p460 = por %p458, %p459
    %p461 = scmp.ne.s32.totalorder %s453, %s455
    %p462 = scmp.eq.s32.totalorder %s51, 1
    %p463 = por %p461, %p462
    %p464 = scmp.ne.s32.totalorder %s455, %s456
    %p465 = scmp.eq.s32.totalorder %s51, 0
    %p466 = por %p464, %p465
    %p467 = scmp.ne.s32.totalorder %s455, %s456
    %p468 = scmp.eq.s32.totalorder %s52, 1
    %p469 = por %p467, %p468
    %p471 = scmp.ne.s32.totalorder %s456, %s470
    %p472 = scmp.eq.s32.totalorder %s52, 0
    %p473 = por %p471, %p472
    %s475 = sadd.s32 %s474, 1
    %p478 = scmp.eq.s32.totalorder %s46, 1
    %p479 = scmp.ne.s32.totalorder %s474, %s476
    %p480 = scmp.eq.s32.totalorder %s46, 0
    %p481 = por %p479, %p480
    %p482 = scmp.ne.s32.totalorder %s474, %s476
    %p483 = scmp.eq.s32.totalorder %s51, 1
    %p484 = por %p482, %p483
    %p485 = scmp.ne.s32.totalorder %s476, %s477
    %p486 = scmp.eq.s32.totalorder %s51, 0
    %p487 = por %p485, %p486
    %p488 = scmp.ne.s32.totalorder %s476, %s477
    %p489 = scmp.eq.s32.totalorder %s52, 1
    %p490 = por %p488, %p489
    %p492 = scmp.ne.s32.totalorder %s477, %s491
    %p493 = scmp.eq.s32.totalorder %s52, 0
    %p494 = por %p492, %p493
    %s496 = sadd.s32 %s495, 1
    %p499 = scmp.eq.s32.totalorder %s46, 1
    %p500 = scmp.ne.s32.totalorder %s495, %s497
    %p501 = scmp.eq.s32.totalorder %s46, 0
    %p502 = por %p500, %p501
    %p503 = scmp.ne.s32.totalorder %s495, %s497
    %p504 = scmp.eq.s32.totalorder %s51, 1
    %p505 = por %p503, %p504
    %p506 = scmp.ne.s32.totalorder %s497, %s498
    %p507 = scmp.eq.s32.totalorder %s51, 0
    %p508 = por %p506, %p507
    %p509 = scmp.ne.s32.totalorder %s497, %s498
    %p510 = scmp.eq.s32.totalorder %s52, 1
    %p511 = por %p509, %p510
    %p513 = scmp.ne.s32.totalorder %s498, %s512
    %p514 = scmp.eq.s32.totalorder %s52, 0
    %p515 = por %p513, %p514
    %s517 = sadd.s32 %s516, 1
    %p520 = scmp.eq.s32.totalorder %s46, 1
    %p521 = scmp.ne.s32.totalorder %s516, %s518
    %p522 = scmp.eq.s32.totalorder %s46, 0
    %p523 = por %p521, %p522
    %p524 = scmp.ne.s32.totalorder %s516, %s518
    %p525 = scmp.eq.s32.totalorder %s51, 1
    %p526 = por %p524, %p525
    %p527 = scmp.ne.s32.totalorder %s518, %s519
    %p528 = scmp.eq.s32.totalorder %s51, 0
    %p529 = por %p527, %p528
    %p530 = scmp.ne.s32.totalorder %s518, %s519
    %p531 = scmp.eq.s32.totalorder %s52, 1
    %p532 = por %p530, %p531
    %p534 = scmp.ne.s32.totalorder %s519, %s533
    %p535 = scmp.eq.s32.totalorder %s52, 0
    %p536 = por %p534, %p535
    %s537 = ssub.s32 %s46, %s53
    %p538 = scmp.eq.s32.totalorder %s537, 0
    %s540 = sadd.s32 %s539, 1
    %s541 = scalar_select %p538, %s539, %s540
    %p544 = pneg %p538
    %p545 = scmp.eq.s32.totalorder %s46, 1
    %p546 = por %p544, %p545
    %p547 = scmp.ne.s32.totalorder %s539, %s542
    %p548 = scmp.eq.s32.totalorder %s46, 0
    %p549 = por %p547, %p548
    %p550 = scmp.ne.s32.totalorder %s539, %s542
    %p551 = scmp.eq.s32.totalorder %s51, 1
    %p552 = por %p550, %p551
    %p553 = scmp.ne.s32.totalorder %s542, %s543
    %p554 = scmp.eq.s32.totalorder %s51, 0
    %p555 = por %p553, %p554
    %p556 = scmp.ne.s32.totalorder %s542, %s543
    %p557 = scmp.eq.s32.totalorder %s52, 1
    %p558 = por %p556, %p557
    %p560 = scmp.ne.s32.totalorder %s543, %s559
    %p561 = scmp.eq.s32.totalorder %s52, 0
    %p562 = por %p560, %p561
    %p563 = scmp.le.s32.totalorder 1, %s46
    %p564 = scmp.lt.s32.totalorder %s46, 3
    %p565 = pnand %p563, %p564
    %p566 = pneg %p565
    // Predicated region
    $region9: #{bert_crf_forward.1} parent=5 // pred_check
      _
    $region10: #{bert_crf_forward.1} parent=5 // pred_check_branch
      %568 = sbr.rel (%p565) target = $region12
    $region11: #{bert_crf_forward.1} parent=5 // pred_region
      %s569 = ssub.s32 %s46, 1
      // Predicated region
      $region13: #{bert_crf_forward.1} parent=11 // pred_check
        %p570 = pneg %p67
      $region14: #{bert_crf_forward.1} parent=11 // pred_check_branch
        %572 = sbr.rel (%p570) target = $region16
      $region15: #{bert_crf_forward.1} parent=11 // pred_region
        _
      $region16: #{bert_crf_forward.1} parent=11 // pred_fallthru
        _
      // Predicated region
      $region17: #{bert_crf_forward.1} parent=11 // pred_check
        %p573 = pneg %p88
      $region18: #{bert_crf_forward.1} parent=11 // pred_check_branch
        %575 = sbr.rel (%p573) target = $region20
      $region19: #{bert_crf_forward.1} parent=11 // pred_region
        _
      $region20: #{bert_crf_forward.1} parent=11 // pred_fallthru
        _
      // Predicated region
      $region21: #{bert_crf_forward.1} parent=11 // pred_check
        %p576 = pneg %p109
      $region22: #{bert_crf_forward.1} parent=11 // pred_check_branch
        %578 = sbr.rel (%p576) target = $region24
      $region23: #{bert_crf_forward.1} parent=11 // pred_region
        _
      $region24: #{bert_crf_forward.1} parent=11 // pred_fallthru
        _
      // Predicated region
      $region25: #{bert_crf_forward.1} parent=11 // pred_check
        %p579 = pneg %p130
      $region26: #{bert_crf_forward.1} parent=11 // pred_check_branch
        %581 = sbr.rel (%p579) target = $region28
      $region27: #{bert_crf_forward.1} parent=11 // pred_region
        _
      $region28: #{bert_crf_forward.1} parent=11 // pred_fallthru
        _
      // Predicated region
      $region29: #{bert_crf_forward.1} parent=11 // pred_check
        %p582 = pneg %p151
      $region30: #{bert_crf_forward.1} parent=11 // pred_check_branch
        %584 = sbr.rel (%p582) target = $region32
      $region31: #{bert_crf_forward.1} parent=11 // pred_region
        _
      $region32: #{bert_crf_forward.1} parent=11 // pred_fallthru
        _
      // Predicated region
      $region33: #{bert_crf_forward.1} parent=11 // pred_check
        %p585 = pneg %p172
      $region34: #{bert_crf_forward.1} parent=11 // pred_check_branch
        %587 = sbr.rel (%p585) target = $region36
      $region35: #{bert_crf_forward.1} parent=11 // pred_region
        _
      $region36: #{bert_crf_forward.1} parent=11 // pred_fallthru
        _
      // Predicated region
      $region37: #{bert_crf_forward.1} parent=11 // pred_check
        %p588 = pneg %p193
      $region38: #{bert_crf_forward.1} parent=11 // pred_check_branch
        %590 = sbr.rel (%p588) target = $region40
      $region39: #{bert_crf_forward.1} parent=11 // pred_region
        _
      $region40: #{bert_crf_forward.1} parent=11 // pred_fallthru
        _
      // Predicated region
      $region41: #{bert_crf_forward.1} parent=11 // pred_check
        %p591 = pneg %p214
      $region42: #{bert_crf_forward.1} parent=11 // pred_check_branch
        %593 = sbr.rel (%p591) target = $region44
      $region43: #{bert_crf_forward.1} parent=11 // pred_region
        _
      $region44: #{bert_crf_forward.1} parent=11 // pred_fallthru
        _
      // Predicated region
      $region45: #{bert_crf_forward.1} parent=11 // pred_check
        %p594 = pneg %p235
      $region46: #{bert_crf_forward.1} parent=11 // pred_check_branch
        %596 = sbr.rel (%p594) target = $region48
      $region47: #{bert_crf_forward.1} parent=11 // pred_region
        _
      $region48: #{bert_crf_forward.1} parent=11 // pred_fallthru
        _
      // Predicated region
      $region49: #{bert_crf_forward.1} parent=11 // pred_check
        %p597 = pneg %p256
      $region50: #{bert_crf_forward.1} parent=11 // pred_check_branch
        %599 = sbr.rel (%p597) target = $region52
      $region51: #{bert_crf_forward.1} parent=11 // pred_region
        _
      $region52: #{bert_crf_forward.1} parent=11 // pred_fallthru
        _
      // Predicated region
      $region53: #{bert_crf_forward.1} parent=11 // pred_check
        %p600 = pneg %p277
      $region54: #{bert_crf_forward.1} parent=11 // pred_check_branch
        %602 = sbr.rel (%p600) target = $region56
      $region55: #{bert_crf_forward.1} parent=11 // pred_region
        _
      $region56: #{bert_crf_forward.1} parent=11 // pred_fallthru
        _
      // Predicated region
      $region57: #{bert_crf_forward.1} parent=11 // pred_check
        %p603 = pneg %p298
      $region58: #{bert_crf_forward.1} parent=11 // pred_check_branch
        %605 = sbr.rel (%p603) target = $region60
      $region59: #{bert_crf_forward.1} parent=11 // pred_region
        _
      $region60: #{bert_crf_forward.1} parent=11 // pred_fallthru
        _
      // Predicated region
      $region61: #{bert_crf_forward.1} parent=11 // pred_check
        %p606 = pneg %p319
      $region62: #{bert_crf_forward.1} parent=11 // pred_check_branch
        %608 = sbr.rel (%p606) target = $region64
      $region63: #{bert_crf_forward.1} parent=11 // pred_region
        _
      $region64: #{bert_crf_forward.1} parent=11 // pred_fallthru
        _
      // Predicated region
      $region65: #{bert_crf_forward.1} parent=11 // pred_check
        %p609 = pneg %p340
      $region66: #{bert_crf_forward.1} parent=11 // pred_check_branch
        %611 = sbr.rel (%p609) target = $region68
      $region67: #{bert_crf_forward.1} parent=11 // pred_region
        _
      $region68: #{bert_crf_forward.1} parent=11 // pred_fallthru
        _
      // Predicated region
      $region69: #{bert_crf_forward.1} parent=11 // pred_check
        %p612 = pneg %p361
      $region70: #{bert_crf_forward.1} parent=11 // pred_check_branch
        %614 = sbr.rel (%p612) target = $region72
      $region71: #{bert_crf_forward.1} parent=11 // pred_region
        _
      $region72: #{bert_crf_forward.1} parent=11 // pred_fallthru
        _
      // Predicated region
      $region73: #{bert_crf_forward.1} parent=11 // pred_check
        %p615 = pneg %p382
      $region74: #{bert_crf_forward.1} parent=11 // pred_check_branch
        %617 = sbr.rel (%p615) target = $region76
      $region75: #{bert_crf_forward.1} parent=11 // pred_region
        _
      $region76: #{bert_crf_forward.1} parent=11 // pred_fallthru
        _
      // Predicated region
      $region77: #{bert_crf_forward.1} parent=11 // pred_check
        %p618 = pneg %p403
      $region78: #{bert_crf_forward.1} parent=11 // pred_check_branch
        %620 = sbr.rel (%p618) target = $region80
      $region79: #{bert_crf_forward.1} parent=11 // pred_region
        _
      $region80: #{bert_crf_forward.1} parent=11 // pred_fallthru
        _
      // Predicated region
      $region81: #{bert_crf_forward.1} parent=11 // pred_check
        %p621 = pneg %p424
      $region82: #{bert_crf_forward.1} parent=11 // pred_check_branch
        %623 = sbr.rel (%p621) target = $region84
      $region83: #{bert_crf_forward.1} parent=11 // pred_region
        _
      $region84: #{bert_crf_forward.1} parent=11 // pred_fallthru
        _
      // Predicated region
      $region85: #{bert_crf_forward.1} parent=11 // pred_check
        %p624 = pneg %p445
      $region86: #{bert_crf_forward.1} parent=11 // pred_check_branch
        %626 = sbr.rel (%p624) target = $region88
      $region87: #{bert_crf_forward.1} parent=11 // pred_region
        _
      $region88: #{bert_crf_forward.1} parent=11 // pred_fallthru
        _
      // Predicated region
      $region89: #{bert_crf_forward.1} parent=11 // pred_check
        %p627 = pneg %p466
      $region90: #{bert_crf_forward.1} parent=11 // pred_check_branch
        %629 = sbr.rel (%p627) target = $region92
      $region91: #{bert_crf_forward.1} parent=11 // pred_region
        _
      $region92: #{bert_crf_forward.1} parent=11 // pred_fallthru
        _
      // Predicated region
      $region93: #{bert_crf_forward.1} parent=11 // pred_check
        %p630 = pneg %p487
      $region94: #{bert_crf_forward.1} parent=11 // pred_check_branch
        %632 = sbr.rel (%p630) target = $region96
      $region95: #{bert_crf_forward.1} parent=11 // pred_region
        _
      $region96: #{bert_crf_forward.1} parent=11 // pred_fallthru
        _
      // Predicated region
      $region97: #{bert_crf_forward.1} parent=11 // pred_check
        %p633 = pneg %p508
      $region98: #{bert_crf_forward.1} parent=11 // pred_check_branch
        %635 = sbr.rel (%p633) target = $region100
      $region99: #{bert_crf_forward.1} parent=11 // pred_region
        _
      $region100: #{bert_crf_forward.1} parent=11 // pred_fallthru
        _
      // Predicated region
      $region101: #{bert_crf_forward.1} parent=11 // pred_check
        %p636 = pneg %p529
      $region102: #{bert_crf_forward.1} parent=11 // pred_check_branch
        %638 = sbr.rel (%p636) target = $region104
      $region103: #{bert_crf_forward.1} parent=11 // pred_region
        _
      $region104: #{bert_crf_forward.1} parent=11 // pred_fallthru
        _
    $region12: #{bert_crf_forward.1} parent=5 // pred_fallthru
      _
    %p639 = scmp.lt.s32.totalorder %s46, 2
    // Predicated region
    $region105: #{bert_crf_forward.1} parent=5 // pred_check
      %p640 = pneg %p639
    $region106: #{bert_crf_forward.1} parent=5 // pred_check_branch
      %642 = sbr.rel (%p640) target = $region108
    $region107: #{bert_crf_forward.1} parent=5 // pred_region
      _
    $region108: #{bert_crf_forward.1} parent=5 // pred_fallthru
      _
    %p643 = scmp.le.s32.totalorder 1, %s46
    %p644 = scmp.lt.s32.totalorder %s46, 3
    %p645 = pnand %p643, %p644
    %p646 = pneg %p645
    // Predicated region
    $region109: #{bert_crf_forward.1} parent=5 // pred_check
      _
    $region110: #{bert_crf_forward.1} parent=5 // pred_check_branch
      %648 = sbr.rel (%p645) target = $region112
    $region111: #{bert_crf_forward.1} parent=5 // pred_region
      %s649 = ssub.s32 %s46, 1
      %p650 = pneg %p67
      %p651 = pneg %p64
      %p652 = pneg %p88
      %p653 = pneg %p85
      %p654 = pneg %p109
      %p655 = pneg %p106
      %p656 = pneg %p130
      %p657 = pneg %p127
      %p658 = pneg %p151
      %p659 = pneg %p148
      %p660 = pneg %p172
      %p661 = pneg %p169
      %p662 = pneg %p193
      %p663 = pneg %p190
      %p664 = pneg %p214
      %p665 = pneg %p211
      %p666 = pneg %p235
      %p667 = pneg %p232
      %p668 = pneg %p256
      %p669 = pneg %p253
      %p670 = pneg %p277
      %p671 = pneg %p274
      %p672 = pneg %p298
      %p673 = pneg %p295
      %p674 = pneg %p319
      %p675 = pneg %p316
      %p676 = pneg %p340
      %p677 = pneg %p337
      %p678 = pneg %p361
      %p679 = pneg %p358
      %p680 = pneg %p382
      %p681 = pneg %p379
      %p682 = pneg %p403
      %p683 = pneg %p400
      %p684 = pneg %p424
      %p685 = pneg %p421
      %p686 = pneg %p445
      %p687 = pneg %p442
      %p688 = pneg %p466
      %p689 = pneg %p463
      %p690 = pneg %p487
      %p691 = pneg %p484
      %p692 = pneg %p508
      %p693 = pneg %p505
      %p694 = pneg %p529
      %p695 = pneg %p526
      %p696 = pneg %p555
      %p697 = pneg %p552
      %p698 = scmp.lt.s32.totalorder %s51, 1
      %s699 = scalar_select %p698, %s51, 1
      %s700 = scalar_lea.vmem %s26, %s699
      %p701 = scmp.lt.s32.totalorder %s51, 1
      %s702 = scalar_select %p701, %s51, 1
      %s703 = scalar_lea.vmem %s26, %s702
      %v704 = vld [vmem:[%s5] sm:$0x1]
      %s705 = smul.u32 %s51, 128
      %s706 = sld [smem:[#allocation4 + %s705]]
      %s707 = scalar_lea.vmem %s3, %s706
      %v708 = vld [vmem:[%s707] sm:$0x1]
      %v709 = vld [vmem:[%s4] sm:$0x1]
      %v710 = vadd.f32 %v708, %v709
      %v711 = vadd.f32 %v710, %v704
      %vm712 = vcmask 253952
      %713 = vst.msk [vmem:[#allocation2] sm:$0x1] %vm712, %v711
      %s714 = sadd.s32 %s705, 1
      %s715 = sld [smem:[#allocation4 + %s714]]
      %s716 = scalar_lea.vmem %s3, %s715
      %v717 = vld [vmem:[%s716] sm:$0x1]
      %v718 = vld [vmem:[%s4 + $0x1] sm:$0x1]
      %v719 = vadd.f32 %v717, %v718
      %v720 = vadd.f32 %v719, %v704
      %721 = vst.msk [vmem:[#allocation2 + $0x1] sm:$0x1] %vm712, %v720
      %s722 = sadd.s32 %s705, 2
      %s723 = sld [smem:[#allocation4 + %s722]]
      %s724 = scalar_lea.vmem %s3, %s723
      %v725 = vld [vmem:[%s724] sm:$0x1]
      %v726 = vld [vmem:[%s4 + $0x2] sm:$0x1]
      %v727 = vadd.f32 %v725, %v726
      %v728 = vadd.f32 %v727, %v704
      %729 = vst.msk [vmem:[#allocation2 + $0x2] sm:$0x1] %vm712, %v728
      %s730 = sadd.s32 %s705, 3
      %s731 = sld [smem:[#allocation4 + %s730]]
      %s732 = scalar_lea.vmem %s3, %s731
      %v733 = vld [vmem:[%s732] sm:$0x1]
      %v734 = vld [vmem:[%s4 + $0x3] sm:$0x1]
      %v735 = vadd.f32 %v733, %v734
      %v736 = vadd.f32 %v735, %v704
      %737 = vst.msk [vmem:[#allocation2 + $0x3] sm:$0x1] %vm712, %v736
      %s738 = sadd.s32 %s705, 4
      %s739 = sld [smem:[#allocation4 + %s738]]
      %s740 = scalar_lea.vmem %s3, %s739
      %v741 = vld [vmem:[%s740] sm:$0x1]
      %v742 = vld [vmem:[%s4 + $0x4] sm:$0x1]
      %v743 = vadd.f32 %v741, %v742
      %v744 = vadd.f32 %v743, %v704
      %745 = vst.msk [vmem:[#allocation2 + $0x4] sm:$0x1] %vm712, %v744
      %s746 = sadd.s32 %s705, 5
      %s747 = sld [smem:[#allocation4 + %s746]]
      %s748 = scalar_lea.vmem %s3, %s747
      %v749 = vld [vmem:[%s748] sm:$0x1]
      %v750 = vld [vmem:[%s4 + $0x5] sm:$0x1]
      %v751 = vadd.f32 %v749, %v750
      %v752 = vadd.f32 %v751, %v704
      %753 = vst.msk [vmem:[#allocation2 + $0x5] sm:$0x1] %vm712, %v752
      %s754 = sadd.s32 %s705, 6
      %s755 = sld [smem:[#allocation4 + %s754]]
      %s756 = scalar_lea.vmem %s3, %s755
      %v757 = vld [vmem:[%s756] sm:$0x1]
      %v758 = vld [vmem:[%s4 + $0x6] sm:$0x1]
      %v759 = vadd.f32 %v757, %v758
      %v760 = vadd.f32 %v759, %v704
      %761 = vst.msk [vmem:[#allocation2 + $0x6] sm:$0x1] %vm712, %v760
      %s762 = sadd.s32 %s705, 7
      %s763 = sld [smem:[#allocation4 + %s762]]
      %s764 = scalar_lea.vmem %s3, %s763
      %v765 = vld [vmem:[%s764] sm:$0x1]
      %v766 = vld [vmem:[%s4 + $0x7] sm:$0x1]
      %v767 = vadd.f32 %v765, %v766
      %v768 = vadd.f32 %v767, %v704
      %769 = vst.msk [vmem:[#allocation2 + $0x7] sm:$0x1] %vm712, %v768
      %v770 = vld [vmem:[#allocation2] sm:$0xff]
      %v771 = vld [vmem:[%s6] sm:$0x1]
      %v772 = vld [vmem:[%s7] sm:$0x1]
      %vm773 = vcmask 261120
      %v774 = vsel %vm773, %v770, 0.0
      %775 = vadd.xlane.f32.xlu0 %v774
      %v776 = vpop.xlane.xlu0 %775
      %v777 = vrcp.pop 32.0
      %v778 = vmul.f32 %v776, %v777
      %v779 = vsub.f32 %v770, %v778
      %v780 = vmul.f32 %v779, %v779
      %v781 = vsel %vm773, %v780, 0.0
      %782 = vadd.xlane.f32.xlu0 %v781
      %v783 = vpop.xlane.xlu0 %782
      %v784 = vmul.f32 %v783, %v777
      %v785 = vadd.f32 %v784, 1e-12
      %v786 = vrsqrt.pop %v785
      %v787 = vmul.f32 %v779, %v786
      %v789 = vlaneseq
      %v790 = vshrl.u32 %v789, 7
      %v791 = vsub.s32 0, %v790
      %v792 = vrot.slane %v771, %v791
      %v794 = vmul.f32 %v787, %v792
      %v796 = vlaneseq
      %v797 = vshrl.u32 %v796, 7
      %v798 = vsub.s32 0, %v797
      %v799 = vrot.slane %v772, %v798
      %v801 = vadd.f32 %v794, %v799
      %v802 = vld [vmem:[%s8] sm:$0xff]
      %v803 = vld [vmem:[%s8 + $0x8] sm:$0xff]
      %v804 = vld [vmem:[%s8 + $0x10] sm:$0xff]
      %v805 = vld [vmem:[%s8 + $0x18] sm:$0xff]
      %v806 = vld [vmem:[%s9] sm:$0x1]
      %v808 = vlaneseq
      %v809 = vshrl.u32 %v808, 7
      %v810 = vsub.s32 0, %v809
      %v811 = vrot.slane %v806, %v810
      %v814 = vsel %vm773, %v801, 0
      %816 = vmatprep.subr.mxu0 0.0
      %817 = vmatpush1.msra.mxu0 0.0
      %818 = vmatprep.subr.mxu0 0.0
      %819 = vmatpush1.msra.mxu0 0.0
      %820 = vmatprep.subr.mxu0 0.0
      %821 = vmatpush1.msra.mxu0 0.0
      %822 = vmatprep.subr.mxu0 0.0
      %823 = vmatpush1.msra.mxu0 0.0
      %824 = vmatprep.subr.mxu0 0.0
      %825 = vmatpush1.msra.mxu0 0.0
      %826 = vmatprep.subr.mxu0 0.0
      %827 = vmatpush1.msra.mxu0 0.0
      %828 = vmatprep.subr.mxu0 0.0
      %829 = vmatpush1.msra.mxu0 0.0
      %830 = vmatprep.subr.mxu0 0.0
      %831 = vmatpush1.msra.mxu0 0.0
      %832 = vmatprep.subr.mxu0 0.0
      %833 = vmatpush1.msra.mxu0 0.0
      %834 = vmatprep.subr.mxu0 0.0
      %835 = vmatpush1.msra.mxu0 0.0
      %836 = vmatprep.subr.mxu0 0.0
      %837 = vmatpush1.msra.mxu0 0.0
      %838 = vmatprep.subr.mxu0 0.0
      %839 = vmatpush1.msra.mxu0 0.0
      %840 = vmatprep.subr.mxu0 0.0
      %841 = vmatpush1.msra.mxu0 %v805
      %842 = vmatprep.subr.mxu0 0.0
      %843 = vmatpush1.msra.mxu0 %v804
      %844 = vmatprep.subr.mxu0 0.0
      %845 = vmatpush1.msra.mxu0 %v803
      %846 = vmatprep.subr.mxu0 0.0
      %847 = vmatpush1.msra.mxu0 %v802
      %848 = vmatprep.subr.mxu0 0.0
      %849 = vmatpush2.msra.mxu0 0.0
      %850 = vmatprep.subr.mxu0 0.0
      %851 = vmatpush2.msra.mxu0 0.0
      %852 = vmatprep.subr.mxu0 0.0
      %853 = vmatpush2.msra.mxu0 0.0
      %854 = vmatprep.subr.mxu0 0.0
      %855 = vmatpush2.msra.mxu0 0.0
      %856 = vmatprep.subr.mxu0 0.0
      %857 = vmatpush2.msra.mxu0 0.0
      %858 = vmatprep.subr.mxu0 0.0
      %859 = vmatpush2.msra.mxu0 0.0
      %860 = vmatprep.subr.mxu0 0.0
      %861 = vmatpush2.msra.mxu0 0.0
      %862 = vmatprep.subr.mxu0 0.0
      %863 = vmatpush2.msra.mxu0 0.0
      %864 = vmatprep.subr.mxu0 0.0
      %865 = vmatpush2.msra.mxu0 0.0
      %866 = vmatprep.subr.mxu0 0.0
      %867 = vmatpush2.msra.mxu0 0.0
      %868 = vmatprep.subr.mxu0 0.0
      %869 = vmatpush2.msra.mxu0 0.0
      %870 = vmatprep.subr.mxu0 0.0
      %871 = vmatpush2.msra.mxu0 0.0
      %872 = vmatprep.subr.mxu0 0.0
      %873 = vmatpush2.msra.mxu0 0.0
      %874 = vmatprep.subr.mxu0 0.0
      %875 = vmatpush2.msra.mxu0 0.0
      %876 = vmatprep.subr.mxu0 0.0
      %877 = vmatpush2.msra.mxu0 0.0
      %878 = vmatprep.subr.mxu0 0.0
      %879 = vmatpush2.msra.mxu0 0.0
      %880 = vmatprep.mubr.f32.mxu0 0.0
      %881 = vmatmul.mubr.f32.gmra.mxu0 %v814
      %v882 = vpop.f32.mrf.mxu0
      %v883 = vadd.f32 %v811, %v882
      %v884 = vpop.f32.mrf.mxu0
      %885 = vdwg.mxu0
      %v886 = vld [vmem:[%s11] sm:$0x1]
      %888 = vrot.lane.b32.xlu0 %v883, 96
      %v889 = vpop.permute.xlu0 %888
      %vm890 = vcmask 64512
      %v891 = vsel %vm890, %v883, 0
      %v893 = vsel %vm890, %v889, 0
      %895 = vmatprep.subr.mxu0 0.0
      %896 = vmatpush1.xpose.msra.mxu0 0.0
      %897 = vmatprep.subr.mxu0 0.0
      %898 = vmatpush1.xpose.msra.mxu0 0.0
      %899 = vmatprep.subr.mxu0 0.0
      %900 = vmatpush1.xpose.msra.mxu0 0.0
      %901 = vmatprep.subr.mxu0 0.0
      %902 = vmatpush1.xpose.msra.mxu0 0.0
      %903 = vmatprep.subr.mxu0 0.0
      %904 = vmatpush1.xpose.msra.mxu0 0.0
      %905 = vmatprep.subr.mxu0 0.0
      %906 = vmatpush1.xpose.msra.mxu0 0.0
      %907 = vmatprep.subr.mxu0 0.0
      %908 = vmatpush1.xpose.msra.mxu0 0.0
      %909 = vmatprep.subr.mxu0 0.0
      %910 = vmatpush1.xpose.msra.mxu0 0.0
      %911 = vmatprep.subr.mxu0 0.0
      %912 = vmatpush1.xpose.msra.mxu0 0.0
      %913 = vmatprep.subr.mxu0 0.0
      %914 = vmatpush1.xpose.msra.mxu0 0.0
      %915 = vmatprep.subr.mxu0 0.0
      %916 = vmatpush1.xpose.msra.mxu0 0.0
      %917 = vmatprep.subr.mxu0 0.0
      %918 = vmatpush1.xpose.msra.mxu0 0.0
      %919 = vmatprep.subr.mxu0 0.0
      %920 = vmatpush1.xpose.msra.mxu0 0.0
      %921 = vmatprep.subr.mxu0 0.0
      %922 = vmatpush1.xpose.msra.mxu0 0.0
      %923 = vmatprep.subr.mxu0 0.0
      %924 = vmatpush1.xpose.msra.mxu0 0.0
      %925 = vmatprep.subr.mxu0 0.0
      %926 = vmatpush1.xpose.msra.mxu0 %v893
      %927 = vmatprep.subr.mxu0 0.0
      %928 = vmatpush2.xpose.msra.mxu0 0.0
      %929 = vmatprep.subr.mxu0 0.0
      %930 = vmatpush2.xpose.msra.mxu0 0.0
      %931 = vmatprep.subr.mxu0 0.0
      %932 = vmatpush2.xpose.msra.mxu0 0.0
      %933 = vmatprep.subr.mxu0 0.0
      %934 = vmatpush2.xpose.msra.mxu0 0.0
      %935 = vmatprep.subr.mxu0 0.0
      %936 = vmatpush2.xpose.msra.mxu0 0.0
      %937 = vmatprep.subr.mxu0 0.0
      %938 = vmatpush2.xpose.msra.mxu0 0.0
      %939 = vmatprep.subr.mxu0 0.0
      %940 = vmatpush2.xpose.msra.mxu0 0.0
      %941 = vmatprep.subr.mxu0 0.0
      %942 = vmatpush2.xpose.msra.mxu0 0.0
      %943 = vmatprep.subr.mxu0 0.0
      %944 = vmatpush2.xpose.msra.mxu0 0.0
      %945 = vmatprep.subr.mxu0 0.0
      %946 = vmatpush2.xpose.msra.mxu0 0.0
      %947 = vmatprep.subr.mxu0 0.0
      %948 = vmatpush2.xpose.msra.mxu0 0.0
      %949 = vmatprep.subr.mxu0 0.0
      %950 = vmatpush2.xpose.msra.mxu0 0.0
      %951 = vmatprep.subr.mxu0 0.0
      %952 = vmatpush2.xpose.msra.mxu0 0.0
      %953 = vmatprep.subr.mxu0 0.0
      %954 = vmatpush2.xpose.msra.mxu0 0.0
      %955 = vmatprep.subr.mxu0 0.0
      %956 = vmatpush2.xpose.msra.mxu0 0.0
      %957 = vmatprep.subr.mxu0 0.0
      %958 = vmatpush2.xpose.msra.mxu0 0.0
      %959 = vmatprep.mubr.f32.mxu0 0.0
      %960 = vmatmul.mubr.f32.gmra.mxu0 %v891
      %v961 = vpop.f32.mrf.mxu0
      %v962 = vadd.f32 0.0, %v961
      %v963 = vpop.f32.mrf.mxu0
      %964 = vdwg.mxu0
      %v965 = vmul.f32 %v962, 0.35355338
      %v966 = vsel %vm890, %v965, -inf
      %967 = vmax.xlane.f32.xlu0 %v966
      %v968 = vpop.xlane.xlu0 %967
      %v969 = vsub.f32 %v965, %v968
      %v970 = vmul.f32 %v969, 1.442695
      %v971 = vpow.pop %v970
      %v972 = vsel %vm890, %v971, 0.0
      %973 = vadd.xlane.f32.xlu0 %v972
      %v974 = vpop.xlane.xlu0 %973
      %v975 = vrcp.pop %v974
      %v976 = vmul.f32 %v971, %v975
      %977 = vrot.lane.b32.xlu0 %v883, 64
      %v978 = vpop.permute.xlu0 %977
      %v981 = vsel %vm890, %v976, 0
      %983 = vmatprep.subr.mxu0 0.0
      %984 = vmatpush1.msra.mxu0 0.0
      %985 = vmatprep.subr.mxu0 0.0
      %986 = vmatpush1.msra.mxu0 0.0
      %987 = vmatprep.subr.mxu0 0.0
      %988 = vmatpush1.msra.mxu0 0.0
      %989 = vmatprep.subr.mxu0 0.0
      %990 = vmatpush1.msra.mxu0 0.0
      %991 = vmatprep.subr.mxu0 0.0
      %992 = vmatpush1.msra.mxu0 0.0
      %993 = vmatprep.subr.mxu0 0.0
      %994 = vmatpush1.msra.mxu0 0.0
      %995 = vmatprep.subr.mxu0 0.0
      %996 = vmatpush1.msra.mxu0 0.0
      %997 = vmatprep.subr.mxu0 0.0
      %998 = vmatpush1.msra.mxu0 0.0
      %999 = vmatprep.subr.mxu0 0.0
      %1000 = vmatpush1.msra.mxu0 0.0
      %1001 = vmatprep.subr.mxu0 0.0
      %1002 = vmatpush1.msra.mxu0 0.0
      %1003 = vmatprep.subr.mxu0 0.0
      %1004 = vmatpush1.msra.mxu0 0.0
      %1005 = vmatprep.subr.mxu0 0.0
      %1006 = vmatpush1.msra.mxu0 0.0
      %1007 = vmatprep.subr.mxu0 0.0
      %1008 = vmatpush1.msra.mxu0 0.0
      %1009 = vmatprep.subr.mxu0 0.0
      %1010 = vmatpush1.msra.mxu0 0.0
      %1011 = vmatprep.subr.mxu0 0.0
      %1012 = vmatpush1.msra.mxu0 0.0
      %1013 = vmatprep.subr.mxu0 0.0
      %1014 = vmatpush1.msra.mxu0 %v978
      %1015 = vmatprep.subr.mxu0 0.0
      %1016 = vmatpush2.msra.mxu0 0.0
      %1017 = vmatprep.subr.mxu0 0.0
      %1018 = vmatpush2.msra.mxu0 0.0
      %1019 = vmatprep.subr.mxu0 0.0
      %1020 = vmatpush2.msra.mxu0 0.0
      %1021 = vmatprep.subr.mxu0 0.0
      %1022 = vmatpush2.msra.mxu0 0.0
      %1023 = vmatprep.subr.mxu0 0.0
      %1024 = vmatpush2.msra.mxu0 0.0
      %1025 = vmatprep.subr.mxu0 0.0
      %1026 = vmatpush2.msra.mxu0 0.0
      %1027 = vmatprep.subr.mxu0 0.0
      %1028 = vmatpush2.msra.mxu0 0.0
      %1029 = vmatprep.subr.mxu0 0.0
      %1030 = vmatpush2.msra.mxu0 0.0
      %1031 = vmatprep.subr.mxu0 0.0
      %1032 = vmatpush2.msra.mxu0 0.0
      %1033 = vmatprep.subr.mxu0 0.0
      %1034 = vmatpush2.msra.mxu0 0.0
      %1035 = vmatprep.subr.mxu0 0.0
      %1036 = vmatpush2.msra.mxu0 0.0
      %1037 = vmatprep.subr.mxu0 0.0
      %1038 = vmatpush2.msra.mxu0 0.0
      %1039 = vmatprep.subr.mxu0 0.0
      %1040 = vmatpush2.msra.mxu0 0.0
      %1041 = vmatprep.subr.mxu0 0.0
      %1042 = vmatpush2.msra.mxu0 0.0
      %1043 = vmatprep.subr.mxu0 0.0
      %1044 = vmatpush2.msra.mxu0 0.0
      %1045 = vmatprep.subr.mxu0 0.0
      %1046 = vmatpush2.msra.mxu0 0.0
      %1047 = vmatprep.mubr.f32.mxu0 0.0
      %1048 = vmatmul.mubr.f32.gmra.mxu0 %v981
      %v1049 = vpop.f32.mrf.mxu0
      %v1050 = vadd.f32 0.0, %v1049
      %v1051 = vpop.f32.mrf.mxu0
      %1052 = vdwg.mxu0
      %v1053 = vld [vmem:[%s10] sm:$0xff]
      %v1055 = vsel %vm890, %v1050, 0
      %1057 = vmatprep.subr.mxu0 0.0
      %1058 = vmatpush1.msra.mxu0 0.0
      %1059 = vmatprep.subr.mxu0 0.0
      %1060 = vmatpush1.msra.mxu0 0.0
      %1061 = vmatprep.subr.mxu0 0.0
      %1062 = vmatpush1.msra.mxu0 0.0
      %1063 = vmatprep.subr.mxu0 0.0
      %1064 = vmatpush1.msra.mxu0 0.0
      %1065 = vmatprep.subr.mxu0 0.0
      %1066 = vmatpush1.msra.mxu0 0.0
      %1067 = vmatprep.subr.mxu0 0.0
      %1068 = vmatpush1.msra.mxu0 0.0
      %1069 = vmatprep.subr.mxu0 0.0
      %1070 = vmatpush1.msra.mxu0 0.0
      %1071 = vmatprep.subr.mxu0 0.0
      %1072 = vmatpush1.msra.mxu0 0.0
      %1073 = vmatprep.subr.mxu0 0.0
      %1074 = vmatpush1.msra.mxu0 0.0
      %1075 = vmatprep.subr.mxu0 0.0
      %1076 = vmatpush1.msra.mxu0 0.0
      %1077 = vmatprep.subr.mxu0 0.0
      %1078 = vmatpush1.msra.mxu0 0.0
      %1079 = vmatprep.subr.mxu0 0.0
      %1080 = vmatpush1.msra.mxu0 0.0
      %1081 = vmatprep.subr.mxu0 0.0
      %1082 = vmatpush1.msra.mxu0 0.0
      %1083 = vmatprep.subr.mxu0 0.0
      %1084 = vmatpush1.msra.mxu0 0.0
      %1085 = vmatprep.subr.mxu0 0.0
      %1086 = vmatpush1.msra.mxu0 0.0
      %1087 = vmatprep.subr.mxu0 0.0
      %1088 = vmatpush1.msra.mxu0 %v1053
      %1089 = vmatprep.subr.mxu0 0.0
      %1090 = vmatpush2.msra.mxu0 0.0
      %1091 = vmatprep.subr.mxu0 0.0
      %1092 = vmatpush2.msra.mxu0 0.0
      %1093 = vmatprep.subr.mxu0 0.0
      %1094 = vmatpush2.msra.mxu0 0.0
      %1095 = vmatprep.subr.mxu0 0.0
      %1096 = vmatpush2.msra.mxu0 0.0
      %1097 = vmatprep.subr.mxu0 0.0
      %1098 = vmatpush2.msra.mxu0 0.0
      %1099 = vmatprep.subr.mxu0 0.0
      %1100 = vmatpush2.msra.mxu0 0.0
      %1101 = vmatprep.subr.mxu0 0.0
      %1102 = vmatpush2.msra.mxu0 0.0
      %1103 = vmatprep.subr.mxu0 0.0
      %1104 = vmatpush2.msra.mxu0 0.0
      %1105 = vmatprep.subr.mxu0 0.0
      %1106 = vmatpush2.msra.mxu0 0.0
      %1107 = vmatprep.subr.mxu0 0.0
      %1108 = vmatpush2.msra.mxu0 0.0
      %1109 = vmatprep.subr.mxu0 0.0
      %1110 = vmatpush2.msra.mxu0 0.0
      %1111 = vmatprep.subr.mxu0 0.0
      %1112 = vmatpush2.msra.mxu0 0.0
      %1113 = vmatprep.subr.mxu0 0.0
      %1114 = vmatpush2.msra.mxu0 0.0
      %1115 = vmatprep.subr.mxu0 0.0
      %1116 = vmatpush2.msra.mxu0 0.0
      %1117 = vmatprep.subr.mxu0 0.0
      %1118 = vmatpush2.msra.mxu0 0.0
      %1119 = vmatprep.subr.mxu0 0.0
      %1120 = vmatpush2.msra.mxu0 0.0
      %1121 = vmatprep.mubr.f32.mxu0 0.0
      %1122 = vmatmul.mubr.f32.gmra.mxu0 %v1055
      %v1123 = vpop.f32.mrf.mxu0
      %v1124 = vadd.f32 0.0, %v1123
      %v1125 = vpop.f32.mrf.mxu0
      %1126 = vdwg.mxu0
      %v1128 = vlaneseq
      %v1129 = vshrl.u32 %v1128, 7
      %v1130 = vsub.s32 0, %v1129
      %v1131 = vrot.slane %v886, %v1130
      %v1133 = vadd.f32 %v1131, %v1124
      %1134 = vrot.lane.b32.xlu0 %v883, 120
      %v1135 = vpop.permute.xlu0 %1134
      %1136 = vrot.lane.b32.xlu0 %v883, 88
      %v1137 = vpop.permute.xlu0 %1136
      %v1138 = vsel %vm890, %v1135, 0
      %v1140 = vsel %vm890, %v1137, 0
      %1142 = vmatprep.subr.mxu0 0.0
      %1143 = vmatpush1.xpose.msra.mxu0 0.0
      %1144 = vmatprep.subr.mxu0 0.0
      %1145 = vmatpush1.xpose.msra.mxu0 0.0
      %1146 = vmatprep.subr.mxu0 0.0
      %1147 = vmatpush1.xpose.msra.mxu0 0.0
      %1148 = vmatprep.subr.mxu0 0.0
      %1149 = vmatpush1.xpose.msra.mxu0 0.0
      %1150 = vmatprep.subr.mxu0 0.0
      %1151 = vmatpush1.xpose.msra.mxu0 0.0
      %1152 = vmatprep.subr.mxu0 0.0
      %1153 = vmatpush1.xpose.msra.mxu0 0.0
      %1154 = vmatprep.subr.mxu0 0.0
      %1155 = vmatpush1.xpose.msra.mxu0 0.0
      %1156 = vmatprep.subr.mxu0 0.0
      %1157 = vmatpush1.xpose.msra.mxu0 0.0
      %1158 = vmatprep.subr.mxu0 0.0
      %1159 = vmatpush1.xpose.msra.mxu0 0.0
      %1160 = vmatprep.subr.mxu0 0.0
      %1161 = vmatpush1.xpose.msra.mxu0 0.0
      %1162 = vmatprep.subr.mxu0 0.0
      %1163 = vmatpush1.xpose.msra.mxu0 0.0
      %1164 = vmatprep.subr.mxu0 0.0
      %1165 = vmatpush1.xpose.msra.mxu0 0.0
      %1166 = vmatprep.subr.mxu0 0.0
      %1167 = vmatpush1.xpose.msra.mxu0 0.0
      %1168 = vmatprep.subr.mxu0 0.0
      %1169 = vmatpush1.xpose.msra.mxu0 0.0
      %1170 = vmatprep.subr.mxu0 0.0
      %1171 = vmatpush1.xpose.msra.mxu0 0.0
      %1172 = vmatprep.subr.mxu0 0.0
      %1173 = vmatpush1.xpose.msra.mxu0 %v1140
      %1174 = vmatprep.subr.mxu0 0.0
      %1175 = vmatpush2.xpose.msra.mxu0 0.0
      %1176 = vmatprep.subr.mxu0 0.0
      %1177 = vmatpush2.xpose.msra.mxu0 0.0
      %1178 = vmatprep.subr.mxu0 0.0
      %1179 = vmatpush2.xpose.msra.mxu0 0.0
      %1180 = vmatprep.subr.mxu0 0.0
      %1181 = vmatpush2.xpose.msra.mxu0 0.0
      %1182 = vmatprep.subr.mxu0 0.0
      %1183 = vmatpush2.xpose.msra.mxu0 0.0
      %1184 = vmatprep.subr.mxu0 0.0
      %1185 = vmatpush2.xpose.msra.mxu0 0.0
      %1186 = vmatprep.subr.mxu0 0.0
      %1187 = vmatpush2.xpose.msra.mxu0 0.0
      %1188 = vmatprep.subr.mxu0 0.0
      %1189 = vmatpush2.xpose.msra.mxu0 0.0
      %1190 = vmatprep.subr.mxu0 0.0
      %1191 = vmatpush2.xpose.msra.mxu0 0.0
      %1192 = vmatprep.subr.mxu0 0.0
      %1193 = vmatpush2.xpose.msra.mxu0 0.0
      %1194 = vmatprep.subr.mxu0 0.0
      %1195 = vmatpush2.xpose.msra.mxu0 0.0
      %1196 = vmatprep.subr.mxu0 0.0
      %1197 = vmatpush2.xpose.msra.mxu0 0.0
      %1198 = vmatprep.subr.mxu0 0.0
      %1199 = vmatpush2.xpose.msra.mxu0 0.0
      %1200 = vmatprep.subr.mxu0 0.0
      %1201 = vmatpush2.xpose.msra.mxu0 0.0
      %1202 = vmatprep.subr.mxu0 0.0
      %1203 = vmatpush2.xpose.msra.mxu0 0.0
      %1204 = vmatprep.subr.mxu0 0.0
      %1205 = vmatpush2.xpose.msra.mxu0 0.0
      %1206 = vmatprep.mubr.f32.mxu0 0.0
      %1207 = vmatmul.mubr.f32.gmra.mxu0 %v1138
      %v1208 = vpop.f32.mrf.mxu0
      %v1209 = vadd.f32 0.0, %v1208
      %v1210 = vpop.f32.mrf.mxu0
      %1211 = vdwg.mxu0
      %v1212 = vmul.f32 %v1209, 0.35355338
      %v1213 = vsel %vm890, %v1212, -inf
      %1214 = vmax.xlane.f32.xlu0 %v1213
      %v1215 = vpop.xlane.xlu0 %1214
      %v1216 = vsub.f32 %v1212, %v1215
      %v1217 = vmul.f32 %v1216, 1.442695
      %v1218 = vpow.pop %v1217
      %v1219 = vsel %vm890, %v1218, 0.0
      %1220 = vadd.xlane.f32.xlu0 %v1219
      %v1221 = vpop.xlane.xlu0 %1220
      %v1222 = vrcp.pop %v1221
      %v1223 = vmul.f32 %v1218, %v1222
      %1224 = vrot.lane.b32.xlu0 %v883, 56
      %v1225 = vpop.permute.xlu0 %1224
      %v1228 = vsel %vm890, %v1223, 0
      %1230 = vmatprep.subr.mxu0 0.0
      %1231 = vmatpush1.msra.mxu0 0.0
      %1232 = vmatprep.subr.mxu0 0.0
      %1233 = vmatpush1.msra.mxu0 0.0
      %1234 = vmatprep.subr.mxu0 0.0
      %1235 = vmatpush1.msra.mxu0 0.0
      %1236 = vmatprep.subr.mxu0 0.0
      %1237 = vmatpush1.msra.mxu0 0.0
      %1238 = vmatprep.subr.mxu0 0.0
      %1239 = vmatpush1.msra.mxu0 0.0
      %1240 = vmatprep.subr.mxu0 0.0
      %1241 = vmatpush1.msra.mxu0 0.0
      %1242 = vmatprep.subr.mxu0 0.0
      %1243 = vmatpush1.msra.mxu0 0.0
      %1244 = vmatprep.subr.mxu0 0.0
      %1245 = vmatpush1.msra.mxu0 0.0
      %1246 = vmatprep.subr.mxu0 0.0
      %1247 = vmatpush1.msra.mxu0 0.0
      %1248 = vmatprep.subr.mxu0 0.0
      %1249 = vmatpush1.msra.mxu0 0.0
      %1250 = vmatprep.subr.mxu0 0.0
      %1251 = vmatpush1.msra.mxu0 0.0
      %1252 = vmatprep.subr.mxu0 0.0
      %1253 = vmatpush1.msra.mxu0 0.0
      %1254 = vmatprep.subr.mxu0 0.0
      %1255 = vmatpush1.msra.mxu0 0.0
      %1256 = vmatprep.subr.mxu0 0.0
      %1257 = vmatpush1.msra.mxu0 0.0
      %1258 = vmatprep.subr.mxu0 0.0
      %1259 = vmatpush1.msra.mxu0 0.0
      %1260 = vmatprep.subr.mxu0 0.0
      %1261 = vmatpush1.msra.mxu0 %v1225
      %1262 = vmatprep.subr.mxu0 0.0
      %1263 = vmatpush2.msra.mxu0 0.0
      %1264 = vmatprep.subr.mxu0 0.0
      %1265 = vmatpush2.msra.mxu0 0.0
      %1266 = vmatprep.subr.mxu0 0.0
      %1267 = vmatpush2.msra.mxu0 0.0
      %1268 = vmatprep.subr.mxu0 0.0
      %1269 = vmatpush2.msra.mxu0 0.0
      %1270 = vmatprep.subr.mxu0 0.0
      %1271 = vmatpush2.msra.mxu0 0.0
      %1272 = vmatprep.subr.mxu0 0.0
      %1273 = vmatpush2.msra.mxu0 0.0
      %1274 = vmatprep.subr.mxu0 0.0
      %1275 = vmatpush2.msra.mxu0 0.0
      %1276 = vmatprep.subr.mxu0 0.0
      %1277 = vmatpush2.msra.mxu0 0.0
      %1278 = vmatprep.subr.mxu0 0.0
      %1279 = vmatpush2.msra.mxu0 0.0
      %1280 = vmatprep.subr.mxu0 0.0
      %1281 = vmatpush2.msra.mxu0 0.0
      %1282 = vmatprep.subr.mxu0 0.0
      %1283 = vmatpush2.msra.mxu0 0.0
      %1284 = vmatprep.subr.mxu0 0.0
      %1285 = vmatpush2.msra.mxu0 0.0
      %1286 = vmatprep.subr.mxu0 0.0
      %1287 = vmatpush2.msra.mxu0 0.0
      %1288 = vmatprep.subr.mxu0 0.0
      %1289 = vmatpush2.msra.mxu0 0.0
      %1290 = vmatprep.subr.mxu0 0.0
      %1291 = vmatpush2.msra.mxu0 0.0
      %1292 = vmatprep.subr.mxu0 0.0
      %1293 = vmatpush2.msra.mxu0 0.0
      %1294 = vmatprep.mubr.f32.mxu0 0.0
      %1295 = vmatmul.mubr.f32.gmra.mxu0 %v1228
      %v1296 = vpop.f32.mrf.mxu0
      %v1297 = vadd.f32 0.0, %v1296
      %v1298 = vpop.f32.mrf.mxu0
      %1299 = vdwg.mxu0
      %s1300 = scalar_lea.vmem %s10, 8
      %v1301 = vld [vmem:[%s1300] sm:$0xff]
      %v1303 = vsel %vm890, %v1297, 0
      %1305 = vmatprep.subr.mxu0 0.0
      %1306 = vmatpush1.msra.mxu0 0.0
      %1307 = vmatprep.subr.mxu0 0.0
      %1308 = vmatpush1.msra.mxu0 0.0
      %1309 = vmatprep.subr.mxu0 0.0
      %1310 = vmatpush1.msra.mxu0 0.0
      %1311 = vmatprep.subr.mxu0 0.0
      %1312 = vmatpush1.msra.mxu0 0.0
      %1313 = vmatprep.subr.mxu0 0.0
      %1314 = vmatpush1.msra.mxu0 0.0
      %1315 = vmatprep.subr.mxu0 0.0
      %1316 = vmatpush1.msra.mxu0 0.0
      %1317 = vmatprep.subr.mxu0 0.0
      %1318 = vmatpush1.msra.mxu0 0.0
      %1319 = vmatprep.subr.mxu0 0.0
      %1320 = vmatpush1.msra.mxu0 0.0
      %1321 = vmatprep.subr.mxu0 0.0
      %1322 = vmatpush1.msra.mxu0 0.0
      %1323 = vmatprep.subr.mxu0 0.0
      %1324 = vmatpush1.msra.mxu0 0.0
      %1325 = vmatprep.subr.mxu0 0.0
      %1326 = vmatpush1.msra.mxu0 0.0
      %1327 = vmatprep.subr.mxu0 0.0
      %1328 = vmatpush1.msra.mxu0 0.0
      %1329 = vmatprep.subr.mxu0 0.0
      %1330 = vmatpush1.msra.mxu0 0.0
      %1331 = vmatprep.subr.mxu0 0.0
      %1332 = vmatpush1.msra.mxu0 0.0
      %1333 = vmatprep.subr.mxu0 0.0
      %1334 = vmatpush1.msra.mxu0 0.0
      %1335 = vmatprep.subr.mxu0 0.0
      %1336 = vmatpush1.msra.mxu0 %v1301
      %1337 = vmatprep.subr.mxu0 0.0
      %1338 = vmatpush2.msra.mxu0 0.0
      %1339 = vmatprep.subr.mxu0 0.0
      %1340 = vmatpush2.msra.mxu0 0.0
      %1341 = vmatprep.subr.mxu0 0.0
      %1342 = vmatpush2.msra.mxu0 0.0
      %1343 = vmatprep.subr.mxu0 0.0
      %1344 = vmatpush2.msra.mxu0 0.0
      %1345 = vmatprep.subr.mxu0 0.0
      %1346 = vmatpush2.msra.mxu0 0.0
      %1347 = vmatprep.subr.mxu0 0.0
      %1348 = vmatpush2.msra.mxu0 0.0
      %1349 = vmatprep.subr.mxu0 0.0
      %1350 = vmatpush2.msra.mxu0 0.0
      %1351 = vmatprep.subr.mxu0 0.0
      %1352 = vmatpush2.msra.mxu0 0.0
      %1353 = vmatprep.subr.mxu0 0.0
      %1354 = vmatpush2.msra.mxu0 0.0
      %1355 = vmatprep.subr.mxu0 0.0
      %1356 = vmatpush2.msra.mxu0 0.0
      %1357 = vmatprep.subr.mxu0 0.0
      %1358 = vmatpush2.msra.mxu0 0.0
      %1359 = vmatprep.subr.mxu0 0.0
      %1360 = vmatpush2.msra.mxu0 0.0
      %1361 = vmatprep.subr.mxu0 0.0
      %1362 = vmatpush2.msra.mxu0 0.0
      %1363 = vmatprep.subr.mxu0 0.0
      %1364 = vmatpush2.msra.mxu0 0.0
      %1365 = vmatprep.subr.mxu0 0.0
      %1366 = vmatpush2.msra.mxu0 0.0
      %1367 = vmatprep.subr.mxu0 0.0
      %1368 = vmatpush2.msra.mxu0 0.0
      %1369 = vmatprep.mubr.f32.mxu0 0.0
      %1370 = vmatmul.mubr.f32.gmra.mxu0 %v1303
      %v1371 = vpop.f32.mrf.mxu0
      %v1372 = vadd.f32 0.0, %v1371
      %v1373 = vpop.f32.mrf.mxu0
      %1374 = vdwg.mxu0
      %v1375 = vadd.f32 %v1133, %v1372
      %1376 = vrot.lane.b32.xlu0 %v883, 112
      %v1377 = vpop.permute.xlu0 %1376
      %1378 = vrot.lane.b32.xlu0 %v883, 80
      %v1379 = vpop.permute.xlu0 %1378
      %v1380 = vsel %vm890, %v1377, 0
      %v1382 = vsel %vm890, %v1379, 0
      %1384 = vmatprep.subr.mxu0 0.0
      %1385 = vmatpush1.xpose.msra.mxu0 0.0
      %1386 = vmatprep.subr.mxu0 0.0
      %1387 = vmatpush1.xpose.msra.mxu0 0.0
      %1388 = vmatprep.subr.mxu0 0.0
      %1389 = vmatpush1.xpose.msra.mxu0 0.0
      %1390 = vmatprep.subr.mxu0 0.0
      %1391 = vmatpush1.xpose.msra.mxu0 0.0
      %1392 = vmatprep.subr.mxu0 0.0
      %1393 = vmatpush1.xpose.msra.mxu0 0.0
      %1394 = vmatprep.subr.mxu0 0.0
      %1395 = vmatpush1.xpose.msra.mxu0 0.0
      %1396 = vmatprep.subr.mxu0 0.0
      %1397 = vmatpush1.xpose.msra.mxu0 0.0
      %1398 = vmatprep.subr.mxu0 0.0
      %1399 = vmatpush1.xpose.msra.mxu0 0.0
      %1400 = vmatprep.subr.mxu0 0.0
      %1401 = vmatpush1.xpose.msra.mxu0 0.0
      %1402 = vmatprep.subr.mxu0 0.0
      %1403 = vmatpush1.xpose.msra.mxu0 0.0
      %1404 = vmatprep.subr.mxu0 0.0
      %1405 = vmatpush1.xpose.msra.mxu0 0.0
      %1406 = vmatprep.subr.mxu0 0.0
      %1407 = vmatpush1.xpose.msra.mxu0 0.0
      %1408 = vmatprep.subr.mxu0 0.0
      %1409 = vmatpush1.xpose.msra.mxu0 0.0
      %1410 = vmatprep.subr.mxu0 0.0
      %1411 = vmatpush1.xpose.msra.mxu0 0.0
      %1412 = vmatprep.subr.mxu0 0.0
      %1413 = vmatpush1.xpose.msra.mxu0 0.0
      %1414 = vmatprep.subr.mxu0 0.0
      %1415 = vmatpush1.xpose.msra.mxu0 %v1382
      %1416 = vmatprep.subr.mxu0 0.0
      %1417 = vmatpush2.xpose.msra.mxu0 0.0
      %1418 = vmatprep.subr.mxu0 0.0
      %1419 = vmatpush2.xpose.msra.mxu0 0.0
      %1420 = vmatprep.subr.mxu0 0.0
      %1421 = vmatpush2.xpose.msra.mxu0 0.0
      %1422 = vmatprep.subr.mxu0 0.0
      %1423 = vmatpush2.xpose.msra.mxu0 0.0
      %1424 = vmatprep.subr.mxu0 0.0
      %1425 = vmatpush2.xpose.msra.mxu0 0.0
      %1426 = vmatprep.subr.mxu0 0.0
      %1427 = vmatpush2.xpose.msra.mxu0 0.0
      %1428 = vmatprep.subr.mxu0 0.0
      %1429 = vmatpush2.xpose.msra.mxu0 0.0
      %1430 = vmatprep.subr.mxu0 0.0
      %1431 = vmatpush2.xpose.msra.mxu0 0.0
      %1432 = vmatprep.subr.mxu0 0.0
      %1433 = vmatpush2.xpose.msra.mxu0 0.0
      %1434 = vmatprep.subr.mxu0 0.0
      %1435 = vmatpush2.xpose.msra.mxu0 0.0
      %1436 = vmatprep.subr.mxu0 0.0
      %1437 = vmatpush2.xpose.msra.mxu0 0.0
      %1438 = vmatprep.subr.mxu0 0.0
      %1439 = vmatpush2.xpose.msra.mxu0 0.0
      %1440 = vmatprep.subr.mxu0 0.0
      %1441 = vmatpush2.xpose.msra.mxu0 0.0
      %1442 = vmatprep.subr.mxu0 0.0
      %1443 = vmatpush2.xpose.msra.mxu0 0.0
      %1444 = vmatprep.subr.mxu0 0.0
      %1445 = vmatpush2.xpose.msra.mxu0 0.0
      %1446 = vmatprep.subr.mxu0 0.0
      %1447 = vmatpush2.xpose.msra.mxu0 0.0
      %1448 = vmatprep.mubr.f32.mxu0 0.0
      %1449 = vmatmul.mubr.f32.gmra.mxu0 %v1380
      %v1450 = vpop.f32.mrf.mxu0
      %v1451 = vadd.f32 0.0, %v1450
      %v1452 = vpop.f32.mrf.mxu0
      %1453 = vdwg.mxu0
      %v1454 = vmul.f32 %v1451, 0.35355338
      %v1455 = vsel %vm890, %v1454, -inf
      %1456 = vmax.xlane.f32.xlu0 %v1455
      %v1457 = vpop.xlane.xlu0 %1456
      %v1458 = vsub.f32 %v1454, %v1457
      %v1459 = vmul.f32 %v1458, 1.442695
      %v1460 = vpow.pop %v1459
      %v1461 = vsel %vm890, %v1460, 0.0
      %1462 = vadd.xlane.f32.xlu0 %v1461
      %v1463 = vpop.xlane.xlu0 %1462
      %v1464 = vrcp.pop %v1463
      %v1465 = vmul.f32 %v1460, %v1464
      %1466 = vrot.lane.b32.xlu0 %v883, 48
      %v1467 = vpop.permute.xlu0 %1466
      %v1470 = vsel %vm890, %v1465, 0
      %1472 = vmatprep.subr.mxu0 0.0
      %1473 = vmatpush1.msra.mxu0 0.0
      %1474 = vmatprep.subr.mxu0 0.0
      %1475 = vmatpush1.msra.mxu0 0.0
      %1476 = vmatprep.subr.mxu0 0.0
      %1477 = vmatpush1.msra.mxu0 0.0
      %1478 = vmatprep.subr.mxu0 0.0
      %1479 = vmatpush1.msra.mxu0 0.0
      %1480 = vmatprep.subr.mxu0 0.0
      %1481 = vmatpush1.msra.mxu0 0.0
      %1482 = vmatprep.subr.mxu0 0.0
      %1483 = vmatpush1.msra.mxu0 0.0
      %1484 = vmatprep.subr.mxu0 0.0
      %1485 = vmatpush1.msra.mxu0 0.0
      %1486 = vmatprep.subr.mxu0 0.0
      %1487 = vmatpush1.msra.mxu0 0.0
      %1488 = vmatprep.subr.mxu0 0.0
      %1489 = vmatpush1.msra.mxu0 0.0
      %1490 = vmatprep.subr.mxu0 0.0
      %1491 = vmatpush1.msra.mxu0 0.0
      %1492 = vmatprep.subr.mxu0 0.0
      %1493 = vmatpush1.msra.mxu0 0.0
      %1494 = vmatprep.subr.mxu0 0.0
      %1495 = vmatpush1.msra.mxu0 0.0
      %1496 = vmatprep.subr.mxu0 0.0
      %1497 = vmatpush1.msra.mxu0 0.0
      %1498 = vmatprep.subr.mxu0 0.0
      %1499 = vmatpush1.msra.mxu0 0.0
      %1500 = vmatprep.subr.mxu0 0.0
      %1501 = vmatpush1.msra.mxu0 0.0
      %1502 = vmatprep.subr.mxu0 0.0
      %1503 = vmatpush1.msra.mxu0 %v1467
      %1504 = vmatprep.subr.mxu0 0.0
      %1505 = vmatpush2.msra.mxu0 0.0
      %1506 = vmatprep.subr.mxu0 0.0
      %1507 = vmatpush2.msra.mxu0 0.0
      %1508 = vmatprep.subr.mxu0 0.0
      %1509 = vmatpush2.msra.mxu0 0.0
      %1510 = vmatprep.subr.mxu0 0.0
      %1511 = vmatpush2.msra.mxu0 0.0
      %1512 = vmatprep.subr.mxu0 0.0
      %1513 = vmatpush2.msra.mxu0 0.0
      %1514 = vmatprep.subr.mxu0 0.0
      %1515 = vmatpush2.msra.mxu0 0.0
      %1516 = vmatprep.subr.mxu0 0.0
      %1517 = vmatpush2.msra.mxu0 0.0
      %1518 = vmatprep.subr.mxu0 0.0
      %1519 = vmatpush2.msra.mxu0 0.0
      %1520 = vmatprep.subr.mxu0 0.0
      %1521 = vmatpush2.msra.mxu0 0.0
      %1522 = vmatprep.subr.mxu0 0.0
      %1523 = vmatpush2.msra.mxu0 0.0
      %1524 = vmatprep.subr.mxu0 0.0
      %1525 = vmatpush2.msra.mxu0 0.0
      %1526 = vmatprep.subr.mxu0 0.0
      %1527 = vmatpush2.msra.mxu0 0.0
      %1528 = vmatprep.subr.mxu0 0.0
      %1529 = vmatpush2.msra.mxu0 0.0
      %1530 = vmatprep.subr.mxu0 0.0
      %1531 = vmatpush2.msra.mxu0 0.0
      %1532 = vmatprep.subr.mxu0 0.0
      %1533 = vmatpush2.msra.mxu0 0.0
      %1534 = vmatprep.subr.mxu0 0.0
      %1535 = vmatpush2.msra.mxu0 0.0
      %1536 = vmatprep.mubr.f32.mxu0 0.0
      %1537 = vmatmul.mubr.f32.gmra.mxu0 %v1470
      %v1538 = vpop.f32.mrf.mxu0
      %v1539 = vadd.f32 0.0, %v1538
      %v1540 = vpop.f32.mrf.mxu0
      %1541 = vdwg.mxu0
      %s1542 = scalar_lea.vmem %s10, 16
      %v1543 = vld [vmem:[%s1542] sm:$0xff]
      %v1545 = vsel %vm890, %v1539, 0
      %1547 = vmatprep.subr.mxu0 0.0
      %1548 = vmatpush1.msra.mxu0 0.0
      %1549 = vmatprep.subr.mxu0 0.0
      %1550 = vmatpush1.msra.mxu0 0.0
      %1551 = vmatprep.subr.mxu0 0.0
      %1552 = vmatpush1.msra.mxu0 0.0
      %1553 = vmatprep.subr.mxu0 0.0
      %1554 = vmatpush1.msra.mxu0 0.0
      %1555 = vmatprep.subr.mxu0 0.0
      %1556 = vmatpush1.msra.mxu0 0.0
      %1557 = vmatprep.subr.mxu0 0.0
      %1558 = vmatpush1.msra.mxu0 0.0
      %1559 = vmatprep.subr.mxu0 0.0
      %1560 = vmatpush1.msra.mxu0 0.0
      %1561 = vmatprep.subr.mxu0 0.0
      %1562 = vmatpush1.msra.mxu0 0.0
      %1563 = vmatprep.subr.mxu0 0.0
      %1564 = vmatpush1.msra.mxu0 0.0
      %1565 = vmatprep.subr.mxu0 0.0
      %1566 = vmatpush1.msra.mxu0 0.0
      %1567 = vmatprep.subr.mxu0 0.0
      %1568 = vmatpush1.msra.mxu0 0.0
      %1569 = vmatprep.subr.mxu0 0.0
      %1570 = vmatpush1.msra.mxu0 0.0
      %1571 = vmatprep.subr.mxu0 0.0
      %1572 = vmatpush1.msra.mxu0 0.0
      %1573 = vmatprep.subr.mxu0 0.0
      %1574 = vmatpush1.msra.mxu0 0.0
      %1575 = vmatprep.subr.mxu0 0.0
      %1576 = vmatpush1.msra.mxu0 0.0
      %1577 = vmatprep.subr.mxu0 0.0
      %1578 = vmatpush1.msra.mxu0 %v1543
      %1579 = vmatprep.subr.mxu0 0.0
      %1580 = vmatpush2.msra.mxu0 0.0
      %1581 = vmatprep.subr.mxu0 0.0
      %1582 = vmatpush2.msra.mxu0 0.0
      %1583 = vmatprep.subr.mxu0 0.0
      %1584 = vmatpush2.msra.mxu0 0.0
      %1585 = vmatprep.subr.mxu0 0.0
      %1586 = vmatpush2.msra.mxu0 0.0
      %1587 = vmatprep.subr.mxu0 0.0
      %1588 = vmatpush2.msra.mxu0 0.0
      %1589 = vmatprep.subr.mxu0 0.0
      %1590 = vmatpush2.msra.mxu0 0.0
      %1591 = vmatprep.subr.mxu0 0.0
      %1592 = vmatpush2.msra.mxu0 0.0
      %1593 = vmatprep.subr.mxu0 0.0
      %1594 = vmatpush2.msra.mxu0 0.0
      %1595 = vmatprep.subr.mxu0 0.0
      %1596 = vmatpush2.msra.mxu0 0.0
      %1597 = vmatprep.subr.mxu0 0.0
      %1598 = vmatpush2.msra.mxu0 0.0
      %1599 = vmatprep.subr.mxu0 0.0
      %1600 = vmatpush2.msra.mxu0 0.0
      %1601 = vmatprep.subr.mxu0 0.0
      %1602 = vmatpush2.msra.mxu0 0.0
      %1603 = vmatprep.subr.mxu0 0.0
      %1604 = vmatpush2.msra.mxu0 0.0
      %1605 = vmatprep.subr.mxu0 0.0
      %1606 = vmatpush2.msra.mxu0 0.0
      %1607 = vmatprep.subr.mxu0 0.0
      %1608 = vmatpush2.msra.mxu0 0.0
      %1609 = vmatprep.subr.mxu0 0.0
      %1610 = vmatpush2.msra.mxu0 0.0
      %1611 = vmatprep.mubr.f32.mxu0 0.0
      %1612 = vmatmul.mubr.f32.gmra.mxu0 %v1545
      %v1613 = vpop.f32.mrf.mxu0
      %v1614 = vadd.f32 0.0, %v1613
      %v1615 = vpop.f32.mrf.mxu0
      %1616 = vdwg.mxu0
      %v1617 = vadd.f32 %v1375, %v1614
      %1618 = vrot.lane.b32.xlu0 %v883, 104
      %v1619 = vpop.permute.xlu0 %1618
      %1620 = vrot.lane.b32.xlu0 %v883, 72
      %v1621 = vpop.permute.xlu0 %1620
      %v1622 = vsel %vm890, %v1619, 0
      %v1624 = vsel %vm890, %v1621, 0
      %1626 = vmatprep.subr.mxu0 0.0
      %1627 = vmatpush1.xpose.msra.mxu0 0.0
      %1628 = vmatprep.subr.mxu0 0.0
      %1629 = vmatpush1.xpose.msra.mxu0 0.0
      %1630 = vmatprep.subr.mxu0 0.0
      %1631 = vmatpush1.xpose.msra.mxu0 0.0
      %1632 = vmatprep.subr.mxu0 0.0
      %1633 = vmatpush1.xpose.msra.mxu0 0.0
      %1634 = vmatprep.subr.mxu0 0.0
      %1635 = vmatpush1.xpose.msra.mxu0 0.0
      %1636 = vmatprep.subr.mxu0 0.0
      %1637 = vmatpush1.xpose.msra.mxu0 0.0
      %1638 = vmatprep.subr.mxu0 0.0
      %1639 = vmatpush1.xpose.msra.mxu0 0.0
      %1640 = vmatprep.subr.mxu0 0.0
      %1641 = vmatpush1.xpose.msra.mxu0 0.0
      %1642 = vmatprep.subr.mxu0 0.0
      %1643 = vmatpush1.xpose.msra.mxu0 0.0
      %1644 = vmatprep.subr.mxu0 0.0
      %1645 = vmatpush1.xpose.msra.mxu0 0.0
      %1646 = vmatprep.subr.mxu0 0.0
      %1647 = vmatpush1.xpose.msra.mxu0 0.0
      %1648 = vmatprep.subr.mxu0 0.0
      %1649 = vmatpush1.xpose.msra.mxu0 0.0
      %1650 = vmatprep.subr.mxu0 0.0
      %1651 = vmatpush1.xpose.msra.mxu0 0.0
      %1652 = vmatprep.subr.mxu0 0.0
      %1653 = vmatpush1.xpose.msra.mxu0 0.0
      %1654 = vmatprep.subr.mxu0 0.0
      %1655 = vmatpush1.xpose.msra.mxu0 0.0
      %1656 = vmatprep.subr.mxu0 0.0
      %1657 = vmatpush1.xpose.msra.mxu0 %v1624
      %1658 = vmatprep.subr.mxu0 0.0
      %1659 = vmatpush2.xpose.msra.mxu0 0.0
      %1660 = vmatprep.subr.mxu0 0.0
      %1661 = vmatpush2.xpose.msra.mxu0 0.0
      %1662 = vmatprep.subr.mxu0 0.0
      %1663 = vmatpush2.xpose.msra.mxu0 0.0
      %1664 = vmatprep.subr.mxu0 0.0
      %1665 = vmatpush2.xpose.msra.mxu0 0.0
      %1666 = vmatprep.subr.mxu0 0.0
      %1667 = vmatpush2.xpose.msra.mxu0 0.0
      %1668 = vmatprep.subr.mxu0 0.0
      %1669 = vmatpush2.xpose.msra.mxu0 0.0
      %1670 = vmatprep.subr.mxu0 0.0
      %1671 = vmatpush2.xpose.msra.mxu0 0.0
      %1672 = vmatprep.subr.mxu0 0.0
      %1673 = vmatpush2.xpose.msra.mxu0 0.0
      %1674 = vmatprep.subr.mxu0 0.0
      %1675 = vmatpush2.xpose.msra.mxu0 0.0
      %1676 = vmatprep.subr.mxu0 0.0
      %1677 = vmatpush2.xpose.msra.mxu0 0.0
      %1678 = vmatprep.subr.mxu0 0.0
      %1679 = vmatpush2.xpose.msra.mxu0 0.0
      %1680 = vmatprep.subr.mxu0 0.0
      %1681 = vmatpush2.xpose.msra.mxu0 0.0
      %1682 = vmatprep.subr.mxu0 0.0
      %1683 = vmatpush2.xpose.msra.mxu0 0.0
      %1684 = vmatprep.subr.mxu0 0.0
      %1685 = vmatpush2.xpose.msra.mxu0 0.0
      %1686 = vmatprep.subr.mxu0 0.0
      %1687 = vmatpush2.xpose.msra.mxu0 0.0
      %1688 = vmatprep.subr.mxu0 0.0
      %1689 = vmatpush2.xpose.msra.mxu0 0.0
      %1690 = vmatprep.mubr.f32.mxu0 0.0
      %1691 = vmatmul.mubr.f32.gmra.mxu0 %v1622
      %v1692 = vpop.f32.mrf.mxu0
      %v1693 = vadd.f32 0.0, %v1692
      %v1694 = vpop.f32.mrf.mxu0
      %1695 = vdwg.mxu0
      %v1696 = vmul.f32 %v1693, 0.35355338
      %v1697 = vsel %vm890, %v1696, -inf
      %1698 = vmax.xlane.f32.xlu0 %v1697
      %v1699 = vpop.xlane.xlu0 %1698
      %v1700 = vsub.f32 %v1696, %v1699
      %v1701 = vmul.f32 %v1700, 1.442695
      %v1702 = vpow.pop %v1701
      %v1703 = vsel %vm890, %v1702, 0.0
      %1704 = vadd.xlane.f32.xlu0 %v1703
      %v1705 = vpop.xlane.xlu0 %1704
      %v1706 = vrcp.pop %v1705
      %v1707 = vmul.f32 %v1702, %v1706
      %1708 = vrot.lane.b32.xlu0 %v883, 40
      %v1709 = vpop.permute.xlu0 %1708
      %v1712 = vsel %vm890, %v1707, 0
      %1714 = vmatprep.subr.mxu0 0.0
      %1715 = vmatpush1.msra.mxu0 0.0
      %1716 = vmatprep.subr.mxu0 0.0
      %1717 = vmatpush1.msra.mxu0 0.0
      %1718 = vmatprep.subr.mxu0 0.0
      %1719 = vmatpush1.msra.mxu0 0.0
      %1720 = vmatprep.subr.mxu0 0.0
      %1721 = vmatpush1.msra.mxu0 0.0
      %1722 = vmatprep.subr.mxu0 0.0
      %1723 = vmatpush1.msra.mxu0 0.0
      %1724 = vmatprep.subr.mxu0 0.0
      %1725 = vmatpush1.msra.mxu0 0.0
      %1726 = vmatprep.subr.mxu0 0.0
      %1727 = vmatpush1.msra.mxu0 0.0
      %1728 = vmatprep.subr.mxu0 0.0
      %1729 = vmatpush1.msra.mxu0 0.0
      %1730 = vmatprep.subr.mxu0 0.0
      %1731 = vmatpush1.msra.mxu0 0.0
      %1732 = vmatprep.subr.mxu0 0.0
      %1733 = vmatpush1.msra.mxu0 0.0
      %1734 = vmatprep.subr.mxu0 0.0
      %1735 = vmatpush1.msra.mxu0 0.0
      %1736 = vmatprep.subr.mxu0 0.0
      %1737 = vmatpush1.msra.mxu0 0.0
      %1738 = vmatprep.subr.mxu0 0.0
      %1739 = vmatpush1.msra.mxu0 0.0
      %1740 = vmatprep.subr.mxu0 0.0
      %1741 = vmatpush1.msra.mxu0 0.0
      %1742 = vmatprep.subr.mxu0 0.0
      %1743 = vmatpush1.msra.mxu0 0.0
      %1744 = vmatprep.subr.mxu0 0.0
      %1745 = vmatpush1.msra.mxu0 %v1709
      %1746 = vmatprep.subr.mxu0 0.0
      %1747 = vmatpush2.msra.mxu0 0.0
      %1748 = vmatprep.subr.mxu0 0.0
      %1749 = vmatpush2.msra.mxu0 0.0
      %1750 = vmatprep.subr.mxu0 0.0
      %1751 = vmatpush2.msra.mxu0 0.0
      %1752 = vmatprep.subr.mxu0 0.0
      %1753 = vmatpush2.msra.mxu0 0.0
      %1754 = vmatprep.subr.mxu0 0.0
      %1755 = vmatpush2.msra.mxu0 0.0
      %1756 = vmatprep.subr.mxu0 0.0
      %1757 = vmatpush2.msra.mxu0 0.0
      %1758 = vmatprep.subr.mxu0 0.0
      %1759 = vmatpush2.msra.mxu0 0.0
      %1760 = vmatprep.subr.mxu0 0.0
      %1761 = vmatpush2.msra.mxu0 0.0
      %1762 = vmatprep.subr.mxu0 0.0
      %1763 = vmatpush2.msra.mxu0 0.0
      %1764 = vmatprep.subr.mxu0 0.0
      %1765 = vmatpush2.msra.mxu0 0.0
      %1766 = vmatprep.subr.mxu0 0.0
      %1767 = vmatpush2.msra.mxu0 0.0
      %1768 = vmatprep.subr.mxu0 0.0
      %1769 = vmatpush2.msra.mxu0 0.0
      %1770 = vmatprep.subr.mxu0 0.0
      %1771 = vmatpush2.msra.mxu0 0.0
      %1772 = vmatprep.subr.mxu0 0.0
      %1773 = vmatpush2.msra.mxu0 0.0
      %1774 = vmatprep.subr.mxu0 0.0
      %1775 = vmatpush2.msra.mxu0 0.0
      %1776 = vmatprep.subr.mxu0 0.0
      %1777 = vmatpush2.msra.mxu0 0.0
      %1778 = vmatprep.mubr.f32.mxu0 0.0
      %1779 = vmatmul.mubr.f32.gmra.mxu0 %v1712
      %v1780 = vpop.f32.mrf.mxu0
      %v1781 = vadd.f32 0.0, %v1780
      %v1782 = vpop.f32.mrf.mxu0
      %1783 = vdwg.mxu0
      %s1784 = scalar_lea.vmem %s10, 24
      %v1785 = vld [vmem:[%s1784] sm:$0xff]
      %v1787 = vsel %vm890, %v1781, 0
      %1789 = vmatprep.subr.mxu0 0.0
      %1790 = vmatpush1.msra.mxu0 0.0
      %1791 = vmatprep.subr.mxu0 0.0
      %1792 = vmatpush1.msra.mxu0 0.0
      %1793 = vmatprep.subr.mxu0 0.0
      %1794 = vmatpush1.msra.mxu0 0.0
      %1795 = vmatprep.subr.mxu0 0.0
      %1796 = vmatpush1.msra.mxu0 0.0
      %1797 = vmatprep.subr.mxu0 0.0
      %1798 = vmatpush1.msra.mxu0 0.0
      %1799 = vmatprep.subr.mxu0 0.0
      %1800 = vmatpush1.msra.mxu0 0.0
      %1801 = vmatprep.subr.mxu0 0.0
      %1802 = vmatpush1.msra.mxu0 0.0
      %1803 = vmatprep.subr.mxu0 0.0
      %1804 = vmatpush1.msra.mxu0 0.0
      %1805 = vmatprep.subr.mxu0 0.0
      %1806 = vmatpush1.msra.mxu0 0.0
      %1807 = vmatprep.subr.mxu0 0.0
      %1808 = vmatpush1.msra.mxu0 0.0
      %1809 = vmatprep.subr.mxu0 0.0
      %1810 = vmatpush1.msra.mxu0 0.0
      %1811 = vmatprep.subr.mxu0 0.0
      %1812 = vmatpush1.msra.mxu0 0.0
      %1813 = vmatprep.subr.mxu0 0.0
      %1814 = vmatpush1.msra.mxu0 0.0
      %1815 = vmatprep.subr.mxu0 0.0
      %1816 = vmatpush1.msra.mxu0 0.0
      %1817 = vmatprep.subr.mxu0 0.0
      %1818 = vmatpush1.msra.mxu0 0.0
      %1819 = vmatprep.subr.mxu0 0.0
      %1820 = vmatpush1.msra.mxu0 %v1785
      %1821 = vmatprep.subr.mxu0 0.0
      %1822 = vmatpush2.msra.mxu0 0.0
      %1823 = vmatprep.subr.mxu0 0.0
      %1824 = vmatpush2.msra.mxu0 0.0
      %1825 = vmatprep.subr.mxu0 0.0
      %1826 = vmatpush2.msra.mxu0 0.0
      %1827 = vmatprep.subr.mxu0 0.0
      %1828 = vmatpush2.msra.mxu0 0.0
      %1829 = vmatprep.subr.mxu0 0.0
      %1830 = vmatpush2.msra.mxu0 0.0
      %1831 = vmatprep.subr.mxu0 0.0
      %1832 = vmatpush2.msra.mxu0 0.0
      %1833 = vmatprep.subr.mxu0 0.0
      %1834 = vmatpush2.msra.mxu0 0.0
      %1835 = vmatprep.subr.mxu0 0.0
      %1836 = vmatpush2.msra.mxu0 0.0
      %1837 = vmatprep.subr.mxu0 0.0
      %1838 = vmatpush2.msra.mxu0 0.0
      %1839 = vmatprep.subr.mxu0 0.0
      %1840 = vmatpush2.msra.mxu0 0.0
      %1841 = vmatprep.subr.mxu0 0.0
      %1842 = vmatpush2.msra.mxu0 0.0
      %1843 = vmatprep.subr.mxu0 0.0
      %1844 = vmatpush2.msra.mxu0 0.0
      %1845 = vmatprep.subr.mxu0 0.0
      %1846 = vmatpush2.msra.mxu0 0.0
      %1847 = vmatprep.subr.mxu0 0.0
      %1848 = vmatpush2.msra.mxu0 0.0
      %1849 = vmatprep.subr.mxu0 0.0
      %1850 = vmatpush2.msra.mxu0 0.0
      %1851 = vmatprep.subr.mxu0 0.0
      %1852 = vmatpush2.msra.mxu0 0.0
      %1853 = vmatprep.mubr.f32.mxu0 0.0
      %1854 = vmatmul.mubr.f32.gmra.mxu0 %v1787
      %v1855 = vpop.f32.mrf.mxu0
      %v1856 = vadd.f32 0.0, %v1855
      %v1857 = vpop.f32.mrf.mxu0
      %1858 = vdwg.mxu0
      %v1859 = vadd.f32 %v1617, %v1856
      %v1860 = vadd.f32 %v801, %v1859
      %v1861 = vld [vmem:[%s12] sm:$0x1]
      %v1862 = vld [vmem:[%s13] sm:$0x1]
      %v1863 = vsel %vm773, %v1860, 0.0
      %1864 = vadd.xlane.f32.xlu0 %v1863
      %v1865 = vpop.xlane.xlu0 %1864
      %v1866 = vmul.f32 %v1865, %v777
      %v1867 = vsub.f32 %v1860, %v1866
      %v1868 = vmul.f32 %v1867, %v1867
      %v1869 = vsel %vm773, %v1868, 0.0
      %1870 = vadd.xlane.f32.xlu0 %v1869
      %v1871 = vpop.xlane.xlu0 %1870
      %v1872 = vmul.f32 %v1871, %v777
      %v1873 = vadd.f32 %v1872, 1e-12
      %v1874 = vrsqrt.pop %v1873
      %v1875 = vmul.f32 %v1867, %v1874
      %v1877 = vlaneseq
      %v1878 = vshrl.u32 %v1877, 7
      %v1879 = vsub.s32 0, %v1878
      %v1880 = vrot.slane %v1861, %v1879
      %v1882 = vmul.f32 %v1875, %v1880
      %v1884 = vlaneseq
      %v1885 = vshrl.u32 %v1884, 7
      %v1886 = vsub.s32 0, %v1885
      %v1887 = vrot.slane %v1862, %v1886
      %v1889 = vadd.f32 %v1882, %v1887
      %v1890 = vld [vmem:[%s14] sm:$0xff]
      %v1891 = vld [vmem:[%s14 + $0x8] sm:$0xff]
      %v1892 = vld [vmem:[%s14 + $0x10] sm:$0xff]
      %v1893 = vld [vmem:[%s14 + $0x18] sm:$0xff]
      %v1894 = vld [vmem:[%s15] sm:$0x1]
      %v1896 = vlaneseq
      %v1897 = vshrl.u32 %v1896, 7
      %v1898 = vsub.s32 0, %v1897
      %v1899 = vrot.slane %v1894, %v1898
      %v1902 = vsel %vm773, %v1889, 0
      %1904 = vmatprep.subr.mxu0 0.0
      %1905 = vmatpush1.msra.mxu0 0.0
      %1906 = vmatprep.subr.mxu0 0.0
      %1907 = vmatpush1.msra.mxu0 0.0
      %1908 = vmatprep.subr.mxu0 0.0
      %1909 = vmatpush1.msra.mxu0 0.0
      %1910 = vmatprep.subr.mxu0 0.0
      %1911 = vmatpush1.msra.mxu0 0.0
      %1912 = vmatprep.subr.mxu0 0.0
      %1913 = vmatpush1.msra.mxu0 0.0
      %1914 = vmatprep.subr.mxu0 0.0
      %1915 = vmatpush1.msra.mxu0 0.0
      %1916 = vmatprep.subr.mxu0 0.0
      %1917 = vmatpush1.msra.mxu0 0.0
      %1918 = vmatprep.subr.mxu0 0.0
      %1919 = vmatpush1.msra.mxu0 0.0
      %1920 = vmatprep.subr.mxu0 0.0
      %1921 = vmatpush1.msra.mxu0 0.0
      %1922 = vmatprep.subr.mxu0 0.0
      %1923 = vmatpush1.msra.mxu0 0.0
      %1924 = vmatprep.subr.mxu0 0.0
      %1925 = vmatpush1.msra.mxu0 0.0
      %1926 = vmatprep.subr.mxu0 0.0
      %1927 = vmatpush1.msra.mxu0 0.0
      %1928 = vmatprep.subr.mxu0 0.0
      %1929 = vmatpush1.msra.mxu0 %v1893
      %1930 = vmatprep.subr.mxu0 0.0
      %1931 = vmatpush1.msra.mxu0 %v1892
      %1932 = vmatprep.subr.mxu0 0.0
      %1933 = vmatpush1.msra.mxu0 %v1891
      %1934 = vmatprep.subr.mxu0 0.0
      %1935 = vmatpush1.msra.mxu0 %v1890
      %1936 = vmatprep.subr.mxu0 0.0
      %1937 = vmatpush2.msra.mxu0 0.0
      %1938 = vmatprep.subr.mxu0 0.0
      %1939 = vmatpush2.msra.mxu0 0.0
      %1940 = vmatprep.subr.mxu0 0.0
      %1941 = vmatpush2.msra.mxu0 0.0
      %1942 = vmatprep.subr.mxu0 0.0
      %1943 = vmatpush2.msra.mxu0 0.0
      %1944 = vmatprep.subr.mxu0 0.0
      %1945 = vmatpush2.msra.mxu0 0.0
      %1946 = vmatprep.subr.mxu0 0.0
      %1947 = vmatpush2.msra.mxu0 0.0
      %1948 = vmatprep.subr.mxu0 0.0
      %1949 = vmatpush2.msra.mxu0 0.0
      %1950 = vmatprep.subr.mxu0 0.0
      %1951 = vmatpush2.msra.mxu0 0.0
      %1952 = vmatprep.subr.mxu0 0.0
      %1953 = vmatpush2.msra.mxu0 0.0
      %1954 = vmatprep.subr.mxu0 0.0
      %1955 = vmatpush2.msra.mxu0 0.0
      %1956 = vmatprep.subr.mxu0 0.0
      %1957 = vmatpush2.msra.mxu0 0.0
      %1958 = vmatprep.subr.mxu0 0.0
      %1959 = vmatpush2.msra.mxu0 0.0
      %1960 = vmatprep.subr.mxu0 0.0
      %1961 = vmatpush2.msra.mxu0 0.0
      %1962 = vmatprep.subr.mxu0 0.0
      %1963 = vmatpush2.msra.mxu0 0.0
      %1964 = vmatprep.subr.mxu0 0.0
      %1965 = vmatpush2.msra.mxu0 0.0
      %1966 = vmatprep.subr.mxu0 0.0
      %1967 = vmatpush2.msra.mxu0 0.0
      %1968 = vmatprep.mubr.f32.mxu0 0.0
      %1969 = vmatmul.mubr.f32.gmra.mxu0 %v1902
      %v1970 = vpop.f32.mrf.mxu0
      %v1971 = vadd.f32 %v1899, %v1970
      %v1972 = vpop.f32.mrf.mxu0
      %1973 = vdwg.mxu0
      %v1974 = vmul.f32 %v1971, 0.5
      %v1975 = vmul.f32 %v1971, 0.044715
      %v1976 = vmul.f32 %v1975, %v1971
      %v1977 = vmul.f32 %v1976, %v1971
      %v1978 = vadd.f32 %v1971, %v1977
      %v1979 = vmul.f32 %v1978, 0.7978846
      %v1980 = vtanh.pop %v1979
      %v1981 = vadd.f32 %v1980, 1.0
      %v1982 = vmul.f32 %v1974, %v1981
      %v1983 = vld [vmem:[%s16] sm:$0xff]
      %v1984 = vld [vmem:[%s16 + $0x8] sm:$0xff]
      %v1985 = vld [vmem:[%s16 + $0x10] sm:$0xff]
      %v1986 = vld [vmem:[%s16 + $0x18] sm:$0xff]
      %v1987 = vld [vmem:[%s16 + $0x20] sm:$0xff]
      %v1988 = vld [vmem:[%s16 + $0x28] sm:$0xff]
      %v1989 = vld [vmem:[%s16 + $0x30] sm:$0xff]
      %v1990 = vld [vmem:[%s16 + $0x38] sm:$0xff]
      %v1991 = vld [vmem:[%s17] sm:$0x1]
      %v1993 = vlaneseq
      %v1994 = vshrl.u32 %v1993, 7
      %v1995 = vsub.s32 0, %v1994
      %v1996 = vrot.slane %v1991, %v1995
      %vm1998 = vcmask 523264
      %v2000 = vsel %vm1998, %v1982, 0
      %2002 = vmatprep.subr.mxu0 0.0
      %2003 = vmatpush1.msra.mxu0 0.0
      %2004 = vmatprep.subr.mxu0 0.0
      %2005 = vmatpush1.msra.mxu0 0.0
      %2006 = vmatprep.subr.mxu0 0.0
      %2007 = vmatpush1.msra.mxu0 0.0
      %2008 = vmatprep.subr.mxu0 0.0
      %2009 = vmatpush1.msra.mxu0 0.0
      %2010 = vmatprep.subr.mxu0 0.0
      %2011 = vmatpush1.msra.mxu0 0.0
      %2012 = vmatprep.subr.mxu0 0.0
      %2013 = vmatpush1.msra.mxu0 0.0
      %2014 = vmatprep.subr.mxu0 0.0
      %2015 = vmatpush1.msra.mxu0 0.0
      %2016 = vmatprep.subr.mxu0 0.0
      %2017 = vmatpush1.msra.mxu0 0.0
      %2018 = vmatprep.subr.mxu0 0.0
      %2019 = vmatpush1.msra.mxu0 %v1990
      %2020 = vmatprep.subr.mxu0 0.0
      %2021 = vmatpush1.msra.mxu0 %v1989
      %2022 = vmatprep.subr.mxu0 0.0
      %2023 = vmatpush1.msra.mxu0 %v1988
      %2024 = vmatprep.subr.mxu0 0.0
      %2025 = vmatpush1.msra.mxu0 %v1987
      %2026 = vmatprep.subr.mxu0 0.0
      %2027 = vmatpush1.msra.mxu0 %v1986
      %2028 = vmatprep.subr.mxu0 0.0
      %2029 = vmatpush1.msra.mxu0 %v1985
      %2030 = vmatprep.subr.mxu0 0.0
      %2031 = vmatpush1.msra.mxu0 %v1984
      %2032 = vmatprep.subr.mxu0 0.0
      %2033 = vmatpush1.msra.mxu0 %v1983
      %2034 = vmatprep.subr.mxu0 0.0
      %2035 = vmatpush2.msra.mxu0 0.0
      %2036 = vmatprep.subr.mxu0 0.0
      %2037 = vmatpush2.msra.mxu0 0.0
      %2038 = vmatprep.subr.mxu0 0.0
      %2039 = vmatpush2.msra.mxu0 0.0
      %2040 = vmatprep.subr.mxu0 0.0
      %2041 = vmatpush2.msra.mxu0 0.0
      %2042 = vmatprep.subr.mxu0 0.0
      %2043 = vmatpush2.msra.mxu0 0.0
      %2044 = vmatprep.subr.mxu0 0.0
      %2045 = vmatpush2.msra.mxu0 0.0
      %2046 = vmatprep.subr.mxu0 0.0
      %2047 = vmatpush2.msra.mxu0 0.0
      %2048 = vmatprep.subr.mxu0 0.0
      %2049 = vmatpush2.msra.mxu0 0.0
      %2050 = vmatprep.subr.mxu0 0.0
      %2051 = vmatpush2.msra.mxu0 0.0
      %2052 = vmatprep.subr.mxu0 0.0
      %2053 = vmatpush2.msra.mxu0 0.0
      %2054 = vmatprep.subr.mxu0 0.0
      %2055 = vmatpush2.msra.mxu0 0.0
      %2056 = vmatprep.subr.mxu0 0.0
      %2057 = vmatpush2.msra.mxu0 0.0
      %2058 = vmatprep.subr.mxu0 0.0
      %2059 = vmatpush2.msra.mxu0 0.0
      %2060 = vmatprep.subr.mxu0 0.0
      %2061 = vmatpush2.msra.mxu0 0.0
      %2062 = vmatprep.subr.mxu0 0.0
      %2063 = vmatpush2.msra.mxu0 0.0
      %2064 = vmatprep.subr.mxu0 0.0
      %2065 = vmatpush2.msra.mxu0 0.0
      %2066 = vmatprep.mubr.f32.mxu0 0.0
      %2067 = vmatmul.mubr.f32.gmra.mxu0 %v2000
      %v2068 = vpop.f32.mrf.mxu0
      %v2069 = vadd.f32 %v1996, %v2068
      %v2070 = vpop.f32.mrf.mxu0
      %2071 = vdwg.mxu0
      %v2072 = vadd.f32 %v1889, %v2069
      %v2073 = vld [vmem:[%s18] sm:$0x1]
      %v2074 = vld [vmem:[%s19] sm:$0x1]
      %v2075 = vsel %vm773, %v2072, 0.0
      %2076 = vadd.xlane.f32.xlu0 %v2075
      %v2077 = vpop.xlane.xlu0 %2076
      %v2078 = vmul.f32 %v2077, %v777
      %v2079 = vsub.f32 %v2072, %v2078
      %v2080 = vmul.f32 %v2079, %v2079
      %v2081 = vsel %vm773, %v2080, 0.0
      %2082 = vadd.xlane.f32.xlu0 %v2081
      %v2083 = vpop.xlane.xlu0 %2082
      %v2084 = vmul.f32 %v2083, %v777
      %v2085 = vadd.f32 %v2084, 1e-12
      %v2086 = vrsqrt.pop %v2085
      %v2087 = vmul.f32 %v2079, %v2086
      %v2089 = vlaneseq
      %v2090 = vshrl.u32 %v2089, 7
      %v2091 = vsub.s32 0, %v2090
      %v2092 = vrot.slane %v2073, %v2091
      %v2094 = vmul.f32 %v2087, %v2092
      %v2096 = vlaneseq
      %v2097 = vshrl.u32 %v2096, 7
      %v2098 = vsub.s32 0, %v2097
      %v2099 = vrot.slane %v2074, %v2098
      %v2101 = vadd.f32 %v2094, %v2099
      %s2102 = scalar_lea.vmem %s8, 32
      %v2103 = vld [vmem:[%s2102] sm:$0xff]
      %v2104 = vld [vmem:[%s2102 + $0x8] sm:$0xff]
      %v2105 = vld [vmem:[%s2102 + $0x10] sm:$0xff]
      %v2106 = vld [vmem:[%s2102 + $0x18] sm:$0xff]
      %s2107 = scalar_lea.vmem %s9, 1
      %v2108 = vld [vmem:[%s2107] sm:$0x1]
      %v2110 = vlaneseq
      %v2111 = vshrl.u32 %v2110, 7
      %v2112 = vsub.s32 0, %v2111
      %v2113 = vrot.slane %v2108, %v2112
      %v2116 = vsel %vm773, %v2101, 0
      %2118 = vmatprep.subr.mxu0 0.0
      %2119 = vmatpush1.msra.mxu0 0.0
      %2120 = vmatprep.subr.mxu0 0.0
      %2121 = vmatpush1.msra.mxu0 0.0
      %2122 = vmatprep.subr.mxu0 0.0
      %2123 = vmatpush1.msra.mxu0 0.0
      %2124 = vmatprep.subr.mxu0 0.0
      %2125 = vmatpush1.msra.mxu0 0.0
      %2126 = vmatprep.subr.mxu0 0.0
      %2127 = vmatpush1.msra.mxu0 0.0
      %2128 = vmatprep.subr.mxu0 0.0
      %2129 = vmatpush1.msra.mxu0 0.0
      %2130 = vmatprep.subr.mxu0 0.0
      %2131 = vmatpush1.msra.mxu0 0.0
      %2132 = vmatprep.subr.mxu0 0.0
      %2133 = vmatpush1.msra.mxu0 0.0
      %2134 = vmatprep.subr.mxu0 0.0
      %2135 = vmatpush1.msra.mxu0 0.0
      %2136 = vmatprep.subr.mxu0 0.0
      %2137 = vmatpush1.msra.mxu0 0.0
      %2138 = vmatprep.subr.mxu0 0.0
      %2139 = vmatpush1.msra.mxu0 0.0
      %2140 = vmatprep.subr.mxu0 0.0
      %2141 = vmatpush1.msra.mxu0 0.0
      %2142 = vmatprep.subr.mxu0 0.0
      %2143 = vmatpush1.msra.mxu0 %v2106
      %2144 = vmatprep.subr.mxu0 0.0
      %2145 = vmatpush1.msra.mxu0 %v2105
      %2146 = vmatprep.subr.mxu0 0.0
      %2147 = vmatpush1.msra.mxu0 %v2104
      %2148 = vmatprep.subr.mxu0 0.0
      %2149 = vmatpush1.msra.mxu0 %v2103
      %2150 = vmatprep.subr.mxu0 0.0
      %2151 = vmatpush2.msra.mxu0 0.0
      %2152 = vmatprep.subr.mxu0 0.0
      %2153 = vmatpush2.msra.mxu0 0.0
      %2154 = vmatprep.subr.mxu0 0.0
      %2155 = vmatpush2.msra.mxu0 0.0
      %2156 = vmatprep.subr.mxu0 0.0
      %2157 = vmatpush2.msra.mxu0 0.0
      %2158 = vmatprep.subr.mxu0 0.0
      %2159 = vmatpush2.msra.mxu0 0.0
      %2160 = vmatprep.subr.mxu0 0.0
      %2161 = vmatpush2.msra.mxu0 0.0
      %2162 = vmatprep.subr.mxu0 0.0
      %2163 = vmatpush2.msra.mxu0 0.0
      %2164 = vmatprep.subr.mxu0 0.0
      %2165 = vmatpush2.msra.mxu0 0.0
      %2166 = vmatprep.subr.mxu0 0.0
      %2167 = vmatpush2.msra.mxu0 0.0
      %2168 = vmatprep.subr.mxu0 0.0
      %2169 = vmatpush2.msra.mxu0 0.0
      %2170 = vmatprep.subr.mxu0 0.0
      %2171 = vmatpush2.msra.mxu0 0.0
      %2172 = vmatprep.subr.mxu0 0.0
      %2173 = vmatpush2.msra.mxu0 0.0
      %2174 = vmatprep.subr.mxu0 0.0
      %2175 = vmatpush2.msra.mxu0 0.0
      %2176 = vmatprep.subr.mxu0 0.0
      %2177 = vmatpush2.msra.mxu0 0.0
      %2178 = vmatprep.subr.mxu0 0.0
      %2179 = vmatpush2.msra.mxu0 0.0
      %2180 = vmatprep.subr.mxu0 0.0
      %2181 = vmatpush2.msra.mxu0 0.0
      %2182 = vmatprep.mubr.f32.mxu0 0.0
      %2183 = vmatmul.mubr.f32.gmra.mxu0 %v2116
      %v2184 = vpop.f32.mrf.mxu0
      %v2185 = vadd.f32 %v2113, %v2184
      %v2186 = vpop.f32.mrf.mxu0
      %2187 = vdwg.mxu0
      %s2188 = scalar_lea.vmem %s11, 1
      %v2189 = vld [vmem:[%s2188] sm:$0x1]
      %2191 = vrot.lane.b32.xlu0 %v2185, 96
      %v2192 = vpop.permute.xlu0 %2191
      %v2193 = vsel %vm890, %v2185, 0
      %v2195 = vsel %vm890, %v2192, 0
      %2197 = vmatprep.subr.mxu0 0.0
      %2198 = vmatpush1.xpose.msra.mxu0 0.0
      %2199 = vmatprep.subr.mxu0 0.0
      %2200 = vmatpush1.xpose.msra.mxu0 0.0
      %2201 = vmatprep.subr.mxu0 0.0
      %2202 = vmatpush1.xpose.msra.mxu0 0.0
      %2203 = vmatprep.subr.mxu0 0.0
      %2204 = vmatpush1.xpose.msra.mxu0 0.0
      %2205 = vmatprep.subr.mxu0 0.0
      %2206 = vmatpush1.xpose.msra.mxu0 0.0
      %2207 = vmatprep.subr.mxu0 0.0
      %2208 = vmatpush1.xpose.msra.mxu0 0.0
      %2209 = vmatprep.subr.mxu0 0.0
      %2210 = vmatpush1.xpose.msra.mxu0 0.0
      %2211 = vmatprep.subr.mxu0 0.0
      %2212 = vmatpush1.xpose.msra.mxu0 0.0
      %2213 = vmatprep.subr.mxu0 0.0
      %2214 = vmatpush1.xpose.msra.mxu0 0.0
      %2215 = vmatprep.subr.mxu0 0.0
      %2216 = vmatpush1.xpose.msra.mxu0 0.0
      %2217 = vmatprep.subr.mxu0 0.0
      %2218 = vmatpush1.xpose.msra.mxu0 0.0
      %2219 = vmatprep.subr.mxu0 0.0
      %2220 = vmatpush1.xpose.msra.mxu0 0.0
      %2221 = vmatprep.subr.mxu0 0.0
      %2222 = vmatpush1.xpose.msra.mxu0 0.0
      %2223 = vmatprep.subr.mxu0 0.0
      %2224 = vmatpush1.xpose.msra.mxu0 0.0
      %2225 = vmatprep.subr.mxu0 0.0
      %2226 = vmatpush1.xpose.msra.mxu0 0.0
      %2227 = vmatprep.subr.mxu0 0.0
      %2228 = vmatpush1.xpose.msra.mxu0 %v2195
      %2229 = vmatprep.subr.mxu0 0.0
      %2230 = vmatpush2.xpose.msra.mxu0 0.0
      %2231 = vmatprep.subr.mxu0 0.0
      %2232 = vmatpush2.xpose.msra.mxu0 0.0
      %2233 = vmatprep.subr.mxu0 0.0
      %2234 = vmatpush2.xpose.msra.mxu0 0.0
      %2235 = vmatprep.subr.mxu0 0.0
      %2236 = vmatpush2.xpose.msra.mxu0 0.0
      %2237 = vmatprep.subr.mxu0 0.0
      %2238 = vmatpush2.xpose.msra.mxu0 0.0
      %2239 = vmatprep.subr.mxu0 0.0
      %2240 = vmatpush2.xpose.msra.mxu0 0.0
      %2241 = vmatprep.subr.mxu0 0.0
      %2242 = vmatpush2.xpose.msra.mxu0 0.0
      %2243 = vmatprep.subr.mxu0 0.0
      %2244 = vmatpush2.xpose.msra.mxu0 0.0
      %2245 = vmatprep.subr.mxu0 0.0
      %2246 = vmatpush2.xpose.msra.mxu0 0.0
      %2247 = vmatprep.subr.mxu0 0.0
      %2248 = vmatpush2.xpose.msra.mxu0 0.0
      %2249 = vmatprep.subr.mxu0 0.0
      %2250 = vmatpush2.xpose.msra.mxu0 0.0
      %2251 = vmatprep.subr.mxu0 0.0
      %2252 = vmatpush2.xpose.msra.mxu0 0.0
      %2253 = vmatprep.subr.mxu0 0.0
      %2254 = vmatpush2.xpose.msra.mxu0 0.0
      %2255 = vmatprep.subr.mxu0 0.0
      %2256 = vmatpush2.xpose.msra.mxu0 0.0
      %2257 = vmatprep.subr.mxu0 0.0
      %2258 = vmatpush2.xpose.msra.mxu0 0.0
      %2259 = vmatprep.subr.mxu0 0.0
      %2260 = vmatpush2.xpose.msra.mxu0 0.0
      %2261 = vmatprep.mubr.f32.mxu0 0.0
      %2262 = vmatmul.mubr.f32.gmra.mxu0 %v2193
      %v2263 = vpop.f32.mrf.mxu0
      %v2264 = vadd.f32 0.0, %v2263
      %v2265 = vpop.f32.mrf.mxu0
      %2266 = vdwg.mxu0
      %v2267 = vmul.f32 %v2264, 0.35355338
      %v2268 = vsel %vm890, %v2267, -inf
      %2269 = vmax.xlane.f32.xlu0 %v2268
      %v2270 = vpop.xlane.xlu0 %2269
      %v2271 = vsub.f32 %v2267, %v2270
      %v2272 = vmul.f32 %v2271, 1.442695
      %v2273 = vpow.pop %v2272
      %v2274 = vsel %vm890, %v2273, 0.0
      %2275 = vadd.xlane.f32.xlu0 %v2274
      %v2276 = vpop.xlane.xlu0 %2275
      %v2277 = vrcp.pop %v2276
      %v2278 = vmul.f32 %v2273, %v2277
      %2279 = vrot.lane.b32.xlu0 %v2185, 64
      %v2280 = vpop.permute.xlu0 %2279
      %v2283 = vsel %vm890, %v2278, 0
      %2285 = vmatprep.subr.mxu0 0.0
      %2286 = vmatpush1.msra.mxu0 0.0
      %2287 = vmatprep.subr.mxu0 0.0
      %2288 = vmatpush1.msra.mxu0 0.0
      %2289 = vmatprep.subr.mxu0 0.0
      %2290 = vmatpush1.msra.mxu0 0.0
      %2291 = vmatprep.subr.mxu0 0.0
      %2292 = vmatpush1.msra.mxu0 0.0
      %2293 = vmatprep.subr.mxu0 0.0
      %2294 = vmatpush1.msra.mxu0 0.0
      %2295 = vmatprep.subr.mxu0 0.0
      %2296 = vmatpush1.msra.mxu0 0.0
      %2297 = vmatprep.subr.mxu0 0.0
      %2298 = vmatpush1.msra.mxu0 0.0
      %2299 = vmatprep.subr.mxu0 0.0
      %2300 = vmatpush1.msra.mxu0 0.0
      %2301 = vmatprep.subr.mxu0 0.0
      %2302 = vmatpush1.msra.mxu0 0.0
      %2303 = vmatprep.subr.mxu0 0.0
      %2304 = vmatpush1.msra.mxu0 0.0
      %2305 = vmatprep.subr.mxu0 0.0
      %2306 = vmatpush1.msra.mxu0 0.0
      %2307 = vmatprep.subr.mxu0 0.0
      %2308 = vmatpush1.msra.mxu0 0.0
      %2309 = vmatprep.subr.mxu0 0.0
      %2310 = vmatpush1.msra.mxu0 0.0
      %2311 = vmatprep.subr.mxu0 0.0
      %2312 = vmatpush1.msra.mxu0 0.0
      %2313 = vmatprep.subr.mxu0 0.0
      %2314 = vmatpush1.msra.mxu0 0.0
      %2315 = vmatprep.subr.mxu0 0.0
      %2316 = vmatpush1.msra.mxu0 %v2280
      %2317 = vmatprep.subr.mxu0 0.0
      %2318 = vmatpush2.msra.mxu0 0.0
      %2319 = vmatprep.subr.mxu0 0.0
      %2320 = vmatpush2.msra.mxu0 0.0
      %2321 = vmatprep.subr.mxu0 0.0
      %2322 = vmatpush2.msra.mxu0 0.0
      %2323 = vmatprep.subr.mxu0 0.0
      %2324 = vmatpush2.msra.mxu0 0.0
      %2325 = vmatprep.subr.mxu0 0.0
      %2326 = vmatpush2.msra.mxu0 0.0
      %2327 = vmatprep.subr.mxu0 0.0
      %2328 = vmatpush2.msra.mxu0 0.0
      %2329 = vmatprep.subr.mxu0 0.0
      %2330 = vmatpush2.msra.mxu0 0.0
      %2331 = vmatprep.subr.mxu0 0.0
      %2332 = vmatpush2.msra.mxu0 0.0
      %2333 = vmatprep.subr.mxu0 0.0
      %2334 = vmatpush2.msra.mxu0 0.0
      %2335 = vmatprep.subr.mxu0 0.0
      %2336 = vmatpush2.msra.mxu0 0.0
      %2337 = vmatprep.subr.mxu0 0.0
      %2338 = vmatpush2.msra.mxu0 0.0
      %2339 = vmatprep.subr.mxu0 0.0
      %2340 = vmatpush2.msra.mxu0 0.0
      %2341 = vmatprep.subr.mxu0 0.0
      %2342 = vmatpush2.msra.mxu0 0.0
      %2343 = vmatprep.subr.mxu0 0.0
      %2344 = vmatpush2.msra.mxu0 0.0
      %2345 = vmatprep.subr.mxu0 0.0
      %2346 = vmatpush2.msra.mxu0 0.0
      %2347 = vmatprep.subr.mxu0 0.0
      %2348 = vmatpush2.msra.mxu0 0.0
      %2349 = vmatprep.mubr.f32.mxu0 0.0
      %2350 = vmatmul.mubr.f32.gmra.mxu0 %v2283
      %v2351 = vpop.f32.mrf.mxu0
      %v2352 = vadd.f32 0.0, %v2351
      %v2353 = vpop.f32.mrf.mxu0
      %2354 = vdwg.mxu0
      %s2355 = scalar_lea.vmem %s10, 32
      %v2356 = vld [vmem:[%s2355] sm:$0xff]
      %v2358 = vsel %vm890, %v2352, 0
      %2360 = vmatprep.subr.mxu0 0.0
      %2361 = vmatpush1.msra.mxu0 0.0
      %2362 = vmatprep.subr.mxu0 0.0
      %2363 = vmatpush1.msra.mxu0 0.0
      %2364 = vmatprep.subr.mxu0 0.0
      %2365 = vmatpush1.msra.mxu0 0.0
      %2366 = vmatprep.subr.mxu0 0.0
      %2367 = vmatpush1.msra.mxu0 0.0
      %2368 = vmatprep.subr.mxu0 0.0
      %2369 = vmatpush1.msra.mxu0 0.0
      %2370 = vmatprep.subr.mxu0 0.0
      %2371 = vmatpush1.msra.mxu0 0.0
      %2372 = vmatprep.subr.mxu0 0.0
      %2373 = vmatpush1.msra.mxu0 0.0
      %2374 = vmatprep.subr.mxu0 0.0
      %2375 = vmatpush1.msra.mxu0 0.0
      %2376 = vmatprep.subr.mxu0 0.0
      %2377 = vmatpush1.msra.mxu0 0.0
      %2378 = vmatprep.subr.mxu0 0.0
      %2379 = vmatpush1.msra.mxu0 0.0
      %2380 = vmatprep.subr.mxu0 0.0
      %2381 = vmatpush1.msra.mxu0 0.0
      %2382 = vmatprep.subr.mxu0 0.0
      %2383 = vmatpush1.msra.mxu0 0.0
      %2384 = vmatprep.subr.mxu0 0.0
      %2385 = vmatpush1.msra.mxu0 0.0
      %2386 = vmatprep.subr.mxu0 0.0
      %2387 = vmatpush1.msra.mxu0 0.0
      %2388 = vmatprep.subr.mxu0 0.0
      %2389 = vmatpush1.msra.mxu0 0.0
      %2390 = vmatprep.subr.mxu0 0.0
      %2391 = vmatpush1.msra.mxu0 %v2356
      %2392 = vmatprep.subr.mxu0 0.0
      %2393 = vmatpush2.msra.mxu0 0.0
      %2394 = vmatprep.subr.mxu0 0.0
      %2395 = vmatpush2.msra.mxu0 0.0
      %2396 = vmatprep.subr.mxu0 0.0
      %2397 = vmatpush2.msra.mxu0 0.0
      %2398 = vmatprep.subr.mxu0 0.0
      %2399 = vmatpush2.msra.mxu0 0.0
      %2400 = vmatprep.subr.mxu0 0.0
      %2401 = vmatpush2.msra.mxu0 0.0
      %2402 = vmatprep.subr.mxu0 0.0
      %2403 = vmatpush2.msra.mxu0 0.0
      %2404 = vmatprep.subr.mxu0 0.0
      %2405 = vmatpush2.msra.mxu0 0.0
      %2406 = vmatprep.subr.mxu0 0.0
      %2407 = vmatpush2.msra.mxu0 0.0
      %2408 = vmatprep.subr.mxu0 0.0
      %2409 = vmatpush2.msra.mxu0 0.0
      %2410 = vmatprep.subr.mxu0 0.0
      %2411 = vmatpush2.msra.mxu0 0.0
      %2412 = vmatprep.subr.mxu0 0.0
      %2413 = vmatpush2.msra.mxu0 0.0
      %2414 = vmatprep.subr.mxu0 0.0
      %2415 = vmatpush2.msra.mxu0 0.0
      %2416 = vmatprep.subr.mxu0 0.0
      %2417 = vmatpush2.msra.mxu0 0.0
      %2418 = vmatprep.subr.mxu0 0.0
      %2419 = vmatpush2.msra.mxu0 0.0
      %2420 = vmatprep.subr.mxu0 0.0
      %2421 = vmatpush2.msra.mxu0 0.0
      %2422 = vmatprep.subr.mxu0 0.0
      %2423 = vmatpush2.msra.mxu0 0.0
      %2424 = vmatprep.mubr.f32.mxu0 0.0
      %2425 = vmatmul.mubr.f32.gmra.mxu0 %v2358
      %v2426 = vpop.f32.mrf.mxu0
      %v2427 = vadd.f32 0.0, %v2426
      %v2428 = vpop.f32.mrf.mxu0
      %2429 = vdwg.mxu0
      %v2431 = vlaneseq
      %v2432 = vshrl.u32 %v2431, 7
      %v2433 = vsub.s32 0, %v2432
      %v2434 = vrot.slane %v2189, %v2433
      %v2436 = vadd.f32 %v2434, %v2427
      %2437 = vrot.lane.b32.xlu0 %v2185, 120
      %v2438 = vpop.permute.xlu0 %2437
      %2439 = vrot.lane.b32.xlu0 %v2185, 88
      %v2440 = vpop.permute.xlu0 %2439
      %v2441 = vsel %vm890, %v2438, 0
      %v2443 = vsel %vm890, %v2440, 0
      %2445 = vmatprep.subr.mxu0 0.0
      %2446 = vmatpush1.xpose.msra.mxu0 0.0
      %2447 = vmatprep.subr.mxu0 0.0
      %2448 = vmatpush1.xpose.msra.mxu0 0.0
      %2449 = vmatprep.subr.mxu0 0.0
      %2450 = vmatpush1.xpose.msra.mxu0 0.0
      %2451 = vmatprep.subr.mxu0 0.0
      %2452 = vmatpush1.xpose.msra.mxu0 0.0
      %2453 = vmatprep.subr.mxu0 0.0
      %2454 = vmatpush1.xpose.msra.mxu0 0.0
      %2455 = vmatprep.subr.mxu0 0.0
      %2456 = vmatpush1.xpose.msra.mxu0 0.0
      %2457 = vmatprep.subr.mxu0 0.0
      %2458 = vmatpush1.xpose.msra.mxu0 0.0
      %2459 = vmatprep.subr.mxu0 0.0
      %2460 = vmatpush1.xpose.msra.mxu0 0.0
      %2461 = vmatprep.subr.mxu0 0.0
      %2462 = vmatpush1.xpose.msra.mxu0 0.0
      %2463 = vmatprep.subr.mxu0 0.0
      %2464 = vmatpush1.xpose.msra.mxu0 0.0
      %2465 = vmatprep.subr.mxu0 0.0
      %2466 = vmatpush1.xpose.msra.mxu0 0.0
      %2467 = vmatprep.subr.mxu0 0.0
      %2468 = vmatpush1.xpose.msra.mxu0 0.0
      %2469 = vmatprep.subr.mxu0 0.0
      %2470 = vmatpush1.xpose.msra.mxu0 0.0
      %2471 = vmatprep.subr.mxu0 0.0
      %2472 = vmatpush1.xpose.msra.mxu0 0.0
      %2473 = vmatprep.subr.mxu0 0.0
      %2474 = vmatpush1.xpose.msra.mxu0 0.0
      %2475 = vmatprep.subr.mxu0 0.0
      %2476 = vmatpush1.xpose.msra.mxu0 %v2443
      %2477 = vmatprep.subr.mxu0 0.0
      %2478 = vmatpush2.xpose.msra.mxu0 0.0
      %2479 = vmatprep.subr.mxu0 0.0
      %2480 = vmatpush2.xpose.msra.mxu0 0.0
      %2481 = vmatprep.subr.mxu0 0.0
      %2482 = vmatpush2.xpose.msra.mxu0 0.0
      %2483 = vmatprep.subr.mxu0 0.0
      %2484 = vmatpush2.xpose.msra.mxu0 0.0
      %2485 = vmatprep.subr.mxu0 0.0
      %2486 = vmatpush2.xpose.msra.mxu0 0.0
      %2487 = vmatprep.subr.mxu0 0.0
      %2488 = vmatpush2.xpose.msra.mxu0 0.0
      %2489 = vmatprep.subr.mxu0 0.0
      %2490 = vmatpush2.xpose.msra.mxu0 0.0
      %2491 = vmatprep.subr.mxu0 0.0
      %2492 = vmatpush2.xpose.msra.mxu0 0.0
      %2493 = vmatprep.subr.mxu0 0.0
      %2494 = vmatpush2.xpose.msra.mxu0 0.0
      %2495 = vmatprep.subr.mxu0 0.0
      %2496 = vmatpush2.xpose.msra.mxu0 0.0
      %2497 = vmatprep.subr.mxu0 0.0
      %2498 = vmatpush2.xpose.msra.mxu0 0.0
      %2499 = vmatprep.subr.mxu0 0.0
      %2500 = vmatpush2.xpose.msra.mxu0 0.0
      %2501 = vmatprep.subr.mxu0 0.0
      %2502 = vmatpush2.xpose.msra.mxu0 0.0
      %2503 = vmatprep.subr.mxu0 0.0
      %2504 = vmatpush2.xpose.msra.mxu0 0.0
      %2505 = vmatprep.subr.mxu0 0.0
      %2506 = vmatpush2.xpose.msra.mxu0 0.0
      %2507 = vmatprep.subr.mxu0 0.0
      %2508 = vmatpush2.xpose.msra.mxu0 0.0
      %2509 = vmatprep.mubr.f32.mxu0 0.0
      %2510 = vmatmul.mubr.f32.gmra.mxu0 %v2441
      %v2511 = vpop.f32.mrf.mxu0
      %v2512 = vadd.f32 0.0, %v2511
      %v2513 = vpop.f32.mrf.mxu0
      %2514 = vdwg.mxu0
      %v2515 = vmul.f32 %v2512, 0.35355338
      %v2516 = vsel %vm890, %v2515, -inf
      %2517 = vmax.xlane.f32.xlu0 %v2516
      %v2518 = vpop.xlane.xlu0 %2517
      %v2519 = vsub.f32 %v2515, %v2518
      %v2520 = vmul.f32 %v2519, 1.442695
      %v2521 = vpow.pop %v2520
      %v2522 = vsel %vm890, %v2521, 0.0
      %2523 = vadd.xlane.f32.xlu0 %v2522
      %v2524 = vpop.xlane.xlu0 %2523
      %v2525 = vrcp.pop %v2524
      %v2526 = vmul.f32 %v2521, %v2525
      %2527 = vrot.lane.b32.xlu0 %v2185, 56
      %v2528 = vpop.permute.xlu0 %2527
      %v2531 = vsel %vm890, %v2526, 0
      %2533 = vmatprep.subr.mxu0 0.0
      %2534 = vmatpush1.msra.mxu0 0.0
      %2535 = vmatprep.subr.mxu0 0.0
      %2536 = vmatpush1.msra.mxu0 0.0
      %2537 = vmatprep.subr.mxu0 0.0
      %2538 = vmatpush1.msra.mxu0 0.0
      %2539 = vmatprep.subr.mxu0 0.0
      %2540 = vmatpush1.msra.mxu0 0.0
      %2541 = vmatprep.subr.mxu0 0.0
      %2542 = vmatpush1.msra.mxu0 0.0
      %2543 = vmatprep.subr.mxu0 0.0
      %2544 = vmatpush1.msra.mxu0 0.0
      %2545 = vmatprep.subr.mxu0 0.0
      %2546 = vmatpush1.msra.mxu0 0.0
      %2547 = vmatprep.subr.mxu0 0.0
      %2548 = vmatpush1.msra.mxu0 0.0
      %2549 = vmatprep.subr.mxu0 0.0
      %2550 = vmatpush1.msra.mxu0 0.0
      %2551 = vmatprep.subr.mxu0 0.0
      %2552 = vmatpush1.msra.mxu0 0.0
      %2553 = vmatprep.subr.mxu0 0.0
      %2554 = vmatpush1.msra.mxu0 0.0
      %2555 = vmatprep.subr.mxu0 0.0
      %2556 = vmatpush1.msra.mxu0 0.0
      %2557 = vmatprep.subr.mxu0 0.0
      %2558 = vmatpush1.msra.mxu0 0.0
      %2559 = vmatprep.subr.mxu0 0.0
      %2560 = vmatpush1.msra.mxu0 0.0
      %2561 = vmatprep.subr.mxu0 0.0
      %2562 = vmatpush1.msra.mxu0 0.0
      %2563 = vmatprep.subr.mxu0 0.0
      %2564 = vmatpush1.msra.mxu0 %v2528
      %2565 = vmatprep.subr.mxu0 0.0
      %2566 = vmatpush2.msra.mxu0 0.0
      %2567 = vmatprep.subr.mxu0 0.0
      %2568 = vmatpush2.msra.mxu0 0.0
      %2569 = vmatprep.subr.mxu0 0.0
      %2570 = vmatpush2.msra.mxu0 0.0
      %2571 = vmatprep.subr.mxu0 0.0
      %2572 = vmatpush2.msra.mxu0 0.0
      %2573 = vmatprep.subr.mxu0 0.0
      %2574 = vmatpush2.msra.mxu0 0.0
      %2575 = vmatprep.subr.mxu0 0.0
      %2576 = vmatpush2.msra.mxu0 0.0
      %2577 = vmatprep.subr.mxu0 0.0
      %2578 = vmatpush2.msra.mxu0 0.0
      %2579 = vmatprep.subr.mxu0 0.0
      %2580 = vmatpush2.msra.mxu0 0.0
      %2581 = vmatprep.subr.mxu0 0.0
      %2582 = vmatpush2.msra.mxu0 0.0
      %2583 = vmatprep.subr.mxu0 0.0
      %2584 = vmatpush2.msra.mxu0 0.0
      %2585 = vmatprep.subr.mxu0 0.0
      %2586 = vmatpush2.msra.mxu0 0.0
      %2587 = vmatprep.subr.mxu0 0.0
      %2588 = vmatpush2.msra.mxu0 0.0
      %2589 = vmatprep.subr.mxu0 0.0
      %2590 = vmatpush2.msra.mxu0 0.0
      %2591 = vmatprep.subr.mxu0 0.0
      %2592 = vmatpush2.msra.mxu0 0.0
      %2593 = vmatprep.subr.mxu0 0.0
      %2594 = vmatpush2.msra.mxu0 0.0
      %2595 = vmatprep.subr.mxu0 0.0
      %2596 = vmatpush2.msra.mxu0 0.0
      %2597 = vmatprep.mubr.f32.mxu0 0.0
      %2598 = vmatmul.mubr.f32.gmra.mxu0 %v2531
      %v2599 = vpop.f32.mrf.mxu0
      %v2600 = vadd.f32 0.0, %v2599
      %v2601 = vpop.f32.mrf.mxu0
      %2602 = vdwg.mxu0
      %s2603 = scalar_lea.vmem %s10, 40
      %v2604 = vld [vmem:[%s2603] sm:$0xff]
      %v2606 = vsel %vm890, %v2600, 0
      %2608 = vmatprep.subr.mxu0 0.0
      %2609 = vmatpush1.msra.mxu0 0.0
      %2610 = vmatprep.subr.mxu0 0.0
      %2611 = vmatpush1.msra.mxu0 0.0
      %2612 = vmatprep.subr.mxu0 0.0
      %2613 = vmatpush1.msra.mxu0 0.0
      %2614 = vmatprep.subr.mxu0 0.0
      %2615 = vmatpush1.msra.mxu0 0.0
      %2616 = vmatprep.subr.mxu0 0.0
      %2617 = vmatpush1.msra.mxu0 0.0
      %2618 = vmatprep.subr.mxu0 0.0
      %2619 = vmatpush1.msra.mxu0 0.0
      %2620 = vmatprep.subr.mxu0 0.0
      %2621 = vmatpush1.msra.mxu0 0.0
      %2622 = vmatprep.subr.mxu0 0.0
      %2623 = vmatpush1.msra.mxu0 0.0
      %2624 = vmatprep.subr.mxu0 0.0
      %2625 = vmatpush1.msra.mxu0 0.0
      %2626 = vmatprep.subr.mxu0 0.0
      %2627 = vmatpush1.msra.mxu0 0.0
      %2628 = vmatprep.subr.mxu0 0.0
      %2629 = vmatpush1.msra.mxu0 0.0
      %2630 = vmatprep.subr.mxu0 0.0
      %2631 = vmatpush1.msra.mxu0 0.0
      %2632 = vmatprep.subr.mxu0 0.0
      %2633 = vmatpush1.msra.mxu0 0.0
      %2634 = vmatprep.subr.mxu0 0.0
      %2635 = vmatpush1.msra.mxu0 0.0
      %2636 = vmatprep.subr.mxu0 0.0
      %2637 = vmatpush1.msra.mxu0 0.0
      %2638 = vmatprep.subr.mxu0 0.0
      %2639 = vmatpush1.msra.mxu0 %v2604
      %2640 = vmatprep.subr.mxu0 0.0
      %2641 = vmatpush2.msra.mxu0 0.0
      %2642 = vmatprep.subr.mxu0 0.0
      %2643 = vmatpush2.msra.mxu0 0.0
      %2644 = vmatprep.subr.mxu0 0.0
      %2645 = vmatpush2.msra.mxu0 0.0
      %2646 = vmatprep.subr.mxu0 0.0
      %2647 = vmatpush2.msra.mxu0 0.0
      %2648 = vmatprep.subr.mxu0 0.0
      %2649 = vmatpush2.msra.mxu0 0.0
      %2650 = vmatprep.subr.mxu0 0.0
      %2651 = vmatpush2.msra.mxu0 0.0
      %2652 = vmatprep.subr.mxu0 0.0
      %2653 = vmatpush2.msra.mxu0 0.0
      %2654 = vmatprep.subr.mxu0 0.0
      %2655 = vmatpush2.msra.mxu0 0.0
      %2656 = vmatprep.subr.mxu0 0.0
      %2657 = vmatpush2.msra.mxu0 0.0
      %2658 = vmatprep.subr.mxu0 0.0
      %2659 = vmatpush2.msra.mxu0 0.0
      %2660 = vmatprep.subr.mxu0 0.0
      %2661 = vmatpush2.msra.mxu0 0.0
      %2662 = vmatprep.subr.mxu0 0.0
      %2663 = vmatpush2.msra.mxu0 0.0
      %2664 = vmatprep.subr.mxu0 0.0
      %2665 = vmatpush2.msra.mxu0 0.0
      %2666 = vmatprep.subr.mxu0 0.0
      %2667 = vmatpush2.msra.mxu0 0.0
      %2668 = vmatprep.subr.mxu0 0.0
      %2669 = vmatpush2.msra.mxu0 0.0
      %2670 = vmatprep.subr.mxu0 0.0
      %2671 = vmatpush2.msra.mxu0 0.0
      %2672 = vmatprep.mubr.f32.mxu0 0.0
      %2673 = vmatmul.mubr.f32.gmra.mxu0 %v2606
      %v2674 = vpop.f32.mrf.mxu0
      %v2675 = vadd.f32 0.0, %v2674
      %v2676 = vpop.f32.mrf.mxu0
      %2677 = vdwg.mxu0
      %v2678 = vadd.f32 %v2436, %v2675
      %2679 = vrot.lane.b32.xlu0 %v2185, 112
      %v2680 = vpop.permute.xlu0 %2679
      %2681 = vrot.lane.b32.xlu0 %v2185, 80
      %v2682 = vpop.permute.xlu0 %2681
      %v2683 = vsel %vm890, %v2680, 0
      %v2685 = vsel %vm890, %v2682, 0
      %2687 = vmatprep.subr.mxu0 0.0
      %2688 = vmatpush1.xpose.msra.mxu0 0.0
      %2689 = vmatprep.subr.mxu0 0.0
      %2690 = vmatpush1.xpose.msra.mxu0 0.0
      %2691 = vmatprep.subr.mxu0 0.0
      %2692 = vmatpush1.xpose.msra.mxu0 0.0
      %2693 = vmatprep.subr.mxu0 0.0
      %2694 = vmatpush1.xpose.msra.mxu0 0.0
      %2695 = vmatprep.subr.mxu0 0.0
      %2696 = vmatpush1.xpose.msra.mxu0 0.0
      %2697 = vmatprep.subr.mxu0 0.0
      %2698 = vmatpush1.xpose.msra.mxu0 0.0
      %2699 = vmatprep.subr.mxu0 0.0
      %2700 = vmatpush1.xpose.msra.mxu0 0.0
      %2701 = vmatprep.subr.mxu0 0.0
      %2702 = vmatpush1.xpose.msra.mxu0 0.0
      %2703 = vmatprep.subr.mxu0 0.0
      %2704 = vmatpush1.xpose.msra.mxu0 0.0
      %2705 = vmatprep.subr.mxu0 0.0
      %2706 = vmatpush1.xpose.msra.mxu0 0.0
      %2707 = vmatprep.subr.mxu0 0.0
      %2708 = vmatpush1.xpose.msra.mxu0 0.0
      %2709 = vmatprep.subr.mxu0 0.0
      %2710 = vmatpush1.xpose.msra.mxu0 0.0
      %2711 = vmatprep.subr.mxu0 0.0
      %2712 = vmatpush1.xpose.msra.mxu0 0.0
      %2713 = vmatprep.subr.mxu0 0.0
      %2714 = vmatpush1.xpose.msra.mxu0 0.0
      %2715 = vmatprep.subr.mxu0 0.0
      %2716 = vmatpush1.xpose.msra.mxu0 0.0
      %2717 = vmatprep.subr.mxu0 0.0
      %2718 = vmatpush1.xpose.msra.mxu0 %v2685
      %2719 = vmatprep.subr.mxu0 0.0
      %2720 = vmatpush2.xpose.msra.mxu0 0.0
      %2721 = vmatprep.subr.mxu0 0.0
      %2722 = vmatpush2.xpose.msra.mxu0 0.0
      %2723 = vmatprep.subr.mxu0 0.0
      %2724 = vmatpush2.xpose.msra.mxu0 0.0
      %2725 = vmatprep.subr.mxu0 0.0
      %2726 = vmatpush2.xpose.msra.mxu0 0.0
      %2727 = vmatprep.subr.mxu0 0.0
      %2728 = vmatpush2.xpose.msra.mxu0 0.0
      %2729 = vmatprep.subr.mxu0 0.0
      %2730 = vmatpush2.xpose.msra.mxu0 0.0
      %2731 = vmatprep.subr.mxu0 0.0
      %2732 = vmatpush2.xpose.msra.mxu0 0.0
      %2733 = vmatprep.subr.mxu0 0.0
      %2734 = vmatpush2.xpose.msra.mxu0 0.0
      %2735 = vmatprep.subr.mxu0 0.0
      %2736 = vmatpush2.xpose.msra.mxu0 0.0
      %2737 = vmatprep.subr.mxu0 0.0
      %2738 = vmatpush2.xpose.msra.mxu0 0.0
      %2739 = vmatprep.subr.mxu0 0.0
      %2740 = vmatpush2.xpose.msra.mxu0 0.0
      %2741 = vmatprep.subr.mxu0 0.0
      %2742 = vmatpush2.xpose.msra.mxu0 0.0
      %2743 = vmatprep.subr.mxu0 0.0
      %2744 = vmatpush2.xpose.msra.mxu0 0.0
      %2745 = vmatprep.subr.mxu0 0.0
      %2746 = vmatpush2.xpose.msra.mxu0 0.0
      %2747 = vmatprep.subr.mxu0 0.0
      %2748 = vmatpush2.xpose.msra.mxu0 0.0
      %2749 = vmatprep.subr.mxu0 0.0
      %2750 = vmatpush2.xpose.msra.mxu0 0.0
      %2751 = vmatprep.mubr.f32.mxu0 0.0
      %2752 = vmatmul.mubr.f32.gmra.mxu0 %v2683
      %v2753 = vpop.f32.mrf.mxu0
      %v2754 = vadd.f32 0.0, %v2753
      %v2755 = vpop.f32.mrf.mxu0
      %2756 = vdwg.mxu0
      %v2757 = vmul.f32 %v2754, 0.35355338
      %v2758 = vsel %vm890, %v2757, -inf
      %2759 = vmax.xlane.f32.xlu0 %v2758
      %v2760 = vpop.xlane.xlu0 %2759
      %v2761 = vsub.f32 %v2757, %v2760
      %v2762 = vmul.f32 %v2761, 1.442695
      %v2763 = vpow.pop %v2762
      %v2764 = vsel %vm890, %v2763, 0.0
      %2765 = vadd.xlane.f32.xlu0 %v2764
      %v2766 = vpop.xlane.xlu0 %2765
      %v2767 = vrcp.pop %v2766
      %v2768 = vmul.f32 %v2763, %v2767
      %2769 = vrot.lane.b32.xlu0 %v2185, 48
      %v2770 = vpop.permute.xlu0 %2769
      %v2773 = vsel %vm890, %v2768, 0
      %2775 = vmatprep.subr.mxu0 0.0
      %2776 = vmatpush1.msra.mxu0 0.0
      %2777 = vmatprep.subr.mxu0 0.0
      %2778 = vmatpush1.msra.mxu0 0.0
      %2779 = vmatprep.subr.mxu0 0.0
      %2780 = vmatpush1.msra.mxu0 0.0
      %2781 = vmatprep.subr.mxu0 0.0
      %2782 = vmatpush1.msra.mxu0 0.0
      %2783 = vmatprep.subr.mxu0 0.0
      %2784 = vmatpush1.msra.mxu0 0.0
      %2785 = vmatprep.subr.mxu0 0.0
      %2786 = vmatpush1.msra.mxu0 0.0
      %2787 = vmatprep.subr.mxu0 0.0
      %2788 = vmatpush1.msra.mxu0 0.0
      %2789 = vmatprep.subr.mxu0 0.0
      %2790 = vmatpush1.msra.mxu0 0.0
      %2791 = vmatprep.subr.mxu0 0.0
      %2792 = vmatpush1.msra.mxu0 0.0
      %2793 = vmatprep.subr.mxu0 0.0
      %2794 = vmatpush1.msra.mxu0 0.0
      %2795 = vmatprep.subr.mxu0 0.0
      %2796 = vmatpush1.msra.mxu0 0.0
      %2797 = vmatprep.subr.mxu0 0.0
      %2798 = vmatpush1.msra.mxu0 0.0
      %2799 = vmatprep.subr.mxu0 0.0
      %2800 = vmatpush1.msra.mxu0 0.0
      %2801 = vmatprep.subr.mxu0 0.0
      %2802 = vmatpush1.msra.mxu0 0.0
      %2803 = vmatprep.subr.mxu0 0.0
      %2804 = vmatpush1.msra.mxu0 0.0
      %2805 = vmatprep.subr.mxu0 0.0
      %2806 = vmatpush1.msra.mxu0 %v2770
      %2807 = vmatprep.subr.mxu0 0.0
      %2808 = vmatpush2.msra.mxu0 0.0
      %2809 = vmatprep.subr.mxu0 0.0
      %2810 = vmatpush2.msra.mxu0 0.0
      %2811 = vmatprep.subr.mxu0 0.0
      %2812 = vmatpush2.msra.mxu0 0.0
      %2813 = vmatprep.subr.mxu0 0.0
      %2814 = vmatpush2.msra.mxu0 0.0
      %2815 = vmatprep.subr.mxu0 0.0
      %2816 = vmatpush2.msra.mxu0 0.0
      %2817 = vmatprep.subr.mxu0 0.0
      %2818 = vmatpush2.msra.mxu0 0.0
      %2819 = vmatprep.subr.mxu0 0.0
      %2820 = vmatpush2.msra.mxu0 0.0
      %2821 = vmatprep.subr.mxu0 0.0
      %2822 = vmatpush2.msra.mxu0 0.0
      %2823 = vmatprep.subr.mxu0 0.0
      %2824 = vmatpush2.msra.mxu0 0.0
      %2825 = vmatprep.subr.mxu0 0.0
      %2826 = vmatpush2.msra.mxu0 0.0
      %2827 = vmatprep.subr.mxu0 0.0
      %2828 = vmatpush2.msra.mxu0 0.0
      %2829 = vmatprep.subr.mxu0 0.0
      %2830 = vmatpush2.msra.mxu0 0.0
      %2831 = vmatprep.subr.mxu0 0.0
      %2832 = vmatpush2.msra.mxu0 0.0
      %2833 = vmatprep.subr.mxu0 0.0
      %2834 = vmatpush2.msra.mxu0 0.0
      %2835 = vmatprep.subr.mxu0 0.0
      %2836 = vmatpush2.msra.mxu0 0.0
      %2837 = vmatprep.subr.mxu0 0.0
      %2838 = vmatpush2.msra.mxu0 0.0
      %2839 = vmatprep.mubr.f32.mxu0 0.0
      %2840 = vmatmul.mubr.f32.gmra.mxu0 %v2773
      %v2841 = vpop.f32.mrf.mxu0
      %v2842 = vadd.f32 0.0, %v2841
      %v2843 = vpop.f32.mrf.mxu0
      %2844 = vdwg.mxu0
      %s2845 = scalar_lea.vmem %s10, 48
      %v2846 = vld [vmem:[%s2845] sm:$0xff]
      %v2848 = vsel %vm890, %v2842, 0
      %2850 = vmatprep.subr.mxu0 0.0
      %2851 = vmatpush1.msra.mxu0 0.0
      %2852 = vmatprep.subr.mxu0 0.0
      %2853 = vmatpush1.msra.mxu0 0.0
      %2854 = vmatprep.subr.mxu0 0.0
      %2855 = vmatpush1.msra.mxu0 0.0
      %2856 = vmatprep.subr.mxu0 0.0
      %2857 = vmatpush1.msra.mxu0 0.0
      %2858 = vmatprep.subr.mxu0 0.0
      %2859 = vmatpush1.msra.mxu0 0.0
      %2860 = vmatprep.subr.mxu0 0.0
      %2861 = vmatpush1.msra.mxu0 0.0
      %2862 = vmatprep.subr.mxu0 0.0
      %2863 = vmatpush1.msra.mxu0 0.0
      %2864 = vmatprep.subr.mxu0 0.0
      %2865 = vmatpush1.msra.mxu0 0.0
      %2866 = vmatprep.subr.mxu0 0.0
      %2867 = vmatpush1.msra.mxu0 0.0
      %2868 = vmatprep.subr.mxu0 0.0
      %2869 = vmatpush1.msra.mxu0 0.0
      %2870 = vmatprep.subr.mxu0 0.0
      %2871 = vmatpush1.msra.mxu0 0.0
      %2872 = vmatprep.subr.mxu0 0.0
      %2873 = vmatpush1.msra.mxu0 0.0
      %2874 = vmatprep.subr.mxu0 0.0
      %2875 = vmatpush1.msra.mxu0 0.0
      %2876 = vmatprep.subr.mxu0 0.0
      %2877 = vmatpush1.msra.mxu0 0.0
      %2878 = vmatprep.subr.mxu0 0.0
      %2879 = vmatpush1.msra.mxu0 0.0
      %2880 = vmatprep.subr.mxu0 0.0
      %2881 = vmatpush1.msra.mxu0 %v2846
      %2882 = vmatprep.subr.mxu0 0.0
      %2883 = vmatpush2.msra.mxu0 0.0
      %2884 = vmatprep.subr.mxu0 0.0
      %2885 = vmatpush2.msra.mxu0 0.0
      %2886 = vmatprep.subr.mxu0 0.0
      %2887 = vmatpush2.msra.mxu0 0.0
      %2888 = vmatprep.subr.mxu0 0.0
      %2889 = vmatpush2.msra.mxu0 0.0
      %2890 = vmatprep.subr.mxu0 0.0
      %2891 = vmatpush2.msra.mxu0 0.0
      %2892 = vmatprep.subr.mxu0 0.0
      %2893 = vmatpush2.msra.mxu0 0.0
      %2894 = vmatprep.subr.mxu0 0.0
      %2895 = vmatpush2.msra.mxu0 0.0
      %2896 = vmatprep.subr.mxu0 0.0
      %2897 = vmatpush2.msra.mxu0 0.0
      %2898 = vmatprep.subr.mxu0 0.0
      %2899 = vmatpush2.msra.mxu0 0.0
      %2900 = vmatprep.subr.mxu0 0.0
      %2901 = vmatpush2.msra.mxu0 0.0
      %2902 = vmatprep.subr.mxu0 0.0
      %2903 = vmatpush2.msra.mxu0 0.0
      %2904 = vmatprep.subr.mxu0 0.0
      %2905 = vmatpush2.msra.mxu0 0.0
      %2906 = vmatprep.subr.mxu0 0.0
      %2907 = vmatpush2.msra.mxu0 0.0
      %2908 = vmatprep.subr.mxu0 0.0
      %2909 = vmatpush2.msra.mxu0 0.0
      %2910 = vmatprep.subr.mxu0 0.0
      %2911 = vmatpush2.msra.mxu0 0.0
      %2912 = vmatprep.subr.mxu0 0.0
      %2913 = vmatpush2.msra.mxu0 0.0
      %2914 = vmatprep.mubr.f32.mxu0 0.0
      %2915 = vmatmul.mubr.f32.gmra.mxu0 %v2848
      %v2916 = vpop.f32.mrf.mxu0
      %v2917 = vadd.f32 0.0, %v2916
      %v2918 = vpop.f32.mrf.mxu0
      %2919 = vdwg.mxu0
      %v2920 = vadd.f32 %v2678, %v2917
      %2921 = vrot.lane.b32.xlu0 %v2185, 104
      %v2922 = vpop.permute.xlu0 %2921
      %2923 = vrot.lane.b32.xlu0 %v2185, 72
      %v2924 = vpop.permute.xlu0 %2923
      %v2925 = vsel %vm890, %v2922, 0
      %v2927 = vsel %vm890, %v2924, 0
      %2929 = vmatprep.subr.mxu0 0.0
      %2930 = vmatpush1.xpose.msra.mxu0 0.0
      %2931 = vmatprep.subr.mxu0 0.0
      %2932 = vmatpush1.xpose.msra.mxu0 0.0
      %2933 = vmatprep.subr.mxu0 0.0
      %2934 = vmatpush1.xpose.msra.mxu0 0.0
      %2935 = vmatprep.subr.mxu0 0.0
      %2936 = vmatpush1.xpose.msra.mxu0 0.0
      %2937 = vmatprep.subr.mxu0 0.0
      %2938 = vmatpush1.xpose.msra.mxu0 0.0
      %2939 = vmatprep.subr.mxu0 0.0
      %2940 = vmatpush1.xpose.msra.mxu0 0.0
      %2941 = vmatprep.subr.mxu0 0.0
      %2942 = vmatpush1.xpose.msra.mxu0 0.0
      %2943 = vmatprep.subr.mxu0 0.0
      %2944 = vmatpush1.xpose.msra.mxu0 0.0
      %2945 = vmatprep.subr.mxu0 0.0
      %2946 = vmatpush1.xpose.msra.mxu0 0.0
      %2947 = vmatprep.subr.mxu0 0.0
      %2948 = vmatpush1.xpose.msra.mxu0 0.0
      %2949 = vmatprep.subr.mxu0 0.0
      %2950 = vmatpush1.xpose.msra.mxu0 0.0
      %2951 = vmatprep.subr.mxu0 0.0
      %2952 = vmatpush1.xpose.msra.mxu0 0.0
      %2953 = vmatprep.subr.mxu0 0.0
      %2954 = vmatpush1.xpose.msra.mxu0 0.0
      %2955 = vmatprep.subr.mxu0 0.0
      %2956 = vmatpush1.xpose.msra.mxu0 0.0
      %2957 = vmatprep.subr.mxu0 0.0
      %2958 = vmatpush1.xpose.msra.mxu0 0.0
      %2959 = vmatprep.subr.mxu0 0.0
      %2960 = vmatpush1.xpose.msra.mxu0 %v2927
      %2961 = vmatprep.subr.mxu0 0.0
      %2962 = vmatpush2.xpose.msra.mxu0 0.0
      %2963 = vmatprep.subr.mxu0 0.0
      %2964 = vmatpush2.xpose.msra.mxu0 0.0
      %2965 = vmatprep.subr.mxu0 0.0
      %2966 = vmatpush2.xpose.msra.mxu0 0.0
      %2967 = vmatprep.subr.mxu0 0.0
      %2968 = vmatpush2.xpose.msra.mxu0 0.0
      %2969 = vmatprep.subr.mxu0 0.0
      %2970 = vmatpush2.xpose.msra.mxu0 0.0
      %2971 = vmatprep.subr.mxu0 0.0
      %2972 = vmatpush2.xpose.msra.mxu0 0.0
      %2973 = vmatprep.subr.mxu0 0.0
      %2974 = vmatpush2.xpose.msra.mxu0 0.0
      %2975 = vmatprep.subr.mxu0 0.0
      %2976 = vmatpush2.xpose.msra.mxu0 0.0
      %2977 = vmatprep.subr.mxu0 0.0
      %2978 = vmatpush2.xpose.msra.mxu0 0.0
      %2979 = vmatprep.subr.mxu0 0.0
      %2980 = vmatpush2.xpose.msra.mxu0 0.0
      %2981 = vmatprep.subr.mxu0 0.0
      %2982 = vmatpush2.xpose.msra.mxu0 0.0
      %2983 = vmatprep.subr.mxu0 0.0
      %2984 = vmatpush2.xpose.msra.mxu0 0.0
      %2985 = vmatprep.subr.mxu0 0.0
      %2986 = vmatpush2.xpose.msra.mxu0 0.0
      %2987 = vmatprep.subr.mxu0 0.0
      %2988 = vmatpush2.xpose.msra.mxu0 0.0
      %2989 = vmatprep.subr.mxu0 0.0
      %2990 = vmatpush2.xpose.msra.mxu0 0.0
      %2991 = vmatprep.subr.mxu0 0.0
      %2992 = vmatpush2.xpose.msra.mxu0 0.0
      %2993 = vmatprep.mubr.f32.mxu0 0.0
      %2994 = vmatmul.mubr.f32.gmra.mxu0 %v2925
      %v2995 = vpop.f32.mrf.mxu0
      %v2996 = vadd.f32 0.0, %v2995
      %v2997 = vpop.f32.mrf.mxu0
      %2998 = vdwg.mxu0
      %v2999 = vmul.f32 %v2996, 0.35355338
      %v3000 = vsel %vm890, %v2999, -inf
      %3001 = vmax.xlane.f32.xlu0 %v3000
      %v3002 = vpop.xlane.xlu0 %3001
      %v3003 = vsub.f32 %v2999, %v3002
      %v3004 = vmul.f32 %v3003, 1.442695
      %v3005 = vpow.pop %v3004
      %v3006 = vsel %vm890, %v3005, 0.0
      %3007 = vadd.xlane.f32.xlu0 %v3006
      %v3008 = vpop.xlane.xlu0 %3007
      %v3009 = vrcp.pop %v3008
      %v3010 = vmul.f32 %v3005, %v3009
      %3011 = vrot.lane.b32.xlu0 %v2185, 40
      %v3012 = vpop.permute.xlu0 %3011
      %v3015 = vsel %vm890, %v3010, 0
      %3017 = vmatprep.subr.mxu0 0.0
      %3018 = vmatpush1.msra.mxu0 0.0
      %3019 = vmatprep.subr.mxu0 0.0
      %3020 = vmatpush1.msra.mxu0 0.0
      %3021 = vmatprep.subr.mxu0 0.0
      %3022 = vmatpush1.msra.mxu0 0.0
      %3023 = vmatprep.subr.mxu0 0.0
      %3024 = vmatpush1.msra.mxu0 0.0
      %3025 = vmatprep.subr.mxu0 0.0
      %3026 = vmatpush1.msra.mxu0 0.0
      %3027 = vmatprep.subr.mxu0 0.0
      %3028 = vmatpush1.msra.mxu0 0.0
      %3029 = vmatprep.subr.mxu0 0.0
      %3030 = vmatpush1.msra.mxu0 0.0
      %3031 = vmatprep.subr.mxu0 0.0
      %3032 = vmatpush1.msra.mxu0 0.0
      %3033 = vmatprep.subr.mxu0 0.0
      %3034 = vmatpush1.msra.mxu0 0.0
      %3035 = vmatprep.subr.mxu0 0.0
      %3036 = vmatpush1.msra.mxu0 0.0
      %3037 = vmatprep.subr.mxu0 0.0
      %3038 = vmatpush1.msra.mxu0 0.0
      %3039 = vmatprep.subr.mxu0 0.0
      %3040 = vmatpush1.msra.mxu0 0.0
      %3041 = vmatprep.subr.mxu0 0.0
      %3042 = vmatpush1.msra.mxu0 0.0
      %3043 = vmatprep.subr.mxu0 0.0
      %3044 = vmatpush1.msra.mxu0 0.0
      %3045 = vmatprep.subr.mxu0 0.0
      %3046 = vmatpush1.msra.mxu0 0.0
      %3047 = vmatprep.subr.mxu0 0.0
      %3048 = vmatpush1.msra.mxu0 %v3012
      %3049 = vmatprep.subr.mxu0 0.0
      %3050 = vmatpush2.msra.mxu0 0.0
      %3051 = vmatprep.subr.mxu0 0.0
      %3052 = vmatpush2.msra.mxu0 0.0
      %3053 = vmatprep.subr.mxu0 0.0
      %3054 = vmatpush2.msra.mxu0 0.0
      %3055 = vmatprep.subr.mxu0 0.0
      %3056 = vmatpush2.msra.mxu0 0.0
      %3057 = vmatprep.subr.mxu0 0.0
      %3058 = vmatpush2.msra.mxu0 0.0
      %3059 = vmatprep.subr.mxu0 0.0
      %3060 = vmatpush2.msra.mxu0 0.0
      %3061 = vmatprep.subr.mxu0 0.0
      %3062 = vmatpush2.msra.mxu0 0.0
      %3063 = vmatprep.subr.mxu0 0.0
      %3064 = vmatpush2.msra.mxu0 0.0
      %3065 = vmatprep.subr.mxu0 0.0
      %3066 = vmatpush2.msra.mxu0 0.0
      %3067 = vmatprep.subr.mxu0 0.0
      %3068 = vmatpush2.msra.mxu0 0.0
      %3069 = vmatprep.subr.mxu0 0.0
      %3070 = vmatpush2.msra.mxu0 0.0
      %3071 = vmatprep.subr.mxu0 0.0
      %3072 = vmatpush2.msra.mxu0 0.0
      %3073 = vmatprep.subr.mxu0 0.0
      %3074 = vmatpush2.msra.mxu0 0.0
      %3075 = vmatprep.subr.mxu0 0.0
      %3076 = vmatpush2.msra.mxu0 0.0
      %3077 = vmatprep.subr.mxu0 0.0
      %3078 = vmatpush2.msra.mxu0 0.0
      %3079 = vmatprep.subr.mxu0 0.0
      %3080 = vmatpush2.msra.mxu0 0.0
      %3081 = vmatprep.mubr.f32.mxu0 0.0
      %3082 = vmatmul.mubr.f32.gmra.mxu0 %v3015
      %v3083 = vpop.f32.mrf.mxu0
      %v3084 = vadd.f32 0.0, %v3083
      %v3085 = vpop.f32.mrf.mxu0
      %3086 = vdwg.mxu0
      %s3087 = scalar_lea.vmem %s10, 56
      %v3088 = vld [vmem:[%s3087] sm:$0xff]
      %v3090 = vsel %vm890, %v3084, 0
      %3092 = vmatprep.subr.mxu0 0.0
      %3093 = vmatpush1.msra.mxu0 0.0
      %3094 = vmatprep.subr.mxu0 0.0
      %3095 = vmatpush1.msra.mxu0 0.0
      %3096 = vmatprep.subr.mxu0 0.0
      %3097 = vmatpush1.msra.mxu0 0.0
      %3098 = vmatprep.subr.mxu0 0.0
      %3099 = vmatpush1.msra.mxu0 0.0
      %3100 = vmatprep.subr.mxu0 0.0
      %3101 = vmatpush1.msra.mxu0 0.0
      %3102 = vmatprep.subr.mxu0 0.0
      %3103 = vmatpush1.msra.mxu0 0.0
      %3104 = vmatprep.subr.mxu0 0.0
      %3105 = vmatpush1.msra.mxu0 0.0
      %3106 = vmatprep.subr.mxu0 0.0
      %3107 = vmatpush1.msra.mxu0 0.0
      %3108 = vmatprep.subr.mxu0 0.0
      %3109 = vmatpush1.msra.mxu0 0.0
      %3110 = vmatprep.subr.mxu0 0.0
      %3111 = vmatpush1.msra.mxu0 0.0
      %3112 = vmatprep.subr.mxu0 0.0
      %3113 = vmatpush1.msra.mxu0 0.0
      %3114 = vmatprep.subr.mxu0 0.0
      %3115 = vmatpush1.msra.mxu0 0.0
      %3116 = vmatprep.subr.mxu0 0.0
      %3117 = vmatpush1.msra.mxu0 0.0
      %3118 = vmatprep.subr.mxu0 0.0
      %3119 = vmatpush1.msra.mxu0 0.0
      %3120 = vmatprep.subr.mxu0 0.0
      %3121 = vmatpush1.msra.mxu0 0.0
      %3122 = vmatprep.subr.mxu0 0.0
      %3123 = vmatpush1.msra.mxu0 %v3088
      %3124 = vmatprep.subr.mxu0 0.0
      %3125 = vmatpush2.msra.mxu0 0.0
      %3126 = vmatprep.subr.mxu0 0.0
      %3127 = vmatpush2.msra.mxu0 0.0
      %3128 = vmatprep.subr.mxu0 0.0
      %3129 = vmatpush2.msra.mxu0 0.0
      %3130 = vmatprep.subr.mxu0 0.0
      %3131 = vmatpush2.msra.mxu0 0.0
      %3132 = vmatprep.subr.mxu0 0.0
      %3133 = vmatpush2.msra.mxu0 0.0
      %3134 = vmatprep.subr.mxu0 0.0
      %3135 = vmatpush2.msra.mxu0 0.0
      %3136 = vmatprep.subr.mxu0 0.0
      %3137 = vmatpush2.msra.mxu0 0.0
      %3138 = vmatprep.subr.mxu0 0.0
      %3139 = vmatpush2.msra.mxu0 0.0
      %3140 = vmatprep.subr.mxu0 0.0
      %3141 = vmatpush2.msra.mxu0 0.0
      %3142 = vmatprep.subr.mxu0 0.0
      %3143 = vmatpush2.msra.mxu0 0.0
      %3144 = vmatprep.subr.mxu0 0.0
      %3145 = vmatpush2.msra.mxu0 0.0
      %3146 = vmatprep.subr.mxu0 0.0
      %3147 = vmatpush2.msra.mxu0 0.0
      %3148 = vmatprep.subr.mxu0 0.0
      %3149 = vmatpush2.msra.mxu0 0.0
      %3150 = vmatprep.subr.mxu0 0.0
      %3151 = vmatpush2.msra.mxu0 0.0
      %3152 = vmatprep.subr.mxu0 0.0
      %3153 = vmatpush2.msra.mxu0 0.0
      %3154 = vmatprep.subr.mxu0 0.0
      %3155 = vmatpush2.msra.mxu0 0.0
      %3156 = vmatprep.mubr.f32.mxu0 0.0
      %3157 = vmatmul.mubr.f32.gmra.mxu0 %v3090
      %v3158 = vpop.f32.mrf.mxu0
      %v3159 = vadd.f32 0.0, %v3158
      %v3160 = vpop.f32.mrf.mxu0
      %3161 = vdwg.mxu0
      %v3162 = vadd.f32 %v2920, %v3159
      %v3163 = vadd.f32 %v2101, %v3162
      %s3164 = scalar_lea.vmem %s12, 1
      %v3165 = vld [vmem:[%s3164] sm:$0x1]
      %s3166 = scalar_lea.vmem %s13, 1
      %v3167 = vld [vmem:[%s3166] sm:$0x1]
      %v3168 = vsel %vm773, %v3163, 0.0
      %3169 = vadd.xlane.f32.xlu0 %v3168
      %v3170 = vpop.xlane.xlu0 %3169
      %v3171 = vmul.f32 %v3170, %v777
      %v3172 = vsub.f32 %v3163, %v3171
      %v3173 = vmul.f32 %v3172, %v3172
      %v3174 = vsel %vm773, %v3173, 0.0
      %3175 = vadd.xlane.f32.xlu0 %v3174
      %v3176 = vpop.xlane.xlu0 %3175
      %v3177 = vmul.f32 %v3176, %v777
      %v3178 = vadd.f32 %v3177, 1e-12
      %v3179 = vrsqrt.pop %v3178
      %v3180 = vmul.f32 %v3172, %v3179
      %v3182 = vlaneseq
      %v3183 = vshrl.u32 %v3182, 7
      %v3184 = vsub.s32 0, %v3183
      %v3185 = vrot.slane %v3165, %v3184
      %v3187 = vmul.f32 %v3180, %v3185
      %v3189 = vlaneseq
      %v3190 = vshrl.u32 %v3189, 7
      %v3191 = vsub.s32 0, %v3190
      %v3192 = vrot.slane %v3167, %v3191
      %v3194 = vadd.f32 %v3187, %v3192
      %s3195 = scalar_lea.vmem %s14, 32
      %v3196 = vld [vmem:[%s3195] sm:$0xff]
      %v3197 = vld [vmem:[%s3195 + $0x8] sm:$0xff]
      %v3198 = vld [vmem:[%s3195 + $0x10] sm:$0xff]
      %v3199 = vld [vmem:[%s3195 + $0x18] sm:$0xff]
      %s3200 = scalar_lea.vmem %s15, 1
      %v3201 = vld [vmem:[%s3200] sm:$0x1]
      %v3203 = vlaneseq
      %v3204 = vshrl.u32 %v3203, 7
      %v3205 = vsub.s32 0, %v3204
      %v3206 = vrot.slane %v3201, %v3205
      %v3209 = vsel %vm773, %v3194, 0
      %3211 = vmatprep.subr.mxu0 0.0
      %3212 = vmatpush1.msra.mxu0 0.0
      %3213 = vmatprep.subr.mxu0 0.0
      %3214 = vmatpush1.msra.mxu0 0.0
      %3215 = vmatprep.subr.mxu0 0.0
      %3216 = vmatpush1.msra.mxu0 0.0
      %3217 = vmatprep.subr.mxu0 0.0
      %3218 = vmatpush1.msra.mxu0 0.0
      %3219 = vmatprep.subr.mxu0 0.0
      %3220 = vmatpush1.msra.mxu0 0.0
      %3221 = vmatprep.subr.mxu0 0.0
      %3222 = vmatpush1.msra.mxu0 0.0
      %3223 = vmatprep.subr.mxu0 0.0
      %3224 = vmatpush1.msra.mxu0 0.0
      %3225 = vmatprep.subr.mxu0 0.0
      %3226 = vmatpush1.msra.mxu0 0.0
      %3227 = vmatprep.subr.mxu0 0.0
      %3228 = vmatpush1.msra.mxu0 0.0
      %3229 = vmatprep.subr.mxu0 0.0
      %3230 = vmatpush1.msra.mxu0 0.0
      %3231 = vmatprep.subr.mxu0 0.0
      %3232 = vmatpush1.msra.mxu0 0.0
      %3233 = vmatprep.subr.mxu0 0.0
      %3234 = vmatpush1.msra.mxu0 0.0
      %3235 = vmatprep.subr.mxu0 0.0
      %3236 = vmatpush1.msra.mxu0 %v3199
      %3237 = vmatprep.subr.mxu0 0.0
      %3238 = vmatpush1.msra.mxu0 %v3198
      %3239 = vmatprep.subr.mxu0 0.0
      %3240 = vmatpush1.msra.mxu0 %v3197
      %3241 = vmatprep.subr.mxu0 0.0
      %3242 = vmatpush1.msra.mxu0 %v3196
      %3243 = vmatprep.subr.mxu0 0.0
      %3244 = vmatpush2.msra.mxu0 0.0
      %3245 = vmatprep.subr.mxu0 0.0
      %3246 = vmatpush2.msra.mxu0 0.0
      %3247 = vmatprep.subr.mxu0 0.0
      %3248 = vmatpush2.msra.mxu0 0.0
      %3249 = vmatprep.subr.mxu0 0.0
      %3250 = vmatpush2.msra.mxu0 0.0
      %3251 = vmatprep.subr.mxu0 0.0
      %3252 = vmatpush2.msra.mxu0 0.0
      %3253 = vmatprep.subr.mxu0 0.0
      %3254 = vmatpush2.msra.mxu0 0.0
      %3255 = vmatprep.subr.mxu0 0.0
      %3256 = vmatpush2.msra.mxu0 0.0
      %3257 = vmatprep.subr.mxu0 0.0
      %3258 = vmatpush2.msra.mxu0 0.0
      %3259 = vmatprep.subr.mxu0 0.0
      %3260 = vmatpush2.msra.mxu0 0.0
      %3261 = vmatprep.subr.mxu0 0.0
      %3262 = vmatpush2.msra.mxu0 0.0
      %3263 = vmatprep.subr.mxu0 0.0
      %3264 = vmatpush2.msra.mxu0 0.0
      %3265 = vmatprep.subr.mxu0 0.0
      %3266 = vmatpush2.msra.mxu0 0.0
      %3267 = vmatprep.subr.mxu0 0.0
      %3268 = vmatpush2.msra.mxu0 0.0
      %3269 = vmatprep.subr.mxu0 0.0
      %3270 = vmatpush2.msra.mxu0 0.0
      %3271 = vmatprep.subr.mxu0 0.0
      %3272 = vmatpush2.msra.mxu0 0.0
      %3273 = vmatprep.subr.mxu0 0.0
      %3274 = vmatpush2.msra.mxu0 0.0
      %3275 = vmatprep.mubr.f32.mxu0 0.0
      %3276 = vmatmul.mubr.f32.gmra.mxu0 %v3209
      %v3277 = vpop.f32.mrf.mxu0
      %v3278 = vadd.f32 %v3206, %v3277
      %v3279 = vpop.f32.mrf.mxu0
      %3280 = vdwg.mxu0
      %v3281 = vmul.f32 %v3278, 0.5
      %v3282 = vmul.f32 %v3278, 0.044715
      %v3283 = vmul.f32 %v3282, %v3278
      %v3284 = vmul.f32 %v3283, %v3278
      %v3285 = vadd.f32 %v3278, %v3284
      %v3286 = vmul.f32 %v3285, 0.7978846
      %v3287 = vtanh.pop %v3286
      %v3288 = vadd.f32 %v3287, 1.0
      %v3289 = vmul.f32 %v3281, %v3288
      %s3290 = scalar_lea.vmem %s16, 64
      %v3291 = vld [vmem:[%s3290] sm:$0xff]
      %v3292 = vld [vmem:[%s3290 + $0x8] sm:$0xff]
      %v3293 = vld [vmem:[%s3290 + $0x10] sm:$0xff]
      %v3294 = vld [vmem:[%s3290 + $0x18] sm:$0xff]
      %v3295 = vld [vmem:[%s3290 + $0x20] sm:$0xff]
      %v3296 = vld [vmem:[%s3290 + $0x28] sm:$0xff]
      %v3297 = vld [vmem:[%s3290 + $0x30] sm:$0xff]
      %v3298 = vld [vmem:[%s3290 + $0x38] sm:$0xff]
      %s3299 = scalar_lea.vmem %s17, 1
      %v3300 = vld [vmem:[%s3299] sm:$0x1]
      %v3302 = vlaneseq
      %v3303 = vshrl.u32 %v3302, 7
      %v3304 = vsub.s32 0, %v3303
      %v3305 = vrot.slane %v3300, %v3304
      %v3308 = vsel %vm1998, %v3289, 0
      %3310 = vmatprep.subr.mxu0 0.0
      %3311 = vmatpush1.msra.mxu0 0.0
      %3312 = vmatprep.subr.mxu0 0.0
      %3313 = vmatpush1.msra.mxu0 0.0
      %3314 = vmatprep.subr.mxu0 0.0
      %3315 = vmatpush1.msra.mxu0 0.0
      %3316 = vmatprep.subr.mxu0 0.0
      %3317 = vmatpush1.msra.mxu0 0.0
      %3318 = vmatprep.subr.mxu0 0.0
      %3319 = vmatpush1.msra.mxu0 0.0
      %3320 = vmatprep.subr.mxu0 0.0
      %3321 = vmatpush1.msra.mxu0 0.0
      %3322 = vmatprep.subr.mxu0 0.0
      %3323 = vmatpush1.msra.mxu0 0.0
      %3324 = vmatprep.subr.mxu0 0.0
      %3325 = vmatpush1.msra.mxu0 0.0
      %3326 = vmatprep.subr.mxu0 0.0
      %3327 = vmatpush1.msra.mxu0 %v3298
      %3328 = vmatprep.subr.mxu0 0.0
      %3329 = vmatpush1.msra.mxu0 %v3297
      %3330 = vmatprep.subr.mxu0 0.0
      %3331 = vmatpush1.msra.mxu0 %v3296
      %3332 = vmatprep.subr.mxu0 0.0
      %3333 = vmatpush1.msra.mxu0 %v3295
      %3334 = vmatprep.subr.mxu0 0.0
      %3335 = vmatpush1.msra.mxu0 %v3294
      %3336 = vmatprep.subr.mxu0 0.0
      %3337 = vmatpush1.msra.mxu0 %v3293
      %3338 = vmatprep.subr.mxu0 0.0
      %3339 = vmatpush1.msra.mxu0 %v3292
      %3340 = vmatprep.subr.mxu0 0.0
      %3341 = vmatpush1.msra.mxu0 %v3291
      %3342 = vmatprep.subr.mxu0 0.0
      %3343 = vmatpush2.msra.mxu0 0.0
      %3344 = vmatprep.subr.mxu0 0.0
      %3345 = vmatpush2.msra.mxu0 0.0
      %3346 = vmatprep.subr.mxu0 0.0
      %3347 = vmatpush2.msra.mxu0 0.0
      %3348 = vmatprep.subr.mxu0 0.0
      %3349 = vmatpush2.msra.mxu0 0.0
      %3350 = vmatprep.subr.mxu0 0.0
      %3351 = vmatpush2.msra.mxu0 0.0
      %3352 = vmatprep.subr.mxu0 0.0
      %3353 = vmatpush2.msra.mxu0 0.0
      %3354 = vmatprep.subr.mxu0 0.0
      %3355 = vmatpush2.msra.mxu0 0.0
      %3356 = vmatprep.subr.mxu0 0.0
      %3357 = vmatpush2.msra.mxu0 0.0
      %3358 = vmatprep.subr.mxu0 0.0
      %3359 = vmatpush2.msra.mxu0 0.0
      %3360 = vmatprep.subr.mxu0 0.0
      %3361 = vmatpush2.msra.mxu0 0.0
      %3362 = vmatprep.subr.mxu0 0.0
      %3363 = vmatpush2.msra.mxu0 0.0
      %3364 = vmatprep.subr.mxu0 0.0
      %3365 = vmatpush2.msra.mxu0 0.0
      %3366 = vmatprep.subr.mxu0 0.0
      %3367 = vmatpush2.msra.mxu0 0.0
      %3368 = vmatprep.subr.mxu0 0.0
      %3369 = vmatpush2.msra.mxu0 0.0
      %3370 = vmatprep.subr.mxu0 0.0
      %3371 = vmatpush2.msra.mxu0 0.0
      %3372 = vmatprep.subr.mxu0 0.0
      %3373 = vmatpush2.msra.mxu0 0.0
      %3374 = vmatprep.mubr.f32.mxu0 0.0
      %3375 = vmatmul.mubr.f32.gmra.mxu0 %v3308
      %v3376 = vpop.f32.mrf.mxu0
      %v3377 = vadd.f32 %v3305, %v3376
      %v3378 = vpop.f32.mrf.mxu0
      %3379 = vdwg.mxu0
      %v3380 = vadd.f32 %v3194, %v3377
      %s3381 = scalar_lea.vmem %s18, 1
      %v3382 = vld [vmem:[%s3381] sm:$0x1]
      %s3383 = scalar_lea.vmem %s19, 1
      %v3384 = vld [vmem:[%s3383] sm:$0x1]
      %v3385 = vsel %vm773, %v3380, 0.0
      %3386 = vadd.xlane.f32.xlu0 %v3385
      %v3387 = vpop.xlane.xlu0 %3386
      %v3388 = vmul.f32 %v3387, %v777
      %v3389 = vsub.f32 %v3380, %v3388
      %v3390 = vmul.f32 %v3389, %v3389
      %v3391 = vsel %vm773, %v3390, 0.0
      %3392 = vadd.xlane.f32.xlu0 %v3391
      %v3393 = vpop.xlane.xlu0 %3392
      %v3394 = vmul.f32 %v3393, %v777
      %v3395 = vadd.f32 %v3394, 1e-12
      %v3396 = vrsqrt.pop %v3395
      %v3397 = vmul.f32 %v3389, %v3396
      %v3399 = vlaneseq
      %v3400 = vshrl.u32 %v3399, 7
      %v3401 = vsub.s32 0, %v3400
      %v3402 = vrot.slane %v3382, %v3401
      %v3404 = vmul.f32 %v3397, %v3402
      %v3406 = vlaneseq
      %v3407 = vshrl.u32 %v3406, 7
      %v3408 = vsub.s32 0, %v3407
      %v3409 = vrot.slane %v3384, %v3408
      %v3411 = vadd.f32 %v3404, %v3409
      %v3412 = vld [vmem:[%s20] sm:$0xff]
      %v3413 = vld [vmem:[%s20 + $0x8] sm:$0xff]
      %v3414 = vld [vmem:[%s20 + $0x10] sm:$0xff]
      %v3415 = vld [vmem:[%s20 + $0x18] sm:$0xff]
      %v3416 = vld [vmem:[%s21] sm:$0x1]
      %v3418 = vlaneseq
      %v3419 = vshrl.u32 %v3418, 7
      %v3420 = vsub.s32 0, %v3419
      %v3421 = vrot.slane %v3416, %v3420
      %v3424 = vsel %vm773, %v3411, 0
      %3426 = vmatprep.subr.mxu0 0.0
      %3427 = vmatpush1.msra.mxu0 0.0
      %3428 = vmatprep.subr.mxu0 0.0
      %3429 = vmatpush1.msra.mxu0 0.0
      %3430 = vmatprep.subr.mxu0 0.0
      %3431 = vmatpush1.msra.mxu0 0.0
      %3432 = vmatprep.subr.mxu0 0.0
      %3433 = vmatpush1.msra.mxu0 0.0
      %3434 = vmatprep.subr.mxu0 0.0
      %3435 = vmatpush1.msra.mxu0 0.0
      %3436 = vmatprep.subr.mxu0 0.0
      %3437 = vmatpush1.msra.mxu0 0.0
      %3438 = vmatprep.subr.mxu0 0.0
      %3439 = vmatpush1.msra.mxu0 0.0
      %3440 = vmatprep.subr.mxu0 0.0
      %3441 = vmatpush1.msra.mxu0 0.0
      %3442 = vmatprep.subr.mxu0 0.0
      %3443 = vmatpush1.msra.mxu0 0.0
      %3444 = vmatprep.subr.mxu0 0.0
      %3445 = vmatpush1.msra.mxu0 0.0
      %3446 = vmatprep.subr.mxu0 0.0
      %3447 = vmatpush1.msra.mxu0 0.0
      %3448 = vmatprep.subr.mxu0 0.0
      %3449 = vmatpush1.msra.mxu0 0.0
      %3450 = vmatprep.subr.mxu0 0.0
      %3451 = vmatpush1.msra.mxu0 %v3415
      %3452 = vmatprep.subr.mxu0 0.0
      %3453 = vmatpush1.msra.mxu0 %v3414
      %3454 = vmatprep.subr.mxu0 0.0
      %3455 = vmatpush1.msra.mxu0 %v3413
      %3456 = vmatprep.subr.mxu0 0.0
      %3457 = vmatpush1.msra.mxu0 %v3412
      %3458 = vmatprep.subr.mxu0 0.0
      %3459 = vmatpush2.msra.mxu0 0.0
      %3460 = vmatprep.subr.mxu0 0.0
      %3461 = vmatpush2.msra.mxu0 0.0
      %3462 = vmatprep.subr.mxu0 0.0
      %3463 = vmatpush2.msra.mxu0 0.0
      %3464 = vmatprep.subr.mxu0 0.0
      %3465 = vmatpush2.msra.mxu0 0.0
      %3466 = vmatprep.subr.mxu0 0.0
      %3467 = vmatpush2.msra.mxu0 0.0
      %3468 = vmatprep.subr.mxu0 0.0
      %3469 = vmatpush2.msra.mxu0 0.0
      %3470 = vmatprep.subr.mxu0 0.0
      %3471 = vmatpush2.msra.mxu0 0.0
      %3472 = vmatprep.subr.mxu0 0.0
      %3473 = vmatpush2.msra.mxu0 0.0
      %3474 = vmatprep.subr.mxu0 0.0
      %3475 = vmatpush2.msra.mxu0 0.0
      %3476 = vmatprep.subr.mxu0 0.0
      %3477 = vmatpush2.msra.mxu0 0.0
      %3478 = vmatprep.subr.mxu0 0.0
      %3479 = vmatpush2.msra.mxu0 0.0
      %3480 = vmatprep.subr.mxu0 0.0
      %3481 = vmatpush2.msra.mxu0 0.0
      %3482 = vmatprep.subr.mxu0 0.0
      %3483 = vmatpush2.msra.mxu0 0.0
      %3484 = vmatprep.subr.mxu0 0.0
      %3485 = vmatpush2.msra.mxu0 0.0
      %3486 = vmatprep.subr.mxu0 0.0
      %3487 = vmatpush2.msra.mxu0 0.0
      %3488 = vmatprep.subr.mxu0 0.0
      %3489 = vmatpush2.msra.mxu0 0.0
      %3490 = vmatprep.mubr.f32.mxu0 0.0
      %3491 = vmatmul.mubr.f32.gmra.mxu0 %v3424
      %v3492 = vpop.f32.mrf.mxu0
      %v3493 = vadd.f32 %v3421, %v3492
      %v3494 = vpop.f32.mrf.mxu0
      %3495 = vdwg.mxu0
      %v3496 = vlaneseq
      %v3497 = vand.u32 %v3496, 127
      %v3498 = vlaneseq
      %v3499 = vshrl.u32 %v3498, 7
      %vm3500 = vcmp.eq.s32.totalorder %v3499, %v3497
      %v3501 = vsel %vm3500, 1, 0
      %v3502 = vcvt.s32.f32 %v3501
      %v3503 = vld [vmem:[%s23] sm:$0x1f]
      %v3504 = vld [vmem:[%s24] sm:$0x1]
      %v3505 = vld [vmem:[%s25] sm:$0x1]
      %s3506 = sld [smem:[#allocation5 + %s705]]
      %v3507 = vstv %s3506
      %vm3508 = vcmp.eq.s32.totalorder %v3497, %v3507
      %v3509 = vsel %vm3508, 1, 0
      %v3510 = vcvt.s32.f32 %v3509
      %v3511 = vadd.f32 %v3504, %v3493
      %v3512 = vmul.f32 %v3511, %v3510
      %vm3513 = vcmask 32768
      %v3514 = vsel %vm3513, %v3512, 0.0
      %3515 = vadd.xlane.f32.xlu0 %v3514
      %v3516 = vpop.xlane.xlu0 %3515
      %v3517 = vrot.slane %v3516, 4
      %v3518 = vadd.f32 %v3516, %v3517
      %v3519 = vrot.slane %v3518, 2
      %v3520 = vadd.f32 %v3518, %v3519
      %v3521 = vrot.slane %v3520, 1
      %v3522 = vadd.f32 %v3520, %v3521
      %s3523 = vtos %v3522
      %s3524 = sld [smem:[#allocation6 + %s714]]
      %s3525 = scvt.s32.f32 %s3524
      %s3526 = sld [smem:[#allocation5 + %s714]]
      %v3527 = vstv %s3526
      %vm3528 = vcmp.eq.s32.totalorder %v3497, %v3527
      %v3529 = vsel %vm3528, 1, 0
      %v3530 = vcvt.s32.f32 %v3529
      %s3531 = scalar_lea.vmem %s22, %s3506
      %v3532 = vld [vmem:[%s3531] sm:$0x1]
      %v3533 = vmul.f32 %v3532, %v3530
      %v3534 = vsel %vm3513, %v3533, 0.0
      %3535 = vadd.xlane.f32.xlu0 %v3534
      %v3536 = vpop.xlane.xlu0 %3535
      %v3537 = vrot.slane %v3536, 4
      %v3538 = vadd.f32 %v3536, %v3537
      %v3539 = vrot.slane %v3538, 2
      %v3540 = vadd.f32 %v3538, %v3539
      %v3541 = vrot.slane %v3540, 1
      %v3542 = vadd.f32 %v3540, %v3541
      %s3543 = vtos %v3542
      %v3544 = vmul.f32 %v3493, %v3530
      %v3546 = vrot.slane %v3544, 1
      %v3548 = vsel %vm3513, %v3546, 0.0
      %3549 = vadd.xlane.f32.xlu0 %v3548
      %v3550 = vpop.xlane.xlu0 %3549
      %v3551 = vrot.slane %v3550, 4
      %v3552 = vadd.f32 %v3550, %v3551
      %v3553 = vrot.slane %v3552, 2
      %v3554 = vadd.f32 %v3552, %v3553
      %v3555 = vrot.slane %v3554, 1
      %v3556 = vadd.f32 %v3554, %v3555
      %s3557 = vtos %v3556
      %s3558 = sadd.f32 %s3543, %s3557
      %s3559 = smul.f32 %s3558, %s3525
      %s3560 = sadd.f32 %s3523, %s3559
      %v3562 = vlaneseq
      %v3563 = vshrl.u32 %v3562, 7
      %v3564 = vsub.s32 0, %v3563
      %v3565 = vrot.slane %v3511, %v3564
      %v3567 = vadd.f32 %v3503, %v3565
      %vm3568 = vcmask 36864
      %v3569 = vsel %vm3568, %v3567, -inf
      %3570 = vmax.xlane.f32.xlu0 %v3569
      %v3571 = vpop.xlane.xlu0 %3570
      %v3572 = vsub.f32 %v3567, %v3571
      %v3573 = vmul.f32 %v3572, 1.442695
      %v3574 = vpow.pop %v3573
      %v3575 = vsel %vm3568, %v3574, 0.0
      %3576 = vadd.xlane.f32.xlu0 %v3575
      %v3577 = vpop.xlane.xlu0 %3576
      %v3578 = vlog2.pop %v3577
      %v3579 = vmul.f32 %v3578, 0.6931472
      %v3580 = vadd.f32 %v3571, %v3579
      %v3581 = vmul.f32 %v3580, %v3502
      %v3582 = vsel %vm3568, %v3581, 0.0
      %v3583 = vrot.slane %v3582, 4
      %v3584 = vadd.f32 %v3582, %v3583
      %v3585 = vrot.slane %v3584, 2
      %v3586 = vadd.f32 %v3584, %v3585
      %v3587 = vrot.slane %v3586, 1
      %v3588 = vadd.f32 %v3586, %v3587
      %v3589 = vadd.f32 %v3588, %v3493
      %p3590 = scmp.gt.s32.totalorder %s3524, 0
      %s3591 = scalar_select %p3590, 1, 0
      %v3592 = vstv %s3591
      %vm3593 = vcmp.eq.s32.totalorder %v3592, 1
      %v3594 = vsel %vm3593, %v3589, %v3565
      %s3595 = scalar_select %p3590, %s3526, %s3506
      %s3596 = sld [smem:[#allocation6 + %s722]]
      %s3597 = scvt.s32.f32 %s3596
      %s3598 = sld [smem:[#allocation5 + %s722]]
      %v3599 = vstv %s3598
      %vm3600 = vcmp.eq.s32.totalorder %v3497, %v3599
      %v3601 = vsel %vm3600, 1, 0
      %v3602 = vcvt.s32.f32 %v3601
      %s3603 = scalar_lea.vmem %s22, %s3526
      %v3604 = vld [vmem:[%s3603] sm:$0x1]
      %v3605 = vmul.f32 %v3604, %v3602
      %v3606 = vsel %vm3513, %v3605, 0.0
      %3607 = vadd.xlane.f32.xlu0 %v3606
      %v3608 = vpop.xlane.xlu0 %3607
      %v3609 = vrot.slane %v3608, 4
      %v3610 = vadd.f32 %v3608, %v3609
      %v3611 = vrot.slane %v3610, 2
      %v3612 = vadd.f32 %v3610, %v3611
      %v3613 = vrot.slane %v3612, 1
      %v3614 = vadd.f32 %v3612, %v3613
      %s3615 = vtos %v3614
      %v3616 = vmul.f32 %v3493, %v3602
      %v3618 = vrot.slane %v3616, 2
      %v3620 = vsel %vm3513, %v3618, 0.0
      %3621 = vadd.xlane.f32.xlu0 %v3620
      %v3622 = vpop.xlane.xlu0 %3621
      %v3623 = vrot.slane %v3622, 4
      %v3624 = vadd.f32 %v3622, %v3623
      %v3625 = vrot.slane %v3624, 2
      %v3626 = vadd.f32 %v3624, %v3625
      %v3627 = vrot.slane %v3626, 1
      %v3628 = vadd.f32 %v3626, %v3627
      %s3629 = vtos %v3628
      %s3630 = sadd.f32 %s3615, %s3629
      %s3631 = smul.f32 %s3630, %s3597
      %s3632 = sadd.f32 %s3560, %s3631
      %v3633 = vlaneseq
      %v3634 = vshrl.u32 %v3633, 7
      %v3635 = vsub.s32 1, %v3634
      %v3636 = vrot.slane %v3594, %v3635
      %v3637 = vadd.f32 %v3503, %v3636
      %v3638 = vsel %vm3568, %v3637, -inf
      %3639 = vmax.xlane.f32.xlu0 %v3638
      %v3640 = vpop.xlane.xlu0 %3639
      %v3641 = vsub.f32 %v3637, %v3640
      %v3642 = vmul.f32 %v3641, 1.442695
      %v3643 = vpow.pop %v3642
      %v3644 = vsel %vm3568, %v3643, 0.0
      %3645 = vadd.xlane.f32.xlu0 %v3644
      %v3646 = vpop.xlane.xlu0 %3645
      %v3647 = vlog2.pop %v3646
      %v3648 = vmul.f32 %v3647, 0.6931472
      %v3649 = vadd.f32 %v3640, %v3648
      %v3650 = vmul.f32 %v3649, %v3502
      %v3651 = vsel %vm3568, %v3650, 0.0
      %v3652 = vrot.slane %v3651, 4
      %v3653 = vadd.f32 %v3651, %v3652
      %v3654 = vrot.slane %v3653, 2
      %v3655 = vadd.f32 %v3653, %v3654
      %v3656 = vrot.slane %v3655, 1
      %v3657 = vadd.f32 %v3655, %v3656
      %v3658 = vadd.f32 %v3657, %v3493
      %p3659 = scmp.gt.s32.totalorder %s3596, 0
      %s3660 = scalar_select %p3659, 1, 0
      %v3661 = vstv %s3660
      %vm3662 = vcmp.eq.s32.totalorder %v3661, 1
      %v3664 = vrot.slane %v3594, 7
      %v3666 = vsel %vm3662, %v3658, %v3664
      %s3667 = scalar_select %p3659, %s3598, %s3595
      %s3668 = sld [smem:[#allocation6 + %s730]]
      %s3669 = scvt.s32.f32 %s3668
      %s3670 = sld [smem:[#allocation5 + %s730]]
      %v3671 = vstv %s3670
      %vm3672 = vcmp.eq.s32.totalorder %v3497, %v3671
      %v3673 = vsel %vm3672, 1, 0
      %v3674 = vcvt.s32.f32 %v3673
      %s3675 = scalar_lea.vmem %s22, %s3598
      %v3676 = vld [vmem:[%s3675] sm:$0x1]
      %v3677 = vmul.f32 %v3676, %v3674
      %v3678 = vsel %vm3513, %v3677, 0.0
      %3679 = vadd.xlane.f32.xlu0 %v3678
      %v3680 = vpop.xlane.xlu0 %3679
      %v3681 = vrot.slane %v3680, 4
      %v3682 = vadd.f32 %v3680, %v3681
      %v3683 = vrot.slane %v3682, 2
      %v3684 = vadd.f32 %v3682, %v3683
      %v3685 = vrot.slane %v3684, 1
      %v3686 = vadd.f32 %v3684, %v3685
      %s3687 = vtos %v3686
      %v3688 = vmul.f32 %v3493, %v3674
      %v3690 = vrot.slane %v3688, 3
      %v3692 = vsel %vm3513, %v3690, 0.0
      %3693 = vadd.xlane.f32.xlu0 %v3692
      %v3694 = vpop.xlane.xlu0 %3693
      %v3695 = vrot.slane %v3694, 4
      %v3696 = vadd.f32 %v3694, %v3695
      %v3697 = vrot.slane %v3696, 2
      %v3698 = vadd.f32 %v3696, %v3697
      %v3699 = vrot.slane %v3698, 1
      %v3700 = vadd.f32 %v3698, %v3699
      %s3701 = vtos %v3700
      %s3702 = sadd.f32 %s3687, %s3701
      %s3703 = smul.f32 %s3702, %s3669
      %s3704 = sadd.f32 %s3632, %s3703
      %v3705 = vlaneseq
      %v3706 = vshrl.u32 %v3705, 7
      %v3707 = vsub.s32 2, %v3706
      %v3708 = vrot.slane %v3666, %v3707
      %v3709 = vadd.f32 %v3503, %v3708
      %v3710 = vsel %vm3568, %v3709, -inf
      %3711 = vmax.xlane.f32.xlu0 %v3710
      %v3712 = vpop.xlane.xlu0 %3711
      %v3713 = vsub.f32 %v3709, %v3712
      %v3714 = vmul.f32 %v3713, 1.442695
      %v3715 = vpow.pop %v3714
      %v3716 = vsel %vm3568, %v3715, 0.0
      %3717 = vadd.xlane.f32.xlu0 %v3716
      %v3718 = vpop.xlane.xlu0 %3717
      %v3719 = vlog2.pop %v3718
      %v3720 = vmul.f32 %v3719, 0.6931472
      %v3721 = vadd.f32 %v3712, %v3720
      %v3722 = vmul.f32 %v3721, %v3502
      %v3723 = vsel %vm3568, %v3722, 0.0
      %v3724 = vrot.slane %v3723, 4
      %v3725 = vadd.f32 %v3723, %v3724
      %v3726 = vrot.slane %v3725, 2
      %v3727 = vadd.f32 %v3725, %v3726
      %v3728 = vrot.slane %v3727, 1
      %v3729 = vadd.f32 %v3727, %v3728
      %v3730 = vadd.f32 %v3729, %v3493
      %p3731 = scmp.gt.s32.totalorder %s3668, 0
      %s3732 = scalar_select %p3731, 1, 0
      %v3733 = vstv %s3732
      %vm3734 = vcmp.eq.s32.totalorder %v3733, 1
      %v3736 = vrot.slane %v3666, 7
      %v3738 = vsel %vm3734, %v3730, %v3736
      %s3739 = scalar_select %p3731, %s3670, %s3667
      %s3740 = sld [smem:[#allocation6 + %s738]]
      %s3741 = scvt.s32.f32 %s3740
      %s3742 = sld [smem:[#allocation5 + %s738]]
      %v3743 = vstv %s3742
      %vm3744 = vcmp.eq.s32.totalorder %v3497, %v3743
      %v3745 = vsel %vm3744, 1, 0
      %v3746 = vcvt.s32.f32 %v3745
      %s3747 = scalar_lea.vmem %s22, %s3670
      %v3748 = vld [vmem:[%s3747] sm:$0x1]
      %v3749 = vmul.f32 %v3748, %v3746
      %v3750 = vsel %vm3513, %v3749, 0.0
      %3751 = vadd.xlane.f32.xlu0 %v3750
      %v3752 = vpop.xlane.xlu0 %3751
      %v3753 = vrot.slane %v3752, 4
      %v3754 = vadd.f32 %v3752, %v3753
      %v3755 = vrot.slane %v3754, 2
      %v3756 = vadd.f32 %v3754, %v3755
      %v3757 = vrot.slane %v3756, 1
      %v3758 = vadd.f32 %v3756, %v3757
      %s3759 = vtos %v3758
      %v3760 = vmul.f32 %v3493, %v3746
      %v3762 = vrot.slane %v3760, 4
      %v3764 = vsel %vm3513, %v3762, 0.0
      %3765 = vadd.xlane.f32.xlu0 %v3764
      %v3766 = vpop.xlane.xlu0 %3765
      %v3767 = vrot.slane %v3766, 4
      %v3768 = vadd.f32 %v3766, %v3767
      %v3769 = vrot.slane %v3768, 2
      %v3770 = vadd.f32 %v3768, %v3769
      %v3771 = vrot.slane %v3770, 1
      %v3772 = vadd.f32 %v3770, %v3771
      %s3773 = vtos %v3772
      %s3774 = sadd.f32 %s3759, %s3773
      %s3775 = smul.f32 %s3774, %s3741
      %s3776 = sadd.f32 %s3704, %s3775
      %v3777 = vlaneseq
      %v3778 = vshrl.u32 %v3777, 7
      %v3779 = vsub.s32 3, %v3778
      %v3780 = vrot.slane %v3738, %v3779
      %v3781 = vadd.f32 %v3503, %v3780
      %v3782 = vsel %vm3568, %v3781, -inf
      %3783 = vmax.xlane.f32.xlu0 %v3782
      %v3784 = vpop.xlane.xlu0 %3783
      %v3785 = vsub.f32 %v3781, %v3784
      %v3786 = vmul.f32 %v3785, 1.442695
      %v3787 = vpow.pop %v3786
      %v3788 = vsel %vm3568, %v3787, 0.0
      %3789 = vadd.xlane.f32.xlu0 %v3788
      %v3790 = vpop.xlane.xlu0 %3789
      %v3791 = vlog2.pop %v3790
      %v3792 = vmul.f32 %v3791, 0.6931472
      %v3793 = vadd.f32 %v3784, %v3792
      %v3794 = vmul.f32 %v3793, %v3502
      %v3795 = vsel %vm3568, %v3794, 0.0
      %v3796 = vrot.slane %v3795, 4
      %v3797 = vadd.f32 %v3795, %v3796
      %v3798 = vrot.slane %v3797, 2
      %v3799 = vadd.f32 %v3797, %v3798
      %v3800 = vrot.slane %v3799, 1
      %v3801 = vadd.f32 %v3799, %v3800
      %v3802 = vadd.f32 %v3801, %v3493
      %p3803 = scmp.gt.s32.totalorder %s3740, 0
      %s3804 = scalar_select %p3803, 1, 0
      %v3805 = vstv %s3804
      %vm3806 = vcmp.eq.s32.totalorder %v3805, 1
      %v3808 = vrot.slane %v3738, 7
      %v3810 = vsel %vm3806, %v3802, %v3808
      %s3811 = scalar_select %p3803, %s3742, %s3739
      %s3812 = sld [smem:[#allocation6 + %s746]]
      %s3813 = scvt.s32.f32 %s3812
      %s3814 = sld [smem:[#allocation5 + %s746]]
      %v3815 = vstv %s3814
      %vm3816 = vcmp.eq.s32.totalorder %v3497, %v3815
      %v3817 = vsel %vm3816, 1, 0
      %v3818 = vcvt.s32.f32 %v3817
      %s3819 = scalar_lea.vmem %s22, %s3742
      %v3820 = vld [vmem:[%s3819] sm:$0x1]
      %v3821 = vmul.f32 %v3820, %v3818
      %v3822 = vsel %vm3513, %v3821, 0.0
      %3823 = vadd.xlane.f32.xlu0 %v3822
      %v3824 = vpop.xlane.xlu0 %3823
      %v3825 = vrot.slane %v3824, 4
      %v3826 = vadd.f32 %v3824, %v3825
      %v3827 = vrot.slane %v3826, 2
      %v3828 = vadd.f32 %v3826, %v3827
      %v3829 = vrot.slane %v3828, 1
      %v3830 = vadd.f32 %v3828, %v3829
      %s3831 = vtos %v3830
      %v3832 = vmul.f32 %v3493, %v3818
      %v3834 = vrot.slane %v3832, 5
      %v3836 = vsel %vm3513, %v3834, 0.0
      %3837 = vadd.xlane.f32.xlu0 %v3836
      %v3838 = vpop.xlane.xlu0 %3837
      %v3839 = vrot.slane %v3838, 4
      %v3840 = vadd.f32 %v3838, %v3839
      %v3841 = vrot.slane %v3840, 2
      %v3842 = vadd.f32 %v3840, %v3841
      %v3843 = vrot.slane %v3842, 1
      %v3844 = vadd.f32 %v3842, %v3843
      %s3845 = vtos %v3844
      %s3846 = sadd.f32 %s3831, %s3845
      %s3847 = smul.f32 %s3846, %s3813
      %s3848 = sadd.f32 %s3776, %s3847
      %v3849 = vlaneseq
      %v3850 = vshrl.u32 %v3849, 7
      %v3851 = vsub.s32 4, %v3850
      %v3852 = vrot.slane %v3810, %v3851
      %v3853 = vadd.f32 %v3503, %v3852
      %v3854 = vsel %vm3568, %v3853, -inf
      %3855 = vmax.xlane.f32.xlu0 %v3854
      %v3856 = vpop.xlane.xlu0 %3855
      %v3857 = vsub.f32 %v3853, %v3856
      %v3858 = vmul.f32 %v3857, 1.442695
      %v3859 = vpow.pop %v3858
      %v3860 = vsel %vm3568, %v3859, 0.0
      %3861 = vadd.xlane.f32.xlu0 %v3860
      %v3862 = vpop.xlane.xlu0 %3861
      %v3863 = vlog2.pop %v3862
      %v3864 = vmul.f32 %v3863, 0.6931472
      %v3865 = vadd.f32 %v3856, %v3864
      %v3866 = vmul.f32 %v3865, %v3502
      %v3867 = vsel %vm3568, %v3866, 0.0
      %v3868 = vrot.slane %v3867, 4
      %v3869 = vadd.f32 %v3867, %v3868
      %v3870 = vrot.slane %v3869, 2
      %v3871 = vadd.f32 %v3869, %v3870
      %v3872 = vrot.slane %v3871, 1
      %v3873 = vadd.f32 %v3871, %v3872
      %v3874 = vadd.f32 %v3873, %v3493
      %p3875 = scmp.gt.s32.totalorder %s3812, 0
      %s3876 = scalar_select %p3875, 1, 0
      %v3877 = vstv %s3876
      %vm3878 = vcmp.eq.s32.totalorder %v3877, 1
      %v3880 = vrot.slane %v3810, 7
      %v3882 = vsel %vm3878, %v3874, %v3880
      %s3883 = scalar_select %p3875, %s3814, %s3811
      %s3884 = sld [smem:[#allocation6 + %s754]]
      %s3885 = scvt.s32.f32 %s3884
      %s3886 = sld [smem:[#allocation5 + %s754]]
      %v3887 = vstv %s3886
      %vm3888 = vcmp.eq.s32.totalorder %v3497, %v3887
      %v3889 = vsel %vm3888, 1, 0
      %v3890 = vcvt.s32.f32 %v3889
      %s3891 = scalar_lea.vmem %s22, %s3814
      %v3892 = vld [vmem:[%s3891] sm:$0x1]
      %v3893 = vmul.f32 %v3892, %v3890
      %v3894 = vsel %vm3513, %v3893, 0.0
      %3895 = vadd.xlane.f32.xlu0 %v3894
      %v3896 = vpop.xlane.xlu0 %3895
      %v3897 = vrot.slane %v3896, 4
      %v3898 = vadd.f32 %v3896, %v3897
      %v3899 = vrot.slane %v3898, 2
      %v3900 = vadd.f32 %v3898, %v3899
      %v3901 = vrot.slane %v3900, 1
      %v3902 = vadd.f32 %v3900, %v3901
      %s3903 = vtos %v3902
      %v3904 = vmul.f32 %v3493, %v3890
      %v3906 = vrot.slane %v3904, 6
      %v3908 = vsel %vm3513, %v3906, 0.0
      %3909 = vadd.xlane.f32.xlu0 %v3908
      %v3910 = vpop.xlane.xlu0 %3909
      %v3911 = vrot.slane %v3910, 4
      %v3912 = vadd.f32 %v3910, %v3911
      %v3913 = vrot.slane %v3912, 2
      %v3914 = vadd.f32 %v3912, %v3913
      %v3915 = vrot.slane %v3914, 1
      %v3916 = vadd.f32 %v3914, %v3915
      %s3917 = vtos %v3916
      %s3918 = sadd.f32 %s3903, %s3917
      %s3919 = smul.f32 %s3918, %s3885
      %s3920 = sadd.f32 %s3848, %s3919
      %v3921 = vlaneseq
      %v3922 = vshrl.u32 %v3921, 7
      %v3923 = vsub.s32 5, %v3922
      %v3924 = vrot.slane %v3882, %v3923
      %v3925 = vadd.f32 %v3503, %v3924
      %v3926 = vsel %vm3568, %v3925, -inf
      %3927 = vmax.xlane.f32.xlu0 %v3926
      %v3928 = vpop.xlane.xlu0 %3927
      %v3929 = vsub.f32 %v3925, %v3928
      %v3930 = vmul.f32 %v3929, 1.442695
      %v3931 = vpow.pop %v3930
      %v3932 = vsel %vm3568, %v3931, 0.0
      %3933 = vadd.xlane.f32.xlu0 %v3932
      %v3934 = vpop.xlane.xlu0 %3933
      %v3935 = vlog2.pop %v3934
      %v3936 = vmul.f32 %v3935, 0.6931472
      %v3937 = vadd.f32 %v3928, %v3936
      %v3938 = vmul.f32 %v3937, %v3502
      %v3939 = vsel %vm3568, %v3938, 0.0
      %v3940 = vrot.slane %v3939, 4
      %v3941 = vadd.f32 %v3939, %v3940
      %v3942 = vrot.slane %v3941, 2
      %v3943 = vadd.f32 %v3941, %v3942
      %v3944 = vrot.slane %v3943, 1
      %v3945 = vadd.f32 %v3943, %v3944
      %v3946 = vadd.f32 %v3945, %v3493
      %p3947 = scmp.gt.s32.totalorder %s3884, 0
      %s3948 = scalar_select %p3947, 1, 0
      %v3949 = vstv %s3948
      %vm3950 = vcmp.eq.s32.totalorder %v3949, 1
      %v3952 = vrot.slane %v3882, 7
      %v3954 = vsel %vm3950, %v3946, %v3952
      %s3955 = scalar_select %p3947, %s3886, %s3883
      %s3956 = sld [smem:[#allocation6 + %s762]]
      %s3957 = scvt.s32.f32 %s3956
      %s3958 = sld [smem:[#allocation5 + %s762]]
      %v3959 = vstv %s3958
      %vm3960 = vcmp.eq.s32.totalorder %v3497, %v3959
      %v3961 = vsel %vm3960, 1, 0
      %v3962 = vcvt.s32.f32 %v3961
      %s3963 = scalar_lea.vmem %s22, %s3886
      %v3964 = vld [vmem:[%s3963] sm:$0x1]
      %v3965 = vmul.f32 %v3964, %v3962
      %v3966 = vsel %vm3513, %v3965, 0.0
      %3967 = vadd.xlane.f32.xlu0 %v3966
      %v3968 = vpop.xlane.xlu0 %3967
      %v3969 = vrot.slane %v3968, 4
      %v3970 = vadd.f32 %v3968, %v3969
      %v3971 = vrot.slane %v3970, 2
      %v3972 = vadd.f32 %v3970, %v3971
      %v3973 = vrot.slane %v3972, 1
      %v3974 = vadd.f32 %v3972, %v3973
      %s3975 = vtos %v3974
      %v3976 = vmul.f32 %v3493, %v3962
      %v3978 = vrot.slane %v3976, 7
      %v3980 = vsel %vm3513, %v3978, 0.0
      %3981 = vadd.xlane.f32.xlu0 %v3980
      %v3982 = vpop.xlane.xlu0 %3981
      %v3983 = vrot.slane %v3982, 4
      %v3984 = vadd.f32 %v3982, %v3983
      %v3985 = vrot.slane %v3984, 2
      %v3986 = vadd.f32 %v3984, %v3985
      %v3987 = vrot.slane %v3986, 1
      %v3988 = vadd.f32 %v3986, %v3987
      %s3989 = vtos %v3988
      %s3990 = sadd.f32 %s3975, %s3989
      %s3991 = smul.f32 %s3990, %s3957
      %s3992 = sadd.f32 %s3920, %s3991
      %v3993 = vlaneseq
      %v3994 = vshrl.u32 %v3993, 7
      %v3995 = vsub.s32 6, %v3994
      %v3996 = vrot.slane %v3954, %v3995
      %v3997 = vadd.f32 %v3503, %v3996
      %v3998 = vsel %vm3568, %v3997, -inf
      %3999 = vmax.xlane.f32.xlu0 %v3998
      %v4000 = vpop.xlane.xlu0 %3999
      %v4001 = vsub.f32 %v3997, %v4000
      %v4002 = vmul.f32 %v4001, 1.442695
      %v4003 = vpow.pop %v4002
      %v4004 = vsel %vm3568, %v4003, 0.0
      %4005 = vadd.xlane.f32.xlu0 %v4004
      %v4006 = vpop.xlane.xlu0 %4005
      %v4007 = vlog2.pop %v4006
      %v4008 = vmul.f32 %v4007, 0.6931472
      %v4009 = vadd.f32 %v4000, %v4008
      %v4010 = vmul.f32 %v4009, %v3502
      %v4011 = vsel %vm3568, %v4010, 0.0
      %v4012 = vrot.slane %v4011, 4
      %v4013 = vadd.f32 %v4011, %v4012
      %v4014 = vrot.slane %v4013, 2
      %v4015 = vadd.f32 %v4013, %v4014
      %v4016 = vrot.slane %v4015, 1
      %v4017 = vadd.f32 %v4015, %v4016
      %v4018 = vadd.f32 %v4017, %v3493
      %p4019 = scmp.gt.s32.totalorder %s3956, 0
      %s4020 = scalar_select %p4019, 1, 0
      %v4021 = vstv %s4020
      %vm4022 = vcmp.eq.s32.totalorder %v4021, 1
      %v4024 = vrot.slane %v3954, 7
      %v4026 = vsel %vm4022, %v4018, %v4024
      %s4027 = scalar_select %p4019, %s3958, %s3955
      %v4028 = vstv %s4027
      %vm4029 = vcmp.eq.s32.totalorder %v3497, %v4028
      %v4030 = vsel %vm4029, 1, 0
      %v4031 = vcvt.s32.f32 %v4030
      %v4032 = vmul.f32 %v3505, %v4031
      %v4033 = vsel %vm3513, %v4032, 0.0
      %4034 = vadd.xlane.f32.xlu0 %v4033
      %v4035 = vpop.xlane.xlu0 %4034
      %v4036 = vrot.slane %v4035, 4
      %v4037 = vadd.f32 %v4035, %v4036
      %v4038 = vrot.slane %v4037, 2
      %v4039 = vadd.f32 %v4037, %v4038
      %v4040 = vrot.slane %v4039, 1
      %v4041 = vadd.f32 %v4039, %v4040
      %s4042 = vtos %v4041
      %s4043 = sadd.f32 %s3992, %s4042
      %v4045 = vlaneseq
      %v4046 = vshrl.u32 %v4045, 7
      %v4047 = vsub.s32 0, %v4046
      %v4048 = vrot.slane %v3505, %v4047
      %v4050 = vadd.f32 %v4026, %v4048
      %vm4051 = vcmask 39943
      %v4052 = vsel %vm4051, %v4050, -inf
      %4053 = vmax.xlane.f32.xlu0 %v4052
      %v4054 = vpop.xlane.xlu0 %4053
      %v4055 = vrot.slane %v4054, 4
      %v4056 = vmax.f32 %v4054, %v4055
      %v4057 = vrot.slane %v4056, 2
      %v4058 = vmax.f32 %v4056, %v4057
      %v4059 = vrot.slane %v4058, 1
      %v4060 = vmax.f32 %v4058, %v4059
      %s4061 = vtos %v4060
      %v4062 = vstv %s4061
      %v4063 = vsub.f32 %v4050, %v4062
      %v4064 = vmul.f32 %v4063, 1.442695
      %v4065 = vpow.pop %v4064
      %v4067 = vrot.slane %v4065, 7
      %v4069 = vsel %vm3513, %v4067, 0.0
      %4070 = vadd.xlane.f32.xlu0 %v4069
      %v4071 = vpop.xlane.xlu0 %4070
      %v4072 = vrot.slane %v4071, 4
      %v4073 = vadd.f32 %v4071, %v4072
      %v4074 = vrot.slane %v4073, 2
      %v4075 = vadd.f32 %v4073, %v4074
      %v4076 = vrot.slane %v4075, 1
      %v4077 = vadd.f32 %v4075, %v4076
      %s4078 = vtos %v4077
      %v4079 = vstv %s4078
      %v4080 = vlog2.pop %v4079
      %v4081 = vmul.f32 %v4080, 0.6931472
      %s4082 = vtos %v4081
      %s4083 = sadd.f32 %s4061, %s4082
      %s4084 = ssub.f32 %s4043, %s4083
      %v4085 = vstv %s4084
      %vm4086 = vcmask 0
      %4087 = vst.msk [vmem:[%s703] sm:$0x1] %vm4086, %v4085
      %p4088 = scmp.lt.s32.totalorder %s51, 1
      %s4089 = scalar_select %p4088, %s51, 1
      %s4090 = scalar_lea.vmem %s26, %s4089
      // Predicated region
      $region113: #{bert_crf_forward.1} parent=111 // pred_check
        %p4091 = pneg %p552
      $region114: #{bert_crf_forward.1} parent=111 // pred_check_branch
        %4093 = sbr.rel (%p4091) target = $region116
      $region115: #{bert_crf_forward.1} parent=111 // pred_region
        _
      $region116: #{bert_crf_forward.1} parent=111 // pred_fallthru
        _
    $region112: #{bert_crf_forward.1} parent=5 // pred_fallthru
      _
    %p4094 = scmp.le.s32.totalorder 2, %s46
    // Predicated region
    $region117: #{bert_crf_forward.1} parent=5 // pred_check
      %p4095 = pneg %p4094
    $region118: #{bert_crf_forward.1} parent=5 // pred_check_branch
      %4097 = sbr.rel (%p4095) target = $region120
    $region119: #{bert_crf_forward.1} parent=5 // pred_region
      %s4098 = ssub.s32 %s46, 2
      // Predicated region
      $region121: #{bert_crf_forward.1} parent=119 // pred_check
        %p4099 = pneg %p558
      $region122: #{bert_crf_forward.1} parent=119 // pred_check_branch
        %4101 = sbr.rel (%p4099) target = $region124
      $region123: #{bert_crf_forward.1} parent=119 // pred_region
        %p4102 = scmp.lt.s32.totalorder %s52, 1
        %s4103 = scalar_select %p4102, %s52, 1
        %s4104 = scalar_lea.vmem %s26, %s4103
      $region124: #{bert_crf_forward.1} parent=119 // pred_fallthru
        _
    $region120: #{bert_crf_forward.1} parent=5 // pred_fallthru
      _
  $region6: #{bert_crf_forward.1} parent=0 // loop_footer
    %s50 = sadd.s32 1, %s46
  $region7: #{bert_crf_forward.1} parent=0 // loop_footer_branch
    %45 = sbr.rel target = $region3
  $region8: #{bert_crf_forward.1} parent=0 // loop_exit
    _

</llo_original>
